<compile_context>
chip_gen: v7x
topology: tpu7x:2x2x1
jax: 0.10.0
libtpu: 0.0.40
codegen_flags: <defaults>
</compile_context>

<pallas_src>
import math

import jax
import jax.numpy as jnp
from jax.experimental import pallas as pl
from jax.experimental.pallas import tpu as pltpu


# ----------------------------------------------------------------------------
# Fused Res2CAPA kernel (one grid step = one block of NB batch elements)
# ----------------------------------------------------------------------------
def _make_res2capa_kernel(H, W, C, scale, WP, NB, HW, use_bf16):
    nums = scale - 1 if scale != 1 else 1
    L = NB * HW
    neg = 0.01  # nn.LeakyReLU(0.01)

    def lrelu(v):
        return jnp.where(v >= 0, v, neg * v)

    def mm(w, a):
        if use_bf16:
            a = a.astype(w.dtype)
        return jnp.dot(w, a, preferred_element_type=jnp.float32)

    def kernel(x_ref, w1_ref, wc_ref, w3_ref, masks_ref, pool_ref, expand_ref,
               ca_w1_ref, ca_b1_ref, ca_w2_ref, ca_b2_ref,
               pa_w1_ref, pa_b1_ref, pa_w2_ref, pa_b2_ref,
               o_ref, out1_ref):
        xv = x_ref[...]                                           # [C, L]

        # conv1 (1x1): all `scale` chunks fused into ONE MXU matmul + LeakyReLU.
        # Result parked in VMEM scratch; chunks are aligned static sublane slices.
        out1_ref[...] = lrelu(mm(w1_ref[...], xv))                # [scale*WP, L]

        # Hoist the 8 non-center border-mask broadcasts out of the branch loop
        # (reused by all branches; JAX does not CSE broadcast_in_dim).
        mask_b = {}
        for t in range(9):
            if t != 4:
                mask_b[t] = jnp.broadcast_to(masks_ref[t], (WP, L))

        # Res2 3x3 branches: the 9 spatial taps are lane rolls + border masks,
        # concatenated along the sublane (contraction) axis and reduced with a
        # single [WP, 9*WP] @ [9*WP, L] MXU matmul per branch.  conv3 (1x1) is
        # fused as accumulating dots over branch outputs, so the channel
        # concatenation never materializes.
        y1pre = None
        sp = None
        for i in range(nums):
            chunk = out1_ref[pl.ds(i * WP, WP), :]                # [WP, L]
            inp = chunk if i == 0 else sp + chunk
            patches = []
            for dy in range(3):
                for dx in range(3):
                    t = 3 * dy + dx
                    off = (dy - 1) * W + (dx - 1)
                    if off == 0:
                        patches.append(inp)
                    else:
                        patches.append(pltpu.roll(inp, (-off) % L, 1) * mask_b[t])
            pcat = jnp.concatenate(patches, axis=0)               # [9*WP, L]
            sp = lrelu(mm(wc_ref[i], pcat))                       # [WP, L]
            contrib = mm(w3_ref[i], sp)                           # [C, L]
            y1pre = contrib if y1pre is None else y1pre + contrib
        # last (untouched) chunk of conv1's output goes straight into conv3
        y1pre = y1pre + mm(w3_ref[scale - 1],
                           out1_ref[pl.ds((scale - 1) * WP, WP), :])

        # Res2neck: out += residual; lrelu(out).  Res2CAPA: y = conv(x) + x.
        y1 = lrelu(y1pre + xv) + xv                               # [C, L]

        # CALayer (per-image GAP -> 1x1 -> ReLU -> 1x1 -> sigmoid -> scale), + x.
        if NB == 1:
            pooled = jnp.sum(y1, axis=1, keepdims=True) * (1.0 / HW)      # [C, 1]
        else:
            pooled = jnp.dot(y1, pool_ref[...],
                             preferred_element_type=jnp.float32)          # [C, NB]
        hc = jnp.maximum(mm(ca_w1_ref[...], pooled) + ca_b1_ref[...], 0.0)
        ac = jax.nn.sigmoid(mm(ca_w2_ref[...], hc) + ca_b2_ref[...])      # [C, NB]
        if NB == 1:
            y2 = y1 * ac + xv
        else:
            ac_full = jnp.dot(ac, expand_ref[...],
                              preferred_element_type=jnp.float32)         # [C, L]
            y2 = y1 * ac_full + xv

        # PALayer (1x1 -> ReLU -> 1x1(->1ch) -> sigmoid -> scale), then
        # y = pa(y2) + x ; y = y + x  ==>  pa(y2) + 2x.
        hp = jnp.maximum(mm(pa_w1_ref[...], y2) + pa_b1_ref[...], 0.0)    # [Cr, L]
        ap = jax.nn.sigmoid(mm(pa_w2_ref[...], hp) + pa_b2_ref[...])      # [1, L]
        o_ref[...] = (y2 * ap + 2.0 * xv).astype(o_ref.dtype)

    return kernel


# ----------------------------------------------------------------------------
# Wrapper: NCHW in / NCHW out, weights reshaped to kernel-friendly layouts
# ----------------------------------------------------------------------------
def res2capa_forward(x_nchw, p, width, scale, *, batch_blocks=None, use_bf16=False):
    N, C, H, W = x_nchw.shape
    HW = H * W
    nums = scale - 1 if scale != 1 else 1
    Cr = p["ca_w1"].shape[0]
    WP = ((width + 7) // 8) * 8          # pad width to the f32 sublane granularity

    # Grid shape per generation: 1 fat step on single-TC v5e/v6e,
    # 2 steps (one per TensorCore) on v7x.  Default favors v7x.
    if batch_blocks is None:
        batch_blocks = 2 if (N >= 2 and N % 2 == 0) else 1
    if N % batch_blocks != 0:
        batch_blocks = 1
    NB = N // batch_blocks
    L = NB * HW

    # Channel-major layout: lane axis = (batch, spatial) flattened, lane-dense.
    x = (x_nchw.astype(jnp.float32).reshape(N, C, HW)
         .transpose(1, 0, 2).reshape(C, N * HW))

    wdt = jnp.bfloat16 if use_bf16 else jnp.float32

    # conv1: all chunks fused into one [scale*WP, C] matrix (zero-padded rows).
    w1 = p["conv1_w"].reshape(scale, width, C)
    w1 = jnp.pad(w1, ((0, 0), (0, WP - width), (0, 0))).reshape(scale * WP, C).astype(wdt)

    # res2 3x3 convs: per branch, 9 taps concatenated along contraction -> [WP, 9*WP].
    wc = jnp.stack([w.transpose(2, 3, 0, 1).reshape(9, width, width)
                    for w in p["convs_w"]], axis=0)               # [nums, 9, width, width]
    wc = jnp.pad(wc, ((0, 0), (0, 0), (0, WP - width), (0, WP - width)))
    wc = wc.transpose(0, 2, 1, 3).reshape(nums, WP, 9 * WP).astype(wdt)

    # conv3: per-chunk [C, WP] slices (zero-padded cols).
    w3 = p["conv3_w"].reshape(C, scale, width).transpose(1, 0, 2)
    w3 = jnp.pad(w3, ((0, 0), (0, 0), (0, WP - width))).astype(wdt)       # [scale, C, WP]

    ca_w1 = p["ca_w1"].astype(wdt); ca_w2 = p["ca_w2"].astype(wdt)
    pa_w1 = p["pa_w1"].astype(wdt); pa_w2 = p["pa_w2"].astype(wdt)
    ca_b1 = p["ca_b1"].reshape(Cr, 1); ca_b2 = p["ca_b2"].reshape(C, 1)
    pa_b1 = p["pa_b1"].reshape(Cr, 1); pa_b2 = p["pa_b2"].reshape(1, 1)

    # 3x3 tap-validity masks (border handling), tiled to the block lane axis.
    # Same for every block; also zero every position where a roll would cross a
    # batch seam, so the batch-concatenated layout stays exact.
    pos = jnp.arange(HW, dtype=jnp.int32)
    hh, ww = pos // W, pos % W
    tap_masks = []
    for dy in range(3):
        for dx in range(3):
            valid = ((hh + dy - 1 >= 0) & (hh + dy - 1 < H) &
                     (ww + dx - 1 >= 0) & (ww + dx - 1 < W))
            tap_masks.append(valid.astype(jnp.float32))
    tap_masks = jnp.stack(tap_masks, axis=0).reshape(9, 1, HW)
    tap_masks = jnp.tile(tap_masks, (1, 1, NB))                   # [9, 1, L]

    # Per-image GAP / broadcast matrices (only used inside the kernel when NB > 1).
    eye = jnp.eye(NB, dtype=jnp.float32)
    pool_w = jnp.repeat(eye, HW, axis=0) * (1.0 / HW)             # [L, NB]
    expand_w = jnp.repeat(eye, HW, axis=1)                        # [NB, L]

    kernel = _make_res2capa_kernel(H, W, C, scale, WP, NB, HW, use_bf16)

    def full(shape):
        n = len(shape)
        return pl.BlockSpec(shape, lambda b: (0,) * n)

    out = pl.pallas_call(
        kernel,
        out_shape=jax.ShapeDtypeStruct((C, N * HW), jnp.float32),
        grid=(batch_blocks,),
        in_specs=[
            pl.BlockSpec((C, L), lambda b: (0, b)),        # x (NB images per block)
            full((scale * WP, C)),                          # conv1 (fused, padded)
            full((nums, WP, 9 * WP)),                       # res2 taps (batched per branch)
            full((scale, C, WP)),                           # conv3 chunks
            full((9, 1, L)),                                # border masks
            full((L, NB)), full((NB, L)),                   # per-image GAP / expand
            full((Cr, C)), full((Cr, 1)), full((C, Cr)), full((C, 1)),    # CA
            full((Cr, C)), full((Cr, 1)), full((1, Cr)), full((1, 1)),    # PA
        ],
        out_specs=pl.BlockSpec((C, L), lambda b: (0, b)),
        scratch_shapes=[pltpu.VMEM((scale * WP, L), jnp.float32)],
        compiler_params=pltpu.CompilerParams(
            dimension_semantics=("parallel",)),             # shard blocks across TCs (v7x)
    )(x, w1, wc, w3, tap_masks, pool_w, expand_w,
      ca_w1, ca_b1, ca_w2, ca_b2, pa_w1, pa_b1, pa_w2, pa_b2)

    return out.reshape(C, N, HW).transpose(1, 0, 2).reshape(N, C, H, W)


# ----------------------------------------------------------------------------
# Deterministic parameter init (PyTorch-layout weights)
# ----------------------------------------------------------------------------
def init_params(key, n_feats, base_width=26, scale=4, reduction=8):
    width = int(math.floor(n_feats * (base_width / 64.0)))
    cr = max(1, n_feats // reduction)
    keys = iter(jax.random.split(key, 24))
    s = 0.1
    p = {}
    p["conv1_w"] = jax.random.normal(next(keys), (width * scale, n_feats), jnp.float32) * s
    p["convs_w"] = [jax.random.normal(next(keys), (width, width, 3, 3), jnp.float32) * s
                    for _ in range(scale - 1)]
    p["conv3_w"] = jax.random.normal(next(keys), (n_feats, width * scale), jnp.float32) * s
    p["ca_w1"] = jax.random.normal(next(keys), (cr, n_feats), jnp.float32) * s
    p["ca_b1"] = jax.random.normal(next(keys), (cr,), jnp.float32) * s
    p["ca_w2"] = jax.random.normal(next(keys), (n_feats, cr), jnp.float32) * s
    p["ca_b2"] = jax.random.normal(next(keys), (n_feats,), jnp.float32) * s
    p["pa_w1"] = jax.random.normal(next(keys), (cr, n_feats), jnp.float32) * s
    p["pa_b1"] = jax.random.normal(next(keys), (cr,), jnp.float32) * s
    p["pa_w2"] = jax.random.normal(next(keys), (1, cr), jnp.float32) * s
    p["pa_b2"] = jax.random.normal(next(keys), (1,), jnp.float32) * s
    return p, width, scale


# ----------------------------------------------------------------------------
# Pure-JAX (NCHW) reference for sanity checking
# ----------------------------------------------------------------------------
def ref_forward(x, p, width, scale):
    lrelu = lambda v: jnp.where(v >= 0, v, 0.01 * v)

    out = lrelu(jnp.einsum('oc,nchw->nohw', p["conv1_w"], x))
    spx = [out[:, i * width:(i + 1) * width] for i in range(scale)]
    chunks = []
    sp = None
    for i in range(scale - 1):
        inp = spx[i] if i == 0 else sp + spx[i]
        conv = jax.lax.conv_general_dilated(
            inp, p["convs_w"][i], (1, 1), 'SAME',
            dimension_numbers=('NCHW', 'OIHW', 'NCHW'))
        sp = lrelu(conv)
        chunks.append(sp)
    chunks.append(spx[scale - 1])
    cat = jnp.concatenate(chunks, axis=1)

    r = lrelu(jnp.einsum('oc,nchw->nohw', p["conv3_w"], cat) + x)
    y1 = r + x

    pooled = jnp.mean(y1, axis=(2, 3), keepdims=True)
    h = jnp.maximum(jnp.einsum('oc,nchw->nohw', p["ca_w1"], pooled)
                    + p["ca_b1"][None, :, None, None], 0.0)
    a = jax.nn.sigmoid(jnp.einsum('oc,nchw->nohw', p["ca_w2"], h)
                       + p["ca_b2"][None, :, None, None])
    y2 = y1 * a + x

    h = jnp.maximum(jnp.einsum('oc,nchw->nohw', p["pa_w1"], y2)
                    + p["pa_b1"][None, :, None, None], 0.0)
    a = jax.nn.sigmoid(jnp.einsum('oc,nchw->nohw', p["pa_w2"], h)
                       + p["pa_b2"][None, :, None, None])
    y3 = y2 * a + x
    return y3 + x


if __name__ == "__main__":
    key = jax.random.PRNGKey(0)
    k_x, k_p = jax.random.split(key)

    N, C, H, W = 2, 32, 16, 16                 # n_feats = 32, reduction = 8
    x = jax.random.normal(k_x, (N, C, H, W), jnp.float32)
    params, width, scale = init_params(k_p, n_feats=C)

    ref = ref_forward(x, params, width, scale)

    # v7x-style config: 2 grid steps (one per TensorCore), 1 image per step.
    fwd2 = jax.jit(lambda xx: res2capa_forward(xx, params, width, scale, batch_blocks=2))
    out2 = jax.block_until_ready(fwd2(x))
    assert out2.shape == (N, C, H, W), out2.shape
    err2 = float(jnp.max(jnp.abs(out2 - ref)))
    assert err2 < 2e-3, f"batch_blocks=2 mismatch vs reference: {err2}"

    # v5e/v6e-style config: single fat grid step, batch folded into the lane axis.
    fwd1 = jax.jit(lambda xx: res2capa_forward(xx, params, width, scale, batch_blocks=1))
    out1 = jax.block_until_ready(fwd1(x))
    err1 = float(jnp.max(jnp.abs(out1 - ref)))
    assert err1 < 2e-3, f"batch_blocks=1 mismatch vs reference: {err1}"

    print("KERNEL_OK")
</pallas_src>

<mosaic_0001>
module attributes {stable_mosaic.version = 11 : i64} {
  func.func @kernel(%arg0: i32, %arg1: memref<32x256xf32, #tpu.memory_space<vmem>>, %arg2: memref<64x32xf32, #tpu.memory_space<vmem>>, %arg3: memref<3x16x144xf32, #tpu.memory_space<vmem>>, %arg4: memref<4x32x16xf32, #tpu.memory_space<vmem>>, %arg5: memref<9x1x256xf32, #tpu.memory_space<vmem>>, %arg6: memref<256x1xf32, #tpu.memory_space<vmem>>, %arg7: memref<1x256xf32, #tpu.memory_space<vmem>>, %arg8: memref<4x32xf32, #tpu.memory_space<vmem>>, %arg9: memref<4x1xf32, #tpu.memory_space<vmem>>, %arg10: memref<32x4xf32, #tpu.memory_space<vmem>>, %arg11: memref<32x1xf32, #tpu.memory_space<vmem>>, %arg12: memref<4x32xf32, #tpu.memory_space<vmem>>, %arg13: memref<4x1xf32, #tpu.memory_space<vmem>>, %arg14: memref<1x4xf32, #tpu.memory_space<vmem>>, %arg15: memref<1x1xf32, #tpu.memory_space<vmem>>, %arg16: memref<32x256xf32, #tpu.memory_space<vmem>>, %arg17: memref<64x256xf32, #tpu.memory_space<vmem>>) attributes {dimension_semantics = [#tpu.dimension_semantics<parallel>], iteration_bounds = array<i64: 2>, scalar_prefetch = 0 : i64, scratch_operands = 1 : i64, tpu.core_type = #tpu.core_type<tc>, window_params = [{transform_indices = @transform_0, window_bounds = array<i64: 32, 256>}, {pipeline_mode = #tpu.pipeline_mode<synchronous>, transform_indices = @transform_1, window_bounds = array<i64: 64, 32>}, {pipeline_mode = #tpu.pipeline_mode<synchronous>, transform_indices = @transform_2, window_bounds = array<i64: 3, 16, 144>}, {pipeline_mode = #tpu.pipeline_mode<synchronous>, transform_indices = @transform_3, window_bounds = array<i64: 4, 32, 16>}, {pipeline_mode = #tpu.pipeline_mode<synchronous>, transform_indices = @transform_4, window_bounds = array<i64: 9, 1, 256>}, {pipeline_mode = #tpu.pipeline_mode<synchronous>, transform_indices = @transform_5, window_bounds = array<i64: 256, 1>}, {pipeline_mode = #tpu.pipeline_mode<synchronous>, transform_indices = @transform_6, window_bounds = array<i64: 1, 256>}, {pipeline_mode = #tpu.pipeline_mode<synchronous>, transform_indices = @transform_7, window_bounds = array<i64: 4, 32>}, {pipeline_mode = #tpu.pipeline_mode<synchronous>, transform_indices = @transform_8, window_bounds = array<i64: 4, 1>}, {pipeline_mode = #tpu.pipeline_mode<synchronous>, transform_indices = @transform_9, window_bounds = array<i64: 32, 4>}, {pipeline_mode = #tpu.pipeline_mode<synchronous>, transform_indices = @transform_10, window_bounds = array<i64: 32, 1>}, {pipeline_mode = #tpu.pipeline_mode<synchronous>, transform_indices = @transform_11, window_bounds = array<i64: 4, 32>}, {pipeline_mode = #tpu.pipeline_mode<synchronous>, transform_indices = @transform_12, window_bounds = array<i64: 4, 1>}, {pipeline_mode = #tpu.pipeline_mode<synchronous>, transform_indices = @transform_13, window_bounds = array<i64: 1, 4>}, {pipeline_mode = #tpu.pipeline_mode<synchronous>, transform_indices = @transform_14, window_bounds = array<i64: 1, 1>}, {transform_indices = @transform_15, window_bounds = array<i64: 32, 256>}]} {
    %c0 = arith.constant 0 : index
    %c0_0 = arith.constant 0 : index
    %0 = vector.load %arg1[%c0, %c0_0] : memref<32x256xf32, #tpu.memory_space<vmem>>, vector<32x256xf32>
    %c0_1 = arith.constant 0 : index
    %c0_2 = arith.constant 0 : index
    %1 = vector.load %arg2[%c0_1, %c0_2] : memref<64x32xf32, #tpu.memory_space<vmem>>, vector<64x32xf32>
    %cst = arith.constant dense<0.000000e+00> : vector<64x256xf32>
    %2 = tpu.matmul %1, %0, %cst {dimension_numbers = #tpu.dot_dimension_numbers<[1], [0], [0], [1], [0, 0, 1, 1], [], []>} : vector<64x32xf32>, vector<32x256xf32>, vector<64x256xf32> -> vector<64x256xf32>
    %cst_3 = arith.constant 0.000000e+00 : f32
    %3 = vector.broadcast %cst_3 : f32 to vector<64x256xf32>
    %4 = arith.cmpf oge, %2, %3 : vector<64x256xf32>
    %cst_4 = arith.constant 0.00999999977 : f32
    %5 = vector.broadcast %cst_4 : f32 to vector<64x256xf32>
    %6 = arith.mulf %5, %2 : vector<64x256xf32>
    %7 = arith.select %4, %2, %6 : vector<64x256xi1>, vector<64x256xf32>
    %c0_5 = arith.constant 0 : index
    %c0_6 = arith.constant 0 : index
    %8 = vector.load %arg17[%c0_5, %c0_6] : memref<64x256xf32, #tpu.memory_space<vmem>>, vector<64x256xf32>
    tpu.vector_store %arg17[%c0_5, %c0_6], %7 {strides = array<i32>} : memref<64x256xf32, #tpu.memory_space<vmem>>, vector<64x256xf32>,
    %c0_7 = arith.constant 0 : index
    %c0_8 = arith.constant 0 : index
    %c0_9 = arith.constant 0 : index
    %9 = vector.load %arg5[%c0_7, %c0_8, %c0_9] : memref<9x1x256xf32, #tpu.memory_space<vmem>>, vector<1x1x256xf32>
    %10 = vector.shape_cast %9 : vector<1x1x256xf32> to vector<1x256xf32>
    %11 = vector.shape_cast %10 : vector<1x256xf32> to vector<1x256xf32>
    %12 = vector.broadcast %11 : vector<1x256xf32> to vector<16x256xf32>
    %c1 = arith.constant 1 : index
    %c0_10 = arith.constant 0 : index
    %c0_11 = arith.constant 0 : index
    %13 = vector.load %arg5[%c1, %c0_10, %c0_11] : memref<9x1x256xf32, #tpu.memory_space<vmem>>, vector<1x1x256xf32>
    %14 = vector.shape_cast %13 : vector<1x1x256xf32> to vector<1x256xf32>
    %15 = vector.shape_cast %14 : vector<1x256xf32> to vector<1x256xf32>
    %16 = vector.broadcast %15 : vector<1x256xf32> to vector<16x256xf32>
    %c2 = arith.constant 2 : index
    %c0_12 = arith.constant 0 : index
    %c0_13 = arith.constant 0 : index
    %17 = vector.load %arg5[%c2, %c0_12, %c0_13] : memref<9x1x256xf32, #tpu.memory_space<vmem>>, vector<1x1x256xf32>
    %18 = vector.shape_cast %17 : vector<1x1x256xf32> to vector<1x256xf32>
    %19 = vector.shape_cast %18 : vector<1x256xf32> to vector<1x256xf32>
    %20 = vector.broadcast %19 : vector<1x256xf32> to vector<16x256xf32>
    %c3 = arith.constant 3 : index
    %c0_14 = arith.constant 0 : index
    %c0_15 = arith.constant 0 : index
    %21 = vector.load %arg5[%c3, %c0_14, %c0_15] : memref<9x1x256xf32, #tpu.memory_space<vmem>>, vector<1x1x256xf32>
    %22 = vector.shape_cast %21 : vector<1x1x256xf32> to vector<1x256xf32>
    %23 = vector.shape_cast %22 : vector<1x256xf32> to vector<1x256xf32>
    %24 = vector.broadcast %23 : vector<1x256xf32> to vector<16x256xf32>
    %c5 = arith.constant 5 : index
    %c0_16 = arith.constant 0 : index
    %c0_17 = arith.constant 0 : index
    %25 = vector.load %arg5[%c5, %c0_16, %c0_17] : memref<9x1x256xf32, #tpu.memory_space<vmem>>, vector<1x1x256xf32>
    %26 = vector.shape_cast %25 : vector<1x1x256xf32> to vector<1x256xf32>
    %27 = vector.shape_cast %26 : vector<1x256xf32> to vector<1x256xf32>
    %28 = vector.broadcast %27 : vector<1x256xf32> to vector<16x256xf32>
    %c6 = arith.constant 6 : index
    %c0_18 = arith.constant 0 : index
    %c0_19 = arith.constant 0 : index
    %29 = vector.load %arg5[%c6, %c0_18, %c0_19] : memref<9x1x256xf32, #tpu.memory_space<vmem>>, vector<1x1x256xf32>
    %30 = vector.shape_cast %29 : vector<1x1x256xf32> to vector<1x256xf32>
    %31 = vector.shape_cast %30 : vector<1x256xf32> to vector<1x256xf32>
    %32 = vector.broadcast %31 : vector<1x256xf32> to vector<16x256xf32>
    %c7 = arith.constant 7 : index
    %c0_20 = arith.constant 0 : index
    %c0_21 = arith.constant 0 : index
    %33 = vector.load %arg5[%c7, %c0_20, %c0_21] : memref<9x1x256xf32, #tpu.memory_space<vmem>>, vector<1x1x256xf32>
    %34 = vector.shape_cast %33 : vector<1x1x256xf32> to vector<1x256xf32>
    %35 = vector.shape_cast %34 : vector<1x256xf32> to vector<1x256xf32>
    %36 = vector.broadcast %35 : vector<1x256xf32> to vector<16x256xf32>
    %c8 = arith.constant 8 : index
    %c0_22 = arith.constant 0 : index
    %c0_23 = arith.constant 0 : index
    %37 = vector.load %arg5[%c8, %c0_22, %c0_23] : memref<9x1x256xf32, #tpu.memory_space<vmem>>, vector<1x1x256xf32>
    %38 = vector.shape_cast %37 : vector<1x1x256xf32> to vector<1x256xf32>
    %39 = vector.shape_cast %38 : vector<1x256xf32> to vector<1x256xf32>
    %40 = vector.broadcast %39 : vector<1x256xf32> to vector<16x256xf32>
    %c0_24 = arith.constant 0 : index
    %c0_25 = arith.constant 0 : index
    %41 = vector.load %arg17[%c0_24, %c0_25] : memref<64x256xf32, #tpu.memory_space<vmem>>, vector<16x256xf32>
    %c17_i32 = arith.constant 17 : i32
    %42 = tpu.dynamic_rotate %41 by %c17_i32 dim 1 : vector<16x256xf32>, i32 -> vector<16x256xf32>
    %43 = arith.mulf %42, %12 : vector<16x256xf32>
    %c16_i32 = arith.constant 16 : i32
    %44 = tpu.dynamic_rotate %41 by %c16_i32 dim 1 : vector<16x256xf32>, i32 -> vector<16x256xf32>
    %45 = arith.mulf %44, %16 : vector<16x256xf32>
    %c15_i32 = arith.constant 15 : i32
    %46 = tpu.dynamic_rotate %41 by %c15_i32 dim 1 : vector<16x256xf32>, i32 -> vector<16x256xf32>
    %47 = arith.mulf %46, %20 : vector<16x256xf32>
    %c1_i32 = arith.constant 1 : i32
    %48 = tpu.dynamic_rotate %41 by %c1_i32 dim 1 : vector<16x256xf32>, i32 -> vector<16x256xf32>
    %49 = arith.mulf %48, %24 : vector<16x256xf32>
    %c255_i32 = arith.constant 255 : i32
    %50 = tpu.dynamic_rotate %41 by %c255_i32 dim 1 : vector<16x256xf32>, i32 -> vector<16x256xf32>
    %51 = arith.mulf %50, %28 : vector<16x256xf32>
    %c241_i32 = arith.constant 241 : i32
    %52 = tpu.dynamic_rotate %41 by %c241_i32 dim 1 : vector<16x256xf32>, i32 -> vector<16x256xf32>
    %53 = arith.mulf %52, %32 : vector<16x256xf32>
    %c240_i32 = arith.constant 240 : i32
    %54 = tpu.dynamic_rotate %41 by %c240_i32 dim 1 : vector<16x256xf32>, i32 -> vector<16x256xf32>
    %55 = arith.mulf %54, %36 : vector<16x256xf32>
    %c239_i32 = arith.constant 239 : i32
    %56 = tpu.dynamic_rotate %41 by %c239_i32 dim 1 : vector<16x256xf32>, i32 -> vector<16x256xf32>
    %57 = arith.mulf %56, %40 : vector<16x256xf32>
    %58 = tpu.concatenate %43, %45, %47, %49, %41, %51, %53, %55, %57 in 0 : vector<16x256xf32>, vector<16x256xf32>, vector<16x256xf32>, vector<16x256xf32>, vector<16x256xf32>, vector<16x256xf32>, vector<16x256xf32>, vector<16x256xf32>, vector<16x256xf32> -> vector<144x256xf32>
    %c0_26 = arith.constant 0 : index
    %c0_27 = arith.constant 0 : index
    %c0_28 = arith.constant 0 : index
    %59 = vector.load %arg3[%c0_26, %c0_27, %c0_28] : memref<3x16x144xf32, #tpu.memory_space<vmem>>, vector<1x16x144xf32>
    %60 = vector.shape_cast %59 : vector<1x16x144xf32> to vector<16x144xf32>
    %cst_29 = arith.constant dense<0.000000e+00> : vector<16x256xf32>
    %61 = tpu.matmul %60, %58, %cst_29 {dimension_numbers = #tpu.dot_dimension_numbers<[1], [0], [0], [1], [0, 0, 1, 1], [], []>} : vector<16x144xf32>, vector<144x256xf32>, vector<16x256xf32> -> vector<16x256xf32>
    %cst_30 = arith.constant 0.000000e+00 : f32
    %62 = vector.broadcast %cst_30 : f32 to vector<16x256xf32>
    %63 = arith.cmpf oge, %61, %62 : vector<16x256xf32>
    %cst_31 = arith.constant 0.00999999977 : f32
    %64 = vector.broadcast %cst_31 : f32 to vector<16x256xf32>
    %65 = arith.mulf %64, %61 : vector<16x256xf32>
    %66 = arith.select %63, %61, %65 : vector<16x256xi1>, vector<16x256xf32>
    %c0_32 = arith.constant 0 : index
    %c0_33 = arith.constant 0 : index
    %c0_34 = arith.constant 0 : index
    %67 = vector.load %arg4[%c0_32, %c0_33, %c0_34] : memref<4x32x16xf32, #tpu.memory_space<vmem>>, vector<1x32x16xf32>
    %68 = vector.shape_cast %67 : vector<1x32x16xf32> to vector<32x16xf32>
    %cst_35 = arith.constant dense<0.000000e+00> : vector<32x256xf32>
    %69 = tpu.matmul %68, %66, %cst_35 {dimension_numbers = #tpu.dot_dimension_numbers<[1], [0], [0], [1], [0, 0, 1, 1], [], []>} : vector<32x16xf32>, vector<16x256xf32>, vector<32x256xf32> -> vector<32x256xf32>
    %c16 = arith.constant 16 : index
    %c0_36 = arith.constant 0 : index
    %70 = vector.load %arg17[%c16, %c0_36] : memref<64x256xf32, #tpu.memory_space<vmem>>, vector<16x256xf32>
    %71 = arith.addf %66, %70 : vector<16x256xf32>
    %c17_i32_37 = arith.constant 17 : i32
    %72 = tpu.dynamic_rotate %71 by %c17_i32_37 dim 1 : vector<16x256xf32>, i32 -> vector<16x256xf32>
    %73 = arith.mulf %72, %12 : vector<16x256xf32>
    %c16_i32_38 = arith.constant 16 : i32
    %74 = tpu.dynamic_rotate %71 by %c16_i32_38 dim 1 : vector<16x256xf32>, i32 -> vector<16x256xf32>
    %75 = arith.mulf %74, %16 : vector<16x256xf32>
    %c15_i32_39 = arith.constant 15 : i32
    %76 = tpu.dynamic_rotate %71 by %c15_i32_39 dim 1 : vector<16x256xf32>, i32 -> vector<16x256xf32>
    %77 = arith.mulf %76, %20 : vector<16x256xf32>
    %c1_i32_40 = arith.constant 1 : i32
    %78 = tpu.dynamic_rotate %71 by %c1_i32_40 dim 1 : vector<16x256xf32>, i32 -> vector<16x256xf32>
    %79 = arith.mulf %78, %24 : vector<16x256xf32>
    %c255_i32_41 = arith.constant 255 : i32
    %80 = tpu.dynamic_rotate %71 by %c255_i32_41 dim 1 : vector<16x256xf32>, i32 -> vector<16x256xf32>
    %81 = arith.mulf %80, %28 : vector<16x256xf32>
    %c241_i32_42 = arith.constant 241 : i32
    %82 = tpu.dynamic_rotate %71 by %c241_i32_42 dim 1 : vector<16x256xf32>, i32 -> vector<16x256xf32>
    %83 = arith.mulf %82, %32 : vector<16x256xf32>
    %c240_i32_43 = arith.constant 240 : i32
    %84 = tpu.dynamic_rotate %71 by %c240_i32_43 dim 1 : vector<16x256xf32>, i32 -> vector<16x256xf32>
    %85 = arith.mulf %84, %36 : vector<16x256xf32>
    %c239_i32_44 = arith.constant 239 : i32
    %86 = tpu.dynamic_rotate %71 by %c239_i32_44 dim 1 : vector<16x256xf32>, i32 -> vector<16x256xf32>
    %87 = arith.mulf %86, %40 : vector<16x256xf32>
    %88 = tpu.concatenate %73, %75, %77, %79, %71, %81, %83, %85, %87 in 0 : vector<16x256xf32>, vector<16x256xf32>, vector<16x256xf32>, vector<16x256xf32>, vector<16x256xf32>, vector<16x256xf32>, vector<16x256xf32>, vector<16x256xf32>, vector<16x256xf32> -> vector<144x256xf32>
    %c1_45 = arith.constant 1 : index
    %c0_46 = arith.constant 0 : index
    %c0_47 = arith.constant 0 : index
    %89 = vector.load %arg3[%c1_45, %c0_46, %c0_47] : memref<3x16x144xf32, #tpu.memory_space<vmem>>, vector<1x16x144xf32>
    %90 = vector.shape_cast %89 : vector<1x16x144xf32> to vector<16x144xf32>
    %cst_48 = arith.constant dense<0.000000e+00> : vector<16x256xf32>
    %91 = tpu.matmul %90, %88, %cst_48 {dimension_numbers = #tpu.dot_dimension_numbers<[1], [0], [0], [1], [0, 0, 1, 1], [], []>} : vector<16x144xf32>, vector<144x256xf32>, vector<16x256xf32> -> vector<16x256xf32>
    %cst_49 = arith.constant 0.000000e+00 : f32
    %92 = vector.broadcast %cst_49 : f32 to vector<16x256xf32>
    %93 = arith.cmpf oge, %91, %92 : vector<16x256xf32>
    %cst_50 = arith.constant 0.00999999977 : f32
    %94 = vector.broadcast %cst_50 : f32 to vector<16x256xf32>
    %95 = arith.mulf %94, %91 : vector<16x256xf32>
    %96 = arith.select %93, %91, %95 : vector<16x256xi1>, vector<16x256xf32>
    %c1_51 = arith.constant 1 : index
    %c0_52 = arith.constant 0 : index
    %c0_53 = arith.constant 0 : index
    %97 = vector.load %arg4[%c1_51, %c0_52, %c0_53] : memref<4x32x16xf32, #tpu.memory_space<vmem>>, vector<1x32x16xf32>
    %98 = vector.shape_cast %97 : vector<1x32x16xf32> to vector<32x16xf32>
    %cst_54 = arith.constant dense<0.000000e+00> : vector<32x256xf32>
    %99 = tpu.matmul %98, %96, %cst_54 {dimension_numbers = #tpu.dot_dimension_numbers<[1], [0], [0], [1], [0, 0, 1, 1], [], []>} : vector<32x16xf32>, vector<16x256xf32>, vector<32x256xf32> -> vector<32x256xf32>
    %100 = arith.addf %69, %99 : vector<32x256xf32>
    %c32 = arith.constant 32 : index
    %c0_55 = arith.constant 0 : index
    %101 = vector.load %arg17[%c32, %c0_55] : memref<64x256xf32, #tpu.memory_space<vmem>>, vector<16x256xf32>
    %102 = arith.addf %96, %101 : vector<16x256xf32>
    %c17_i32_56 = arith.constant 17 : i32
    %103 = tpu.dynamic_rotate %102 by %c17_i32_56 dim 1 : vector<16x256xf32>, i32 -> vector<16x256xf32>
    %104 = arith.mulf %103, %12 : vector<16x256xf32>
    %c16_i32_57 = arith.constant 16 : i32
    %105 = tpu.dynamic_rotate %102 by %c16_i32_57 dim 1 : vector<16x256xf32>, i32 -> vector<16x256xf32>
    %106 = arith.mulf %105, %16 : vector<16x256xf32>
    %c15_i32_58 = arith.constant 15 : i32
    %107 = tpu.dynamic_rotate %102 by %c15_i32_58 dim 1 : vector<16x256xf32>, i32 -> vector<16x256xf32>
    %108 = arith.mulf %107, %20 : vector<16x256xf32>
    %c1_i32_59 = arith.constant 1 : i32
    %109 = tpu.dynamic_rotate %102 by %c1_i32_59 dim 1 : vector<16x256xf32>, i32 -> vector<16x256xf32>
    %110 = arith.mulf %109, %24 : vector<16x256xf32>
    %c255_i32_60 = arith.constant 255 : i32
    %111 = tpu.dynamic_rotate %102 by %c255_i32_60 dim 1 : vector<16x256xf32>, i32 -> vector<16x256xf32>
    %112 = arith.mulf %111, %28 : vector<16x256xf32>
    %c241_i32_61 = arith.constant 241 : i32
    %113 = tpu.dynamic_rotate %102 by %c241_i32_61 dim 1 : vector<16x256xf32>, i32 -> vector<16x256xf32>
    %114 = arith.mulf %113, %32 : vector<16x256xf32>
    %c240_i32_62 = arith.constant 240 : i32
    %115 = tpu.dynamic_rotate %102 by %c240_i32_62 dim 1 : vector<16x256xf32>, i32 -> vector<16x256xf32>
    %116 = arith.mulf %115, %36 : vector<16x256xf32>
    %c239_i32_63 = arith.constant 239 : i32
    %117 = tpu.dynamic_rotate %102 by %c239_i32_63 dim 1 : vector<16x256xf32>, i32 -> vector<16x256xf32>
    %118 = arith.mulf %117, %40 : vector<16x256xf32>
    %119 = tpu.concatenate %104, %106, %108, %110, %102, %112, %114, %116, %118 in 0 : vector<16x256xf32>, vector<16x256xf32>, vector<16x256xf32>, vector<16x256xf32>, vector<16x256xf32>, vector<16x256xf32>, vector<16x256xf32>, vector<16x256xf32>, vector<16x256xf32> -> vector<144x256xf32>
    %c2_64 = arith.constant 2 : index
    %c0_65 = arith.constant 0 : index
    %c0_66 = arith.constant 0 : index
    %120 = vector.load %arg3[%c2_64, %c0_65, %c0_66] : memref<3x16x144xf32, #tpu.memory_space<vmem>>, vector<1x16x144xf32>
    %121 = vector.shape_cast %120 : vector<1x16x144xf32> to vector<16x144xf32>
    %cst_67 = arith.constant dense<0.000000e+00> : vector<16x256xf32>
    %122 = tpu.matmul %121, %119, %cst_67 {dimension_numbers = #tpu.dot_dimension_numbers<[1], [0], [0], [1], [0, 0, 1, 1], [], []>} : vector<16x144xf32>, vector<144x256xf32>, vector<16x256xf32> -> vector<16x256xf32>
    %cst_68 = arith.constant 0.000000e+00 : f32
    %123 = vector.broadcast %cst_68 : f32 to vector<16x256xf32>
    %124 = arith.cmpf oge, %122, %123 : vector<16x256xf32>
    %cst_69 = arith.constant 0.00999999977 : f32
    %125 = vector.broadcast %cst_69 : f32 to vector<16x256xf32>
    %126 = arith.mulf %125, %122 : vector<16x256xf32>
    %127 = arith.select %124, %122, %126 : vector<16x256xi1>, vector<16x256xf32>
    %c2_70 = arith.constant 2 : index
    %c0_71 = arith.constant 0 : index
    %c0_72 = arith.constant 0 : index
    %128 = vector.load %arg4[%c2_70, %c0_71, %c0_72] : memref<4x32x16xf32, #tpu.memory_space<vmem>>, vector<1x32x16xf32>
    %129 = vector.shape_cast %128 : vector<1x32x16xf32> to vector<32x16xf32>
    %cst_73 = arith.constant dense<0.000000e+00> : vector<32x256xf32>
    %130 = tpu.matmul %129, %127, %cst_73 {dimension_numbers = #tpu.dot_dimension_numbers<[1], [0], [0], [1], [0, 0, 1, 1], [], []>} : vector<32x16xf32>, vector<16x256xf32>, vector<32x256xf32> -> vector<32x256xf32>
    %131 = arith.addf %100, %130 : vector<32x256xf32>
    %c3_74 = arith.constant 3 : index
    %c0_75 = arith.constant 0 : index
    %c0_76 = arith.constant 0 : index
    %132 = vector.load %arg4[%c3_74, %c0_75, %c0_76] : memref<4x32x16xf32, #tpu.memory_space<vmem>>, vector<1x32x16xf32>
    %133 = vector.shape_cast %132 : vector<1x32x16xf32> to vector<32x16xf32>
    %c48 = arith.constant 48 : index
    %c0_77 = arith.constant 0 : index
    %134 = vector.load %arg17[%c48, %c0_77] : memref<64x256xf32, #tpu.memory_space<vmem>>, vector<16x256xf32>
    %cst_78 = arith.constant dense<0.000000e+00> : vector<32x256xf32>
    %135 = tpu.matmul %133, %134, %cst_78 {dimension_numbers = #tpu.dot_dimension_numbers<[1], [0], [0], [1], [0, 0, 1, 1], [], []>} : vector<32x16xf32>, vector<16x256xf32>, vector<32x256xf32> -> vector<32x256xf32>
    %136 = arith.addf %131, %135 : vector<32x256xf32>
    %137 = arith.addf %136, %0 : vector<32x256xf32>
    %cst_79 = arith.constant 0.000000e+00 : f32
    %138 = vector.broadcast %cst_79 : f32 to vector<32x256xf32>
    %139 = arith.cmpf oge, %137, %138 : vector<32x256xf32>
    %cst_80 = arith.constant 0.00999999977 : f32
    %140 = vector.broadcast %cst_80 : f32 to vector<32x256xf32>
    %141 = arith.mulf %140, %137 : vector<32x256xf32>
    %142 = arith.select %139, %137, %141 : vector<32x256xi1>, vector<32x256xf32>
    %143 = arith.addf %142, %0 : vector<32x256xf32>
    %cst_81 = arith.constant dense<0.000000e+00> : vector<32xf32>
    %144 = vector.multi_reduction <add>, %143, %cst_81 [1] : vector<32x256xf32> to vector<32xf32>
    %145 = vector.shape_cast %144 : vector<32xf32> to vector<32x1xf32>
    %cst_82 = arith.constant 3.906250e-03 : f32
    %146 = vector.broadcast %cst_82 : f32 to vector<32x1xf32>
    %147 = arith.mulf %145, %146 : vector<32x1xf32>
    %c0_83 = arith.constant 0 : index
    %c0_84 = arith.constant 0 : index
    %148 = vector.load %arg8[%c0_83, %c0_84] : memref<4x32xf32, #tpu.memory_space<vmem>>, vector<4x32xf32>
    %cst_85 = arith.constant dense<0.000000e+00> : vector<4x1xf32>
    %149 = tpu.matmul %148, %147, %cst_85 {dimension_numbers = #tpu.dot_dimension_numbers<[1], [0], [0], [1], [0, 0, 1, 1], [], []>} : vector<4x32xf32>, vector<32x1xf32>, vector<4x1xf32> -> vector<4x1xf32>
    %c0_86 = arith.constant 0 : index
    %c0_87 = arith.constant 0 : index
    %150 = vector.load %arg9[%c0_86, %c0_87] : memref<4x1xf32, #tpu.memory_space<vmem>>, vector<4x1xf32>
    %151 = arith.addf %149, %150 : vector<4x1xf32>
    %cst_88 = arith.constant 0.000000e+00 : f32
    %152 = vector.broadcast %cst_88 : f32 to vector<4x1xf32>
    %153 = arith.maximumf %151, %152 : vector<4x1xf32>
    %c0_89 = arith.constant 0 : index
    %c0_90 = arith.constant 0 : index
    %154 = vector.load %arg10[%c0_89, %c0_90] : memref<32x4xf32, #tpu.memory_space<vmem>>, vector<32x4xf32>
    %cst_91 = arith.constant dense<0.000000e+00> : vector<32x1xf32>
    %155 = tpu.matmul %154, %153, %cst_91 {dimension_numbers = #tpu.dot_dimension_numbers<[1], [0], [0], [1], [0, 0, 1, 1], [], []>} : vector<32x4xf32>, vector<4x1xf32>, vector<32x1xf32> -> vector<32x1xf32>
    %c0_92 = arith.constant 0 : index
    %c0_93 = arith.constant 0 : index
    %156 = vector.load %arg11[%c0_92, %c0_93] : memref<32x1xf32, #tpu.memory_space<vmem>>, vector<32x1xf32>
    %157 = arith.addf %155, %156 : vector<32x1xf32>
    %158 = arith.negf %157 : vector<32x1xf32>
    %159 = math.exp %158 : vector<32x1xf32>
    %cst_94 = arith.constant 1.000000e+00 : f32
    %160 = vector.broadcast %cst_94 : f32 to vector<32x1xf32>
    %161 = arith.addf %160, %159 : vector<32x1xf32>
    %162 = arith.divf %160, %161 : vector<32x1xf32>
    %163 = vector.broadcast %162 : vector<32x1xf32> to vector<32x256xf32>
    %164 = arith.mulf %143, %163 : vector<32x256xf32>
    %165 = arith.addf %164, %0 : vector<32x256xf32>
    %c0_95 = arith.constant 0 : index
    %c0_96 = arith.constant 0 : index
    %166 = vector.load %arg12[%c0_95, %c0_96] : memref<4x32xf32, #tpu.memory_space<vmem>>, vector<4x32xf32>
    %cst_97 = arith.constant dense<0.000000e+00> : vector<4x256xf32>
    %167 = tpu.matmul %166, %165, %cst_97 {dimension_numbers = #tpu.dot_dimension_numbers<[1], [0], [0], [1], [0, 0, 1, 1], [], []>} : vector<4x32xf32>, vector<32x256xf32>, vector<4x256xf32> -> vector<4x256xf32>
    %c0_98 = arith.constant 0 : index
    %c0_99 = arith.constant 0 : index
    %168 = vector.load %arg13[%c0_98, %c0_99] : memref<4x1xf32, #tpu.memory_space<vmem>>, vector<4x1xf32>
    %169 = vector.broadcast %168 : vector<4x1xf32> to vector<4x256xf32>
    %170 = arith.addf %167, %169 : vector<4x256xf32>
    %cst_100 = arith.constant 0.000000e+00 : f32
    %171 = vector.broadcast %cst_100 : f32 to vector<4x256xf32>
    %172 = arith.maximumf %170, %171 : vector<4x256xf32>
    %c0_101 = arith.constant 0 : index
    %c0_102 = arith.constant 0 : index
    %173 = vector.load %arg14[%c0_101, %c0_102] : memref<1x4xf32, #tpu.memory_space<vmem>>, vector<1x4xf32>
    %cst_103 = arith.constant dense<0.000000e+00> : vector<1x256xf32>
    %174 = tpu.matmul %173, %172, %cst_103 {dimension_numbers = #tpu.dot_dimension_numbers<[1], [0], [0], [1], [0, 0, 1, 1], [], []>} : vector<1x4xf32>, vector<4x256xf32>, vector<1x256xf32> -> vector<1x256xf32>
    %c0_104 = arith.constant 0 : index
    %c0_105 = arith.constant 0 : index
    %175 = vector.load %arg15[%c0_104, %c0_105] : memref<1x1xf32, #tpu.memory_space<vmem>>, vector<1x1xf32>
    %176 = vector.broadcast %175 : vector<1x1xf32> to vector<1x256xf32>
    %177 = arith.addf %174, %176 : vector<1x256xf32>
    %178 = arith.negf %177 : vector<1x256xf32>
    %179 = math.exp %178 : vector<1x256xf32>
    %cst_106 = arith.constant 1.000000e+00 : f32
    %180 = vector.broadcast %cst_106 : f32 to vector<1x256xf32>
    %181 = arith.addf %180, %179 : vector<1x256xf32>
    %182 = arith.divf %180, %181 : vector<1x256xf32>
    %183 = vector.broadcast %182 : vector<1x256xf32> to vector<32x256xf32>
    %184 = arith.mulf %165, %183 : vector<32x256xf32>
    %cst_107 = arith.constant 2.000000e+00 : f32
    %185 = vector.broadcast %cst_107 : f32 to vector<32x256xf32>
    %186 = arith.mulf %185, %0 : vector<32x256xf32>
    %187 = arith.addf %184, %186 : vector<32x256xf32>
    %c0_108 = arith.constant 0 : index
    %c0_109 = arith.constant 0 : index
    %188 = vector.load %arg16[%c0_108, %c0_109] : memref<32x256xf32, #tpu.memory_space<vmem>>, vector<32x256xf32>
    tpu.vector_store %arg16[%c0_108, %c0_109], %187 {strides = array<i32>} : memref<32x256xf32, #tpu.memory_space<vmem>>, vector<32x256xf32>,
    return
  }
  func.func @transform_0(%arg0: i32) -> (i32, i32) {
    %c0_i32 = arith.constant 0 : i32
    %c0_i32_0 = arith.constant 0 : i32
    return %c0_i32, %arg0 : i32, i32
  }
  func.func @transform_1(%arg0: i32) -> (i32, i32) {
    %c0_i32 = arith.constant 0 : i32
    %c0_i32_0 = arith.constant 0 : i32
    %c0_i32_1 = arith.constant 0 : i32
    return %c0_i32, %c0_i32_0 : i32, i32
  }
  func.func @transform_2(%arg0: i32) -> (i32, i32, i32) {
    %c0_i32 = arith.constant 0 : i32
    %c0_i32_0 = arith.constant 0 : i32
    %c0_i32_1 = arith.constant 0 : i32
    %c0_i32_2 = arith.constant 0 : i32
    return %c0_i32, %c0_i32_0, %c0_i32_1 : i32, i32, i32
  }
  func.func @transform_3(%arg0: i32) -> (i32, i32, i32) {
    %c0_i32 = arith.constant 0 : i32
    %c0_i32_0 = arith.constant 0 : i32
    %c0_i32_1 = arith.constant 0 : i32
    %c0_i32_2 = arith.constant 0 : i32
    return %c0_i32, %c0_i32_0, %c0_i32_1 : i32, i32, i32
  }
  func.func @transform_4(%arg0: i32) -> (i32, i32, i32) {
    %c0_i32 = arith.constant 0 : i32
    %c0_i32_0 = arith.constant 0 : i32
    %c0_i32_1 = arith.constant 0 : i32
    %c0_i32_2 = arith.constant 0 : i32
    return %c0_i32, %c0_i32_0, %c0_i32_1 : i32, i32, i32
  }
  func.func @transform_5(%arg0: i32) -> (i32, i32) {
    %c0_i32 = arith.constant 0 : i32
    %c0_i32_0 = arith.constant 0 : i32
    %c0_i32_1 = arith.constant 0 : i32
    return %c0_i32, %c0_i32_0 : i32, i32
  }
  func.func @transform_6(%arg0: i32) -> (i32, i32) {
    %c0_i32 = arith.constant 0 : i32
    %c0_i32_0 = arith.constant 0 : i32
    %c0_i32_1 = arith.constant 0 : i32
    return %c0_i32, %c0_i32_0 : i32, i32
  }
  func.func @transform_7(%arg0: i32) -> (i32, i32) {
    %c0_i32 = arith.constant 0 : i32
    %c0_i32_0 = arith.constant 0 : i32
    %c0_i32_1 = arith.constant 0 : i32
    return %c0_i32, %c0_i32_0 : i32, i32
  }
  func.func @transform_8(%arg0: i32) -> (i32, i32) {
    %c0_i32 = arith.constant 0 : i32
    %c0_i32_0 = arith.constant 0 : i32
    %c0_i32_1 = arith.constant 0 : i32
    return %c0_i32, %c0_i32_0 : i32, i32
  }
  func.func @transform_9(%arg0: i32) -> (i32, i32) {
    %c0_i32 = arith.constant 0 : i32
    %c0_i32_0 = arith.constant 0 : i32
    %c0_i32_1 = arith.constant 0 : i32
    return %c0_i32, %c0_i32_0 : i32, i32
  }
  func.func @transform_10(%arg0: i32) -> (i32, i32) {
    %c0_i32 = arith.constant 0 : i32
    %c0_i32_0 = arith.constant 0 : i32
    %c0_i32_1 = arith.constant 0 : i32
    return %c0_i32, %c0_i32_0 : i32, i32
  }
  func.func @transform_11(%arg0: i32) -> (i32, i32) {
    %c0_i32 = arith.constant 0 : i32
    %c0_i32_0 = arith.constant 0 : i32
    %c0_i32_1 = arith.constant 0 : i32
    return %c0_i32, %c0_i32_0 : i32, i32
  }
  func.func @transform_12(%arg0: i32) -> (i32, i32) {
    %c0_i32 = arith.constant 0 : i32
    %c0_i32_0 = arith.constant 0 : i32
    %c0_i32_1 = arith.constant 0 : i32
    return %c0_i32, %c0_i32_0 : i32, i32
  }
  func.func @transform_13(%arg0: i32) -> (i32, i32) {
    %c0_i32 = arith.constant 0 : i32
    %c0_i32_0 = arith.constant 0 : i32
    %c0_i32_1 = arith.constant 0 : i32
    return %c0_i32, %c0_i32_0 : i32, i32
  }
  func.func @transform_14(%arg0: i32) -> (i32, i32) {
    %c0_i32 = arith.constant 0 : i32
    %c0_i32_0 = arith.constant 0 : i32
    %c0_i32_1 = arith.constant 0 : i32
    return %c0_i32, %c0_i32_0 : i32, i32
  }
  func.func @transform_15(%arg0: i32) -> (i32, i32) {
    %c0_i32 = arith.constant 0 : i32
    %c0_i32_0 = arith.constant 0 : i32
    return %c0_i32, %arg0 : i32, i32
  }
}

</mosaic_0001>

<llo_original>
// kernel: mul.1
$region0: #{mul.1}
  #allocation0 [shape = 's32[1]{0}', space=sflag, size = 0x4, scoped, tag = 'scoped memory for mul.1']
  %s0 = inlined_call_operand.<no memory space> [shape: f32[], index: 0, kind: input, shape index: {}]
  %s1 = inlined_call_operand.vmem [shape: f32[256,1], index: 1, kind: output, shape index: {}]
  %v2 = vstv %s0
  %3 = vst [vmem:[%s1] sm:$0xff] %v2
  %s4 = scalar_lea.vmem %s1, 8
  %5 = vst [vmem:[%s4] sm:$0xff] %v2
  %s6 = scalar_lea.vmem %s1, 16
  %7 = vst [vmem:[%s6] sm:$0xff] %v2
  %s8 = scalar_lea.vmem %s1, 24
  %9 = vst [vmem:[%s8] sm:$0xff] %v2
  %s10 = scalar_lea.vmem %s1, 32
  %11 = vst [vmem:[%s10] sm:$0xff] %v2
  %s12 = scalar_lea.vmem %s1, 40
  %13 = vst [vmem:[%s12] sm:$0xff] %v2
  %s14 = scalar_lea.vmem %s1, 48
  %15 = vst [vmem:[%s14] sm:$0xff] %v2
  %s16 = scalar_lea.vmem %s1, 56
  %17 = vst [vmem:[%s16] sm:$0xff] %v2
  %s18 = scalar_lea.vmem %s1, 64
  %19 = vst [vmem:[%s18] sm:$0xff] %v2
  %s20 = scalar_lea.vmem %s1, 72
  %21 = vst [vmem:[%s20] sm:$0xff] %v2
  %s22 = scalar_lea.vmem %s1, 80
  %23 = vst [vmem:[%s22] sm:$0xff] %v2
  %s24 = scalar_lea.vmem %s1, 88
  %25 = vst [vmem:[%s24] sm:$0xff] %v2
  %s26 = scalar_lea.vmem %s1, 96
  %27 = vst [vmem:[%s26] sm:$0xff] %v2
  %s28 = scalar_lea.vmem %s1, 104
  %29 = vst [vmem:[%s28] sm:$0xff] %v2
  %s30 = scalar_lea.vmem %s1, 112
  %31 = vst [vmem:[%s30] sm:$0xff] %v2
  %s32 = scalar_lea.vmem %s1, 120
  %33 = vst [vmem:[%s32] sm:$0xff] %v2
  %s34 = scalar_lea.vmem %s1, 128
  %35 = vst [vmem:[%s34] sm:$0xff] %v2
  %s36 = scalar_lea.vmem %s1, 136
  %37 = vst [vmem:[%s36] sm:$0xff] %v2
  %s38 = scalar_lea.vmem %s1, 144
  %39 = vst [vmem:[%s38] sm:$0xff] %v2
  %s40 = scalar_lea.vmem %s1, 152
  %41 = vst [vmem:[%s40] sm:$0xff] %v2
  %s42 = scalar_lea.vmem %s1, 160
  %43 = vst [vmem:[%s42] sm:$0xff] %v2
  %s44 = scalar_lea.vmem %s1, 168
  %45 = vst [vmem:[%s44] sm:$0xff] %v2
  %s46 = scalar_lea.vmem %s1, 176
  %47 = vst [vmem:[%s46] sm:$0xff] %v2
  %s48 = scalar_lea.vmem %s1, 184
  %49 = vst [vmem:[%s48] sm:$0xff] %v2
  %s50 = scalar_lea.vmem %s1, 192
  %51 = vst [vmem:[%s50] sm:$0xff] %v2
  %s52 = scalar_lea.vmem %s1, 200
  %53 = vst [vmem:[%s52] sm:$0xff] %v2
  %s54 = scalar_lea.vmem %s1, 208
  %55 = vst [vmem:[%s54] sm:$0xff] %v2
  %s56 = scalar_lea.vmem %s1, 216
  %57 = vst [vmem:[%s56] sm:$0xff] %v2
  %s58 = scalar_lea.vmem %s1, 224
  %59 = vst [vmem:[%s58] sm:$0xff] %v2
  %s60 = scalar_lea.vmem %s1, 232
  %61 = vst [vmem:[%s60] sm:$0xff] %v2
  %s62 = scalar_lea.vmem %s1, 240
  %63 = vst [vmem:[%s62] sm:$0xff] %v2
  %s64 = scalar_lea.vmem %s1, 248
  %65 = vst [vmem:[%s64] sm:$0xff] %v2

// kernel: _lambda_.1
$region0: #{_lambda_.1}
  #allocation0 [shape = 'u32[]', space=smem, size = 0x4, offset = 0x4, fixed_abs, tag = 'smem constant byte address 0x4 - core index']
  #allocation1 [shape = 'u32[144,128]{1,0:T(1,128)}', space=vmem, size = 0x12000, scoped, tag = 'internal scratch']
  #allocation2 [shape = 'f32[64,256]{1,0:T(8,128)}', space=vmem, size = 0x10000, scoped, tag = 'scratch operand']
  #allocation3 [shape = 'f32[1,1]{1,0:T(1,128)S(1)}', space=vmem, size = 0x200, scoped, tag = 'scoped memory for _lambda_.1']
  %s0 = inlined_call_operand.vmem [shape: f32[32,512], index: 0, kind: input, shape index: {}]
  %s1 = inlined_call_operand.vmem [shape: f32[64,32], index: 1, kind: input, shape index: {}]
  %s2 = inlined_call_operand.vmem [shape: f32[3,16,144], index: 2, kind: input, shape index: {}]
  %s3 = inlined_call_operand.vmem [shape: f32[4,32,16], index: 3, kind: input, shape index: {}]
  %s4 = inlined_call_operand.vmem [shape: f32[9,1,256], index: 4, kind: input, shape index: {}]
  %s5 = inlined_call_operand.vmem [shape: f32[256,1], index: 5, kind: input, shape index: {}]
  %s6 = inlined_call_operand.vmem [shape: f32[1,256], index: 6, kind: input, shape index: {}]
  %s7 = inlined_call_operand.vmem [shape: f32[4,32], index: 7, kind: input, shape index: {}]
  %s8 = inlined_call_operand.vmem [shape: f32[4,1], index: 8, kind: input, shape index: {}]
  %s9 = inlined_call_operand.vmem [shape: f32[32,4], index: 9, kind: input, shape index: {}]
  %s10 = inlined_call_operand.vmem [shape: f32[32,1], index: 10, kind: input, shape index: {}]
  %s11 = inlined_call_operand.vmem [shape: f32[4,32], index: 11, kind: input, shape index: {}]
  %s12 = inlined_call_operand.vmem [shape: f32[4,1], index: 12, kind: input, shape index: {}]
  %s13 = inlined_call_operand.vmem [shape: f32[1,4], index: 13, kind: input, shape index: {}]
  %s14 = inlined_call_operand.<no memory space> [shape: f32[1,1], index: 14, kind: input, shape index: {}]
  %s15 = inlined_call_operand.vmem [shape: f32[32,512], index: 15, kind: output, shape index: {}]
  %s16 = sld [smem:[#allocation0]]
  $region135: #{_lambda_.1} parent=0
    _
  %s18 = ssub.s32 1, %s16
  %s19 = scalar_select 0, %s18, %s16
  %v20 = vstv %s14
  %21 = vst [vmem:[#allocation3] sm:$0x1] %v20
  $region1: #{_lambda_.1} parent=0
    #allocation4 [shape = 'u8[65536]{0}', space=vmem, size = 0x10000, scoped, tag = 'input window, operand 0']
    #allocation5 [shape = 'u8[65536]{0}', space=vmem, size = 0x10000, scoped, tag = 'output window, operand 0']
    loop: start=0, step=1, limit=4
    $region2: #{_lambda_.1} parent=1 // loop_pre_header
      _
    $region3: #{_lambda_.1} parent=1 // loop_header
      %s23 = sphi 0, %s27
      %p24 = scmp.ge.s32.totalorder %s23, 4
      %s33 = sphi 0, %s35
      %s36 = sphi 0, %s33
      %s37 = sphi 0, %s36
      %s53 = sphi 0, %s37
      %s57 = sphi 0, %s57
      %s59 = sphi 0, %s57
      %s60 = sphi 0, %s59
      %s74 = sphi 0, %s60
      %s78 = sphi 0, %s78
      %s80 = sphi 0, %s78
      %s81 = sphi 0, %s80
      %s95 = sphi 0, %s81
      %s99 = sphi 0, %s99
      %s101 = sphi 0, %s99
      %s102 = sphi 0, %s101
      %s116 = sphi 0, %s102
      %s120 = sphi 0, %s120
      %s122 = sphi 0, %s120
      %s123 = sphi 0, %s122
      %s137 = sphi 0, %s123
      %s141 = sphi 0, %s141
      %s143 = sphi 0, %s141
      %s144 = sphi 0, %s143
      %s158 = sphi 0, %s144
      %s162 = sphi 0, %s162
      %s164 = sphi 0, %s162
      %s165 = sphi 0, %s164
      %s179 = sphi 0, %s165
      %s183 = sphi 0, %s183
      %s185 = sphi 0, %s183
      %s186 = sphi 0, %s185
      %s200 = sphi 0, %s186
      %s204 = sphi 0, %s204
      %s206 = sphi 0, %s204
      %s207 = sphi 0, %s206
      %s221 = sphi 0, %s207
      %s225 = sphi 0, %s225
      %s227 = sphi 0, %s225
      %s228 = sphi 0, %s227
      %s242 = sphi 0, %s228
      %s246 = sphi 0, %s246
      %s248 = sphi 0, %s246
      %s249 = sphi 0, %s248
      %s263 = sphi 0, %s249
      %s267 = sphi 0, %s267
      %s269 = sphi 0, %s267
      %s270 = sphi 0, %s269
      %s284 = sphi 0, %s270
      %s288 = sphi 0, %s288
      %s290 = sphi 0, %s288
      %s291 = sphi 0, %s290
      %s305 = sphi 0, %s291
      %s309 = sphi 0, %s309
      %s311 = sphi 0, %s309
      %s312 = sphi 0, %s311
      %s326 = sphi 0, %s312
      %s330 = sphi 0, %s330
      %s332 = sphi 0, %s330
      %s333 = sphi 0, %s332
      %s347 = sphi 0, %s333
      %s353 = sphi 0, %s355
      %s356 = sphi 0, %s353
      %s357 = sphi 0, %s356
      %s373 = sphi 0, %s357
    $region4: #{_lambda_.1} parent=1 // loop_header_branch
      %26 = sbr.rel (%p24) target = $region8
    $region5: #{_lambda_.1} parent=1 // loop_body
      %s28 = ssub.s32 %s23, 1
      %s29 = ssub.s32 %s23, 2
      %s30 = sadd.s32 %s23, 1
      %s31 = ssub.s32 %s23, %s30
      %p32 = scmp.eq.s32.totalorder %s31, 0
      %s34 = sadd.s32 %s33, 1
      %s35 = scalar_select %p32, %s33, %s34
      %p38 = pneg %p32
      %p39 = scmp.eq.s32.totalorder %s23, 1
      %p40 = por %p38, %p39
      %p41 = scmp.ne.s32.totalorder %s33, %s36
      %p42 = scmp.eq.s32.totalorder %s23, 0
      %p43 = por %p41, %p42
      %p44 = scmp.ne.s32.totalorder %s33, %s36
      %p45 = scmp.eq.s32.totalorder %s28, 1
      %p46 = por %p44, %p45
      %p47 = scmp.ne.s32.totalorder %s36, %s37
      %p48 = scmp.eq.s32.totalorder %s28, 0
      %p49 = por %p47, %p48
      %p50 = scmp.ne.s32.totalorder %s36, %s37
      %p51 = scmp.eq.s32.totalorder %s29, 1
      %p52 = por %p50, %p51
      %p54 = scmp.ne.s32.totalorder %s37, %s53
      %p55 = scmp.eq.s32.totalorder %s29, 0
      %p56 = por %p54, %p55
      %s58 = sadd.s32 %s57, 1
      %p61 = scmp.eq.s32.totalorder %s23, 1
      %p62 = scmp.ne.s32.totalorder %s57, %s59
      %p63 = scmp.eq.s32.totalorder %s23, 0
      %p64 = por %p62, %p63
      %p65 = scmp.ne.s32.totalorder %s57, %s59
      %p66 = scmp.eq.s32.totalorder %s28, 1
      %p67 = por %p65, %p66
      %p68 = scmp.ne.s32.totalorder %s59, %s60
      %p69 = scmp.eq.s32.totalorder %s28, 0
      %p70 = por %p68, %p69
      %p71 = scmp.ne.s32.totalorder %s59, %s60
      %p72 = scmp.eq.s32.totalorder %s29, 1
      %p73 = por %p71, %p72
      %p75 = scmp.ne.s32.totalorder %s60, %s74
      %p76 = scmp.eq.s32.totalorder %s29, 0
      %p77 = por %p75, %p76
      %s79 = sadd.s32 %s78, 1
      %p82 = scmp.eq.s32.totalorder %s23, 1
      %p83 = scmp.ne.s32.totalorder %s78, %s80
      %p84 = scmp.eq.s32.totalorder %s23, 0
      %p85 = por %p83, %p84
      %p86 = scmp.ne.s32.totalorder %s78, %s80
      %p87 = scmp.eq.s32.totalorder %s28, 1
      %p88 = por %p86, %p87
      %p89 = scmp.ne.s32.totalorder %s80, %s81
      %p90 = scmp.eq.s32.totalorder %s28, 0
      %p91 = por %p89, %p90
      %p92 = scmp.ne.s32.totalorder %s80, %s81
      %p93 = scmp.eq.s32.totalorder %s29, 1
      %p94 = por %p92, %p93
      %p96 = scmp.ne.s32.totalorder %s81, %s95
      %p97 = scmp.eq.s32.totalorder %s29, 0
      %p98 = por %p96, %p97
      %s100 = sadd.s32 %s99, 1
      %p103 = scmp.eq.s32.totalorder %s23, 1
      %p104 = scmp.ne.s32.totalorder %s99, %s101
      %p105 = scmp.eq.s32.totalorder %s23, 0
      %p106 = por %p104, %p105
      %p107 = scmp.ne.s32.totalorder %s99, %s101
      %p108 = scmp.eq.s32.totalorder %s28, 1
      %p109 = por %p107, %p108
      %p110 = scmp.ne.s32.totalorder %s101, %s102
      %p111 = scmp.eq.s32.totalorder %s28, 0
      %p112 = por %p110, %p111
      %p113 = scmp.ne.s32.totalorder %s101, %s102
      %p114 = scmp.eq.s32.totalorder %s29, 1
      %p115 = por %p113, %p114
      %p117 = scmp.ne.s32.totalorder %s102, %s116
      %p118 = scmp.eq.s32.totalorder %s29, 0
      %p119 = por %p117, %p118
      %s121 = sadd.s32 %s120, 1
      %p124 = scmp.eq.s32.totalorder %s23, 1
      %p125 = scmp.ne.s32.totalorder %s120, %s122
      %p126 = scmp.eq.s32.totalorder %s23, 0
      %p127 = por %p125, %p126
      %p128 = scmp.ne.s32.totalorder %s120, %s122
      %p129 = scmp.eq.s32.totalorder %s28, 1
      %p130 = por %p128, %p129
      %p131 = scmp.ne.s32.totalorder %s122, %s123
      %p132 = scmp.eq.s32.totalorder %s28, 0
      %p133 = por %p131, %p132
      %p134 = scmp.ne.s32.totalorder %s122, %s123
      %p135 = scmp.eq.s32.totalorder %s29, 1
      %p136 = por %p134, %p135
      %p138 = scmp.ne.s32.totalorder %s123, %s137
      %p139 = scmp.eq.s32.totalorder %s29, 0
      %p140 = por %p138, %p139
      %s142 = sadd.s32 %s141, 1
      %p145 = scmp.eq.s32.totalorder %s23, 1
      %p146 = scmp.ne.s32.totalorder %s141, %s143
      %p147 = scmp.eq.s32.totalorder %s23, 0
      %p148 = por %p146, %p147
      %p149 = scmp.ne.s32.totalorder %s141, %s143
      %p150 = scmp.eq.s32.totalorder %s28, 1
      %p151 = por %p149, %p150
      %p152 = scmp.ne.s32.totalorder %s143, %s144
      %p153 = scmp.eq.s32.totalorder %s28, 0
      %p154 = por %p152, %p153
      %p155 = scmp.ne.s32.totalorder %s143, %s144
      %p156 = scmp.eq.s32.totalorder %s29, 1
      %p157 = por %p155, %p156
      %p159 = scmp.ne.s32.totalorder %s144, %s158
      %p160 = scmp.eq.s32.totalorder %s29, 0
      %p161 = por %p159, %p160
      %s163 = sadd.s32 %s162, 1
      %p166 = scmp.eq.s32.totalorder %s23, 1
      %p167 = scmp.ne.s32.totalorder %s162, %s164
      %p168 = scmp.eq.s32.totalorder %s23, 0
      %p169 = por %p167, %p168
      %p170 = scmp.ne.s32.totalorder %s162, %s164
      %p171 = scmp.eq.s32.totalorder %s28, 1
      %p172 = por %p170, %p171
      %p173 = scmp.ne.s32.totalorder %s164, %s165
      %p174 = scmp.eq.s32.totalorder %s28, 0
      %p175 = por %p173, %p174
      %p176 = scmp.ne.s32.totalorder %s164, %s165
      %p177 = scmp.eq.s32.totalorder %s29, 1
      %p178 = por %p176, %p177
      %p180 = scmp.ne.s32.totalorder %s165, %s179
      %p181 = scmp.eq.s32.totalorder %s29, 0
      %p182 = por %p180, %p181
      %s184 = sadd.s32 %s183, 1
      %p187 = scmp.eq.s32.totalorder %s23, 1
      %p188 = scmp.ne.s32.totalorder %s183, %s185
      %p189 = scmp.eq.s32.totalorder %s23, 0
      %p190 = por %p188, %p189
      %p191 = scmp.ne.s32.totalorder %s183, %s185
      %p192 = scmp.eq.s32.totalorder %s28, 1
      %p193 = por %p191, %p192
      %p194 = scmp.ne.s32.totalorder %s185, %s186
      %p195 = scmp.eq.s32.totalorder %s28, 0
      %p196 = por %p194, %p195
      %p197 = scmp.ne.s32.totalorder %s185, %s186
      %p198 = scmp.eq.s32.totalorder %s29, 1
      %p199 = por %p197, %p198
      %p201 = scmp.ne.s32.totalorder %s186, %s200
      %p202 = scmp.eq.s32.totalorder %s29, 0
      %p203 = por %p201, %p202
      %s205 = sadd.s32 %s204, 1
      %p208 = scmp.eq.s32.totalorder %s23, 1
      %p209 = scmp.ne.s32.totalorder %s204, %s206
      %p210 = scmp.eq.s32.totalorder %s23, 0
      %p211 = por %p209, %p210
      %p212 = scmp.ne.s32.totalorder %s204, %s206
      %p213 = scmp.eq.s32.totalorder %s28, 1
      %p214 = por %p212, %p213
      %p215 = scmp.ne.s32.totalorder %s206, %s207
      %p216 = scmp.eq.s32.totalorder %s28, 0
      %p217 = por %p215, %p216
      %p218 = scmp.ne.s32.totalorder %s206, %s207
      %p219 = scmp.eq.s32.totalorder %s29, 1
      %p220 = por %p218, %p219
      %p222 = scmp.ne.s32.totalorder %s207, %s221
      %p223 = scmp.eq.s32.totalorder %s29, 0
      %p224 = por %p222, %p223
      %s226 = sadd.s32 %s225, 1
      %p229 = scmp.eq.s32.totalorder %s23, 1
      %p230 = scmp.ne.s32.totalorder %s225, %s227
      %p231 = scmp.eq.s32.totalorder %s23, 0
      %p232 = por %p230, %p231
      %p233 = scmp.ne.s32.totalorder %s225, %s227
      %p234 = scmp.eq.s32.totalorder %s28, 1
      %p235 = por %p233, %p234
      %p236 = scmp.ne.s32.totalorder %s227, %s228
      %p237 = scmp.eq.s32.totalorder %s28, 0
      %p238 = por %p236, %p237
      %p239 = scmp.ne.s32.totalorder %s227, %s228
      %p240 = scmp.eq.s32.totalorder %s29, 1
      %p241 = por %p239, %p240
      %p243 = scmp.ne.s32.totalorder %s228, %s242
      %p244 = scmp.eq.s32.totalorder %s29, 0
      %p245 = por %p243, %p244
      %s247 = sadd.s32 %s246, 1
      %p250 = scmp.eq.s32.totalorder %s23, 1
      %p251 = scmp.ne.s32.totalorder %s246, %s248
      %p252 = scmp.eq.s32.totalorder %s23, 0
      %p253 = por %p251, %p252
      %p254 = scmp.ne.s32.totalorder %s246, %s248
      %p255 = scmp.eq.s32.totalorder %s28, 1
      %p256 = por %p254, %p255
      %p257 = scmp.ne.s32.totalorder %s248, %s249
      %p258 = scmp.eq.s32.totalorder %s28, 0
      %p259 = por %p257, %p258
      %p260 = scmp.ne.s32.totalorder %s248, %s249
      %p261 = scmp.eq.s32.totalorder %s29, 1
      %p262 = por %p260, %p261
      %p264 = scmp.ne.s32.totalorder %s249, %s263
      %p265 = scmp.eq.s32.totalorder %s29, 0
      %p266 = por %p264, %p265
      %s268 = sadd.s32 %s267, 1
      %p271 = scmp.eq.s32.totalorder %s23, 1
      %p272 = scmp.ne.s32.totalorder %s267, %s269
      %p273 = scmp.eq.s32.totalorder %s23, 0
      %p274 = por %p272, %p273
      %p275 = scmp.ne.s32.totalorder %s267, %s269
      %p276 = scmp.eq.s32.totalorder %s28, 1
      %p277 = por %p275, %p276
      %p278 = scmp.ne.s32.totalorder %s269, %s270
      %p279 = scmp.eq.s32.totalorder %s28, 0
      %p280 = por %p278, %p279
      %p281 = scmp.ne.s32.totalorder %s269, %s270
      %p282 = scmp.eq.s32.totalorder %s29, 1
      %p283 = por %p281, %p282
      %p285 = scmp.ne.s32.totalorder %s270, %s284
      %p286 = scmp.eq.s32.totalorder %s29, 0
      %p287 = por %p285, %p286
      %s289 = sadd.s32 %s288, 1
      %p292 = scmp.eq.s32.totalorder %s23, 1
      %p293 = scmp.ne.s32.totalorder %s288, %s290
      %p294 = scmp.eq.s32.totalorder %s23, 0
      %p295 = por %p293, %p294
      %p296 = scmp.ne.s32.totalorder %s288, %s290
      %p297 = scmp.eq.s32.totalorder %s28, 1
      %p298 = por %p296, %p297
      %p299 = scmp.ne.s32.totalorder %s290, %s291
      %p300 = scmp.eq.s32.totalorder %s28, 0
      %p301 = por %p299, %p300
      %p302 = scmp.ne.s32.totalorder %s290, %s291
      %p303 = scmp.eq.s32.totalorder %s29, 1
      %p304 = por %p302, %p303
      %p306 = scmp.ne.s32.totalorder %s291, %s305
      %p307 = scmp.eq.s32.totalorder %s29, 0
      %p308 = por %p306, %p307
      %s310 = sadd.s32 %s309, 1
      %p313 = scmp.eq.s32.totalorder %s23, 1
      %p314 = scmp.ne.s32.totalorder %s309, %s311
      %p315 = scmp.eq.s32.totalorder %s23, 0
      %p316 = por %p314, %p315
      %p317 = scmp.ne.s32.totalorder %s309, %s311
      %p318 = scmp.eq.s32.totalorder %s28, 1
      %p319 = por %p317, %p318
      %p320 = scmp.ne.s32.totalorder %s311, %s312
      %p321 = scmp.eq.s32.totalorder %s28, 0
      %p322 = por %p320, %p321
      %p323 = scmp.ne.s32.totalorder %s311, %s312
      %p324 = scmp.eq.s32.totalorder %s29, 1
      %p325 = por %p323, %p324
      %p327 = scmp.ne.s32.totalorder %s312, %s326
      %p328 = scmp.eq.s32.totalorder %s29, 0
      %p329 = por %p327, %p328
      %s331 = sadd.s32 %s330, 1
      %p334 = scmp.eq.s32.totalorder %s23, 1
      %p335 = scmp.ne.s32.totalorder %s330, %s332
      %p336 = scmp.eq.s32.totalorder %s23, 0
      %p337 = por %p335, %p336
      %p338 = scmp.ne.s32.totalorder %s330, %s332
      %p339 = scmp.eq.s32.totalorder %s28, 1
      %p340 = por %p338, %p339
      %p341 = scmp.ne.s32.totalorder %s332, %s333
      %p342 = scmp.eq.s32.totalorder %s28, 0
      %p343 = por %p341, %p342
      %p344 = scmp.ne.s32.totalorder %s332, %s333
      %p345 = scmp.eq.s32.totalorder %s29, 1
      %p346 = por %p344, %p345
      %p348 = scmp.ne.s32.totalorder %s333, %s347
      %p349 = scmp.eq.s32.totalorder %s29, 0
      %p350 = por %p348, %p349
      %s351 = ssub.s32 %s23, %s30
      %p352 = scmp.eq.s32.totalorder %s351, 0
      %s354 = sadd.s32 %s353, 1
      %s355 = scalar_select %p352, %s353, %s354
      %p358 = pneg %p352
      %p359 = scmp.eq.s32.totalorder %s23, 1
      %p360 = por %p358, %p359
      %p361 = scmp.ne.s32.totalorder %s353, %s356
      %p362 = scmp.eq.s32.totalorder %s23, 0
      %p363 = por %p361, %p362
      %p364 = scmp.ne.s32.totalorder %s353, %s356
      %p365 = scmp.eq.s32.totalorder %s28, 1
      %p366 = por %p364, %p365
      %p367 = scmp.ne.s32.totalorder %s356, %s357
      %p368 = scmp.eq.s32.totalorder %s28, 0
      %p369 = por %p367, %p368
      %p370 = scmp.ne.s32.totalorder %s356, %s357
      %p371 = scmp.eq.s32.totalorder %s29, 1
      %p372 = por %p370, %p371
      %p374 = scmp.ne.s32.totalorder %s357, %s373
      %p375 = scmp.eq.s32.totalorder %s29, 0
      %p376 = por %p374, %p375
      %p377 = scmp.le.s32.totalorder 1, %s23
      %p378 = scmp.lt.s32.totalorder %s23, 3
      %p379 = pnand %p377, %p378
      %p380 = pneg %p379
      // Predicated region
      $region9: #{_lambda_.1} parent=5 // pred_check
        _
      $region10: #{_lambda_.1} parent=5 // pred_check_branch
        %382 = sbr.rel (%p379) target = $region12
      $region11: #{_lambda_.1} parent=5 // pred_region
        %s383 = ssub.s32 %s23, 1
        // Predicated region
        $region13: #{_lambda_.1} parent=11 // pred_check
          %p384 = pneg %p70
        $region14: #{_lambda_.1} parent=11 // pred_check_branch
          %386 = sbr.rel (%p384) target = $region16
        $region15: #{_lambda_.1} parent=11 // pred_region
          _
        $region16: #{_lambda_.1} parent=11 // pred_fallthru
          _
        // Predicated region
        $region17: #{_lambda_.1} parent=11 // pred_check
          %p387 = pneg %p91
        $region18: #{_lambda_.1} parent=11 // pred_check_branch
          %389 = sbr.rel (%p387) target = $region20
        $region19: #{_lambda_.1} parent=11 // pred_region
          _
        $region20: #{_lambda_.1} parent=11 // pred_fallthru
          _
        // Predicated region
        $region21: #{_lambda_.1} parent=11 // pred_check
          %p390 = pneg %p112
        $region22: #{_lambda_.1} parent=11 // pred_check_branch
          %392 = sbr.rel (%p390) target = $region24
        $region23: #{_lambda_.1} parent=11 // pred_region
          _
        $region24: #{_lambda_.1} parent=11 // pred_fallthru
          _
        // Predicated region
        $region25: #{_lambda_.1} parent=11 // pred_check
          %p393 = pneg %p133
        $region26: #{_lambda_.1} parent=11 // pred_check_branch
          %395 = sbr.rel (%p393) target = $region28
        $region27: #{_lambda_.1} parent=11 // pred_region
          _
        $region28: #{_lambda_.1} parent=11 // pred_fallthru
          _
        // Predicated region
        $region29: #{_lambda_.1} parent=11 // pred_check
          %p396 = pneg %p154
        $region30: #{_lambda_.1} parent=11 // pred_check_branch
          %398 = sbr.rel (%p396) target = $region32
        $region31: #{_lambda_.1} parent=11 // pred_region
          _
        $region32: #{_lambda_.1} parent=11 // pred_fallthru
          _
        // Predicated region
        $region33: #{_lambda_.1} parent=11 // pred_check
          %p399 = pneg %p175
        $region34: #{_lambda_.1} parent=11 // pred_check_branch
          %401 = sbr.rel (%p399) target = $region36
        $region35: #{_lambda_.1} parent=11 // pred_region
          _
        $region36: #{_lambda_.1} parent=11 // pred_fallthru
          _
        // Predicated region
        $region37: #{_lambda_.1} parent=11 // pred_check
          %p402 = pneg %p196
        $region38: #{_lambda_.1} parent=11 // pred_check_branch
          %404 = sbr.rel (%p402) target = $region40
        $region39: #{_lambda_.1} parent=11 // pred_region
          _
        $region40: #{_lambda_.1} parent=11 // pred_fallthru
          _
        // Predicated region
        $region41: #{_lambda_.1} parent=11 // pred_check
          %p405 = pneg %p217
        $region42: #{_lambda_.1} parent=11 // pred_check_branch
          %407 = sbr.rel (%p405) target = $region44
        $region43: #{_lambda_.1} parent=11 // pred_region
          _
        $region44: #{_lambda_.1} parent=11 // pred_fallthru
          _
        // Predicated region
        $region45: #{_lambda_.1} parent=11 // pred_check
          %p408 = pneg %p238
        $region46: #{_lambda_.1} parent=11 // pred_check_branch
          %410 = sbr.rel (%p408) target = $region48
        $region47: #{_lambda_.1} parent=11 // pred_region
          _
        $region48: #{_lambda_.1} parent=11 // pred_fallthru
          _
        // Predicated region
        $region49: #{_lambda_.1} parent=11 // pred_check
          %p411 = pneg %p259
        $region50: #{_lambda_.1} parent=11 // pred_check_branch
          %413 = sbr.rel (%p411) target = $region52
        $region51: #{_lambda_.1} parent=11 // pred_region
          _
        $region52: #{_lambda_.1} parent=11 // pred_fallthru
          _
        // Predicated region
        $region53: #{_lambda_.1} parent=11 // pred_check
          %p414 = pneg %p280
        $region54: #{_lambda_.1} parent=11 // pred_check_branch
          %416 = sbr.rel (%p414) target = $region56
        $region55: #{_lambda_.1} parent=11 // pred_region
          _
        $region56: #{_lambda_.1} parent=11 // pred_fallthru
          _
        // Predicated region
        $region57: #{_lambda_.1} parent=11 // pred_check
          %p417 = pneg %p301
        $region58: #{_lambda_.1} parent=11 // pred_check_branch
          %419 = sbr.rel (%p417) target = $region60
        $region59: #{_lambda_.1} parent=11 // pred_region
          _
        $region60: #{_lambda_.1} parent=11 // pred_fallthru
          _
        // Predicated region
        $region61: #{_lambda_.1} parent=11 // pred_check
          %p420 = pneg %p322
        $region62: #{_lambda_.1} parent=11 // pred_check_branch
          %422 = sbr.rel (%p420) target = $region64
        $region63: #{_lambda_.1} parent=11 // pred_region
          _
        $region64: #{_lambda_.1} parent=11 // pred_fallthru
          _
        // Predicated region
        $region65: #{_lambda_.1} parent=11 // pred_check
          %p423 = pneg %p343
        $region66: #{_lambda_.1} parent=11 // pred_check_branch
          %425 = sbr.rel (%p423) target = $region68
        $region67: #{_lambda_.1} parent=11 // pred_region
          _
        $region68: #{_lambda_.1} parent=11 // pred_fallthru
          _
      $region12: #{_lambda_.1} parent=5 // pred_fallthru
        _
      %p426 = scmp.lt.s32.totalorder %s23, 2
      // Predicated region
      $region69: #{_lambda_.1} parent=5 // pred_check
        %p427 = pneg %p426
      $region70: #{_lambda_.1} parent=5 // pred_check_branch
        %429 = sbr.rel (%p427) target = $region72
      $region71: #{_lambda_.1} parent=5 // pred_region
        // Predicated region
        $region73: #{_lambda_.1} parent=71 // pred_check
          %p430 = pneg %p43
        $region74: #{_lambda_.1} parent=71 // pred_check_branch
          %432 = sbr.rel (%p430) target = $region76
        $region75: #{_lambda_.1} parent=71 // pred_region
          %s433 = sand.u32 %s33, 1
          %s434 = sand.u32 %s33, 1
          %s435 = smul.addr %s434, 64
          %s436 = scalar_lea.vmem [#allocation4], %s435
          %s437 = smul.u32 2, %s23
          %s438 = smul.addr %s437, 8
          %s439 = scalar_lea.vmem %s0, %s438
          // Predicated region
          $region77: #{_lambda_.1} parent=75 // pred_check
            _
          $region78: #{_lambda_.1} parent=75 // pred_check_branch
            %441 = sbr.rel (0) target = $region80
          $region79: #{_lambda_.1} parent=75 // pred_region
            // Predicated region
            $region81: #{_lambda_.1} parent=79 // pred_check
              _
            $region82: #{_lambda_.1} parent=79 // pred_check_branch
              %443 = sbr.rel (0) target = $region84
            $region83: #{_lambda_.1} parent=79 // pred_region
              loop: start=0, step=1, limit=1
              $region85: #{_lambda_.1} parent=83 // loop_pre_header
                _
              $region86: #{_lambda_.1} parent=83 // loop_header
                %s445 = sphi 0, %s449
                %p446 = scmp.ge.s32.totalorder %s445, 1
                %s450 = sphi %s439, %s439
                %s451 = sphi %s436, %s436
              $region87: #{_lambda_.1} parent=83 // loop_header_branch
                %448 = sbr.rel (%p446) target = $region91
              $region88: #{_lambda_.1} parent=83 // loop_body
                %v452 = vld [vmem:[%s450] sm:$0xff]
                %453 = vst [vmem:[%s451] sm:$0xff] %v452
                %v454 = vld [vmem:[%s450 + $0x8] sm:$0xff]
                %455 = vst [vmem:[%s451 + $0x8] sm:$0xff] %v454
                %v456 = vld [vmem:[%s450 + $0x20] sm:$0xff]
                %457 = vst [vmem:[%s451 + $0x10] sm:$0xff] %v456
                %v458 = vld [vmem:[%s450 + $0x28] sm:$0xff]
                %459 = vst [vmem:[%s451 + $0x18] sm:$0xff] %v458
                %v460 = vld [vmem:[%s450 + $0x40] sm:$0xff]
                %461 = vst [vmem:[%s451 + $0x20] sm:$0xff] %v460
                %v462 = vld [vmem:[%s450 + $0x48] sm:$0xff]
                %463 = vst [vmem:[%s451 + $0x28] sm:$0xff] %v462
                %v464 = vld [vmem:[%s450 + $0x60] sm:$0xff]
                %465 = vst [vmem:[%s451 + $0x30] sm:$0xff] %v464
                %v466 = vld [vmem:[%s450 + $0x68] sm:$0xff]
                %467 = vst [vmem:[%s451 + $0x38] sm:$0xff] %v466
              $region89: #{_lambda_.1} parent=83 // loop_footer
                %s449 = sadd.s32 1, %s445
              $region90: #{_lambda_.1} parent=83 // loop_footer_branch
                %444 = sbr.rel target = $region86
              $region91: #{_lambda_.1} parent=83 // loop_exit
                _
            $region84: #{_lambda_.1} parent=79 // pred_fallthru
              _
            // Predicated region
            $region92: #{_lambda_.1} parent=79 // pred_check
              _
            $region93: #{_lambda_.1} parent=79 // pred_check_branch
              %469 = sbr.rel target = $region95
            $region94: #{_lambda_.1} parent=79 // pred_region
              _
            $region95: #{_lambda_.1} parent=79 // pred_fallthru
              _
          $region80: #{_lambda_.1} parent=75 // pred_fallthru
            _
          %470 = vnop
        $region76: #{_lambda_.1} parent=71 // pred_fallthru
          _
      $region72: #{_lambda_.1} parent=5 // pred_fallthru
        _
      %p471 = scmp.le.s32.totalorder 1, %s23
      %p472 = scmp.lt.s32.totalorder %s23, 3
      %p473 = pnand %p471, %p472
      %p474 = pneg %p473
      // Predicated region
      $region96: #{_lambda_.1} parent=5 // pred_check
        _
      $region97: #{_lambda_.1} parent=5 // pred_check_branch
        %476 = sbr.rel (%p473) target = $region99
      $region98: #{_lambda_.1} parent=5 // pred_region
        %s477 = ssub.s32 %s23, 1
        %s478 = sand.u32 %s36, 1
        %s479 = sand.u32 %s36, 1
        %s480 = smul.addr %s479, 64
        %s481 = scalar_lea.vmem [#allocation4], %s480
        // Predicated region
        $region100: #{_lambda_.1} parent=98 // pred_check
          %p482 = pneg %p49
        $region101: #{_lambda_.1} parent=98 // pred_check_branch
          %484 = sbr.rel (%p482) target = $region103
        $region102: #{_lambda_.1} parent=98 // pred_region
          _
        $region103: #{_lambda_.1} parent=98 // pred_fallthru
          _
        %s485 = sand.u32 %s36, 1
        %s486 = sand.u32 %s36, 1
        %s487 = smul.addr %s486, 64
        %s488 = scalar_lea.vmem [#allocation4], %s487
        %p489 = pneg %p49
        %p490 = pneg %p46
        %p491 = pneg %p70
        %p492 = pneg %p67
        %p493 = pneg %p91
        %p494 = pneg %p88
        %p495 = pneg %p112
        %p496 = pneg %p109
        %p497 = pneg %p133
        %p498 = pneg %p130
        %p499 = pneg %p154
        %p500 = pneg %p151
        %p501 = pneg %p175
        %p502 = pneg %p172
        %p503 = pneg %p196
        %p504 = pneg %p193
        %p505 = pneg %p217
        %p506 = pneg %p214
        %p507 = pneg %p238
        %p508 = pneg %p235
        %p509 = pneg %p259
        %p510 = pneg %p256
        %p511 = pneg %p280
        %p512 = pneg %p277
        %p513 = pneg %p301
        %p514 = pneg %p298
        %p515 = pneg %p322
        %p516 = pneg %p319
        %p517 = pneg %p343
        %p518 = pneg %p340
        %p519 = pneg %p369
        %p520 = pneg %p366
        %s521 = sand.u32 %s356, 1
        %s522 = sand.u32 %s356, 1
        %s523 = smul.addr %s522, 64
        %s524 = scalar_lea.vmem [#allocation5], %s523
        %s525 = smul.u32 2, %s28
        %s526 = smul.u32 2, %s28
        %v527 = vld [vmem:[%s481] sm:$0xff]
        %v528 = vld [vmem:[%s481 + $0x8] sm:$0xff]
        %v529 = vld [vmem:[%s481 + $0x10] sm:$0xff]
        %v530 = vld [vmem:[%s481 + $0x18] sm:$0xff]
        %v531 = vld [vmem:[%s481 + $0x20] sm:$0xff]
        %v532 = vld [vmem:[%s481 + $0x28] sm:$0xff]
        %v533 = vld [vmem:[%s481 + $0x30] sm:$0xff]
        %v534 = vld [vmem:[%s481 + $0x38] sm:$0xff]
        %v535 = vld [vmem:[%s1] sm:$0xff]
        %v536 = vld [vmem:[%s1 + $0x8] sm:$0xff]
        %v537 = vld [vmem:[%s1 + $0x10] sm:$0xff]
        %v538 = vld [vmem:[%s1 + $0x18] sm:$0xff]
        %v539 = vld [vmem:[%s1 + $0x20] sm:$0xff]
        %v540 = vld [vmem:[%s1 + $0x28] sm:$0xff]
        %v541 = vld [vmem:[%s1 + $0x30] sm:$0xff]
        %v542 = vld [vmem:[%s1 + $0x38] sm:$0xff]
        %vm543 = vcmask 261120
        %v545 = vsel %vm543, %v535, 0
        %v548 = vsel %vm543, %v536, 0
        %v551 = vsel %vm543, %v537, 0
        %v554 = vsel %vm543, %v538, 0
        %v557 = vsel %vm543, %v539, 0
        %v560 = vsel %vm543, %v540, 0
        %v563 = vsel %vm543, %v541, 0
        %v566 = vsel %vm543, %v542, 0
        %568 = vmatprep.subr.mxu0 %v528
        %569 = vmatpush1.msra.mxu0 %v527
        %570 = vmatprep.subr.mxu0 %v530
        %571 = vmatpush1.msra.mxu0 %v529
        %572 = vmatprep.subr.mxu0 %v532
        %573 = vmatpush1.msra.mxu0 %v531
        %574 = vmatprep.subr.mxu0 %v534
        %575 = vmatpush1.msra.mxu0 %v533
        %576 = vmatprep.subr.mxu0 0.0
        %577 = vmatpush1.msra.mxu0 0.0
        %578 = vmatprep.subr.mxu0 0.0
        %579 = vmatpush1.msra.mxu0 0.0
        %580 = vmatprep.subr.mxu0 0.0
        %581 = vmatpush1.msra.mxu0 0.0
        %582 = vmatprep.subr.mxu0 0.0
        %583 = vmatpush1.msra.mxu0 0.0
        %584 = vmatprep.subr.mxu0 0.0
        %585 = vmatpush1.msra.mxu0 0.0
        %586 = vmatprep.subr.mxu0 0.0
        %587 = vmatpush1.msra.mxu0 0.0
        %588 = vmatprep.subr.mxu0 0.0
        %589 = vmatpush1.msra.mxu0 0.0
        %590 = vmatprep.subr.mxu0 0.0
        %591 = vmatpush1.msra.mxu0 0.0
        %592 = vmatprep.subr.mxu0 0.0
        %593 = vmatpush1.msra.mxu0 0.0
        %594 = vmatprep.subr.mxu0 0.0
        %595 = vmatpush1.msra.mxu0 0.0
        %596 = vmatprep.subr.mxu0 0.0
        %597 = vmatpush1.msra.mxu0 0.0
        %598 = vmatprep.subr.mxu0 0.0
        %599 = vmatpush1.msra.mxu0 0.0
        %600 = vmatprep.subr.mxu0 0.0
        %601 = vmatpush1.msra.mxu0 0.0
        %602 = vmatprep.subr.mxu0 0.0
        %603 = vmatpush1.msra.mxu0 0.0
        %604 = vmatprep.subr.mxu0 0.0
        %605 = vmatpush1.msra.mxu0 0.0
        %606 = vmatprep.subr.mxu0 0.0
        %607 = vmatpush1.msra.mxu0 0.0
        %608 = vmatprep.subr.mxu0 0.0
        %609 = vmatpush1.msra.mxu0 0.0
        %610 = vmatprep.subr.mxu0 0.0
        %611 = vmatpush1.msra.mxu0 0.0
        %612 = vmatprep.subr.mxu0 0.0
        %613 = vmatpush1.msra.mxu0 0.0
        %614 = vmatprep.subr.mxu0 0.0
        %615 = vmatpush1.msra.mxu0 0.0
        %616 = vmatprep.subr.mxu0 0.0
        %617 = vmatpush1.msra.mxu0 0.0
        %618 = vmatprep.subr.mxu0 0.0
        %619 = vmatpush1.msra.mxu0 0.0
        %620 = vmatprep.subr.mxu0 0.0
        %621 = vmatpush1.msra.mxu0 0.0
        %622 = vmatprep.subr.mxu0 0.0
        %623 = vmatpush1.msra.mxu0 0.0
        %624 = vmatprep.subr.mxu0 0.0
        %625 = vmatpush1.msra.mxu0 0.0
        %626 = vmatprep.subr.mxu0 0.0
        %627 = vmatpush1.msra.mxu0 0.0
        %628 = vmatprep.subr.mxu0 0.0
        %629 = vmatpush1.msra.mxu0 0.0
        %630 = vmatprep.subr.mxu0 0.0
        %631 = vmatpush1.msra.mxu0 0.0
        %632 = vmatprep.mubr.f32.mxu0 0.0
        %633 = vmatmul.mubr.f32.gmra.mrb[0].mxu0 %v545
        %v634 = vpop.f32.mrb[0].mxu0
        %v635 = vadd.f32 0.0, %v634
        %v636 = vpop.f32.mrb[0].mxu0
        %v637 = vadd.f32 0.0, %v636
        %638 = vmatprep.mubr.f32.mxu0 0.0
        %639 = vmatmul.mubr.f32.gmra.mrb[0].mxu0 %v548
        %v640 = vpop.f32.mrb[0].mxu0
        %v641 = vadd.f32 0.0, %v640
        %v642 = vpop.f32.mrb[0].mxu0
        %v643 = vadd.f32 0.0, %v642
        %644 = vmatprep.mubr.f32.mxu0 0.0
        %645 = vmatmul.mubr.f32.gmra.mrb[0].mxu0 %v551
        %v646 = vpop.f32.mrb[0].mxu0
        %v647 = vadd.f32 0.0, %v646
        %v648 = vpop.f32.mrb[0].mxu0
        %v649 = vadd.f32 0.0, %v648
        %650 = vmatprep.mubr.f32.mxu0 0.0
        %651 = vmatmul.mubr.f32.gmra.mrb[0].mxu0 %v554
        %v652 = vpop.f32.mrb[0].mxu0
        %v653 = vadd.f32 0.0, %v652
        %v654 = vpop.f32.mrb[0].mxu0
        %v655 = vadd.f32 0.0, %v654
        %656 = vmatprep.mubr.f32.mxu0 0.0
        %657 = vmatmul.mubr.f32.gmra.mrb[0].mxu0 %v557
        %v658 = vpop.f32.mrb[0].mxu0
        %v659 = vadd.f32 0.0, %v658
        %v660 = vpop.f32.mrb[0].mxu0
        %v661 = vadd.f32 0.0, %v660
        %662 = vmatprep.mubr.f32.mxu0 0.0
        %663 = vmatmul.mubr.f32.gmra.mrb[0].mxu0 %v560
        %v664 = vpop.f32.mrb[0].mxu0
        %v665 = vadd.f32 0.0, %v664
        %v666 = vpop.f32.mrb[0].mxu0
        %v667 = vadd.f32 0.0, %v666
        %668 = vmatprep.mubr.f32.mxu0 0.0
        %669 = vmatmul.mubr.f32.gmra.mrb[0].mxu0 %v563
        %v670 = vpop.f32.mrb[0].mxu0
        %v671 = vadd.f32 0.0, %v670
        %v672 = vpop.f32.mrb[0].mxu0
        %v673 = vadd.f32 0.0, %v672
        %674 = vmatprep.mubr.f32.mxu0 0.0
        %675 = vmatmul.mubr.f32.gmra.mrb[0].mxu0 %v566
        %v676 = vpop.f32.mrb[0].mxu0
        %v677 = vadd.f32 0.0, %v676
        %v678 = vpop.f32.mrb[0].mxu0
        %v679 = vadd.f32 0.0, %v678
        %680 = vdwg.mxu0
        %vm681 = vcmp.ge.f32.partialorder %v635, 0.0
        %vm682 = vcmp.ge.f32.partialorder %v637, 0.0
        %vm683 = vcmp.ge.f32.partialorder %v641, 0.0
        %vm684 = vcmp.ge.f32.partialorder %v643, 0.0
        %vm685 = vcmp.ge.f32.partialorder %v647, 0.0
        %vm686 = vcmp.ge.f32.partialorder %v649, 0.0
        %vm687 = vcmp.ge.f32.partialorder %v653, 0.0
        %vm688 = vcmp.ge.f32.partialorder %v655, 0.0
        %vm689 = vcmp.ge.f32.partialorder %v659, 0.0
        %vm690 = vcmp.ge.f32.partialorder %v661, 0.0
        %vm691 = vcmp.ge.f32.partialorder %v665, 0.0
        %vm692 = vcmp.ge.f32.partialorder %v667, 0.0
        %vm693 = vcmp.ge.f32.partialorder %v671, 0.0
        %vm694 = vcmp.ge.f32.partialorder %v673, 0.0
        %vm695 = vcmp.ge.f32.partialorder %v677, 0.0
        %vm696 = vcmp.ge.f32.partialorder %v679, 0.0
        %v697 = vmul.f32 %v635, 0.01
        %v698 = vmul.f32 %v637, 0.01
        %v699 = vmul.f32 %v641, 0.01
        %v700 = vmul.f32 %v643, 0.01
        %v701 = vmul.f32 %v647, 0.01
        %v702 = vmul.f32 %v649, 0.01
        %v703 = vmul.f32 %v653, 0.01
        %v704 = vmul.f32 %v655, 0.01
        %v705 = vmul.f32 %v659, 0.01
        %v706 = vmul.f32 %v661, 0.01
        %v707 = vmul.f32 %v665, 0.01
        %v708 = vmul.f32 %v667, 0.01
        %v709 = vmul.f32 %v671, 0.01
        %v710 = vmul.f32 %v673, 0.01
        %v711 = vmul.f32 %v677, 0.01
        %v712 = vmul.f32 %v679, 0.01
        %v713 = vsel %vm681, %v635, %v697
        %v714 = vsel %vm682, %v637, %v698
        %v715 = vsel %vm683, %v641, %v699
        %v716 = vsel %vm684, %v643, %v700
        %v717 = vsel %vm685, %v647, %v701
        %v718 = vsel %vm686, %v649, %v702
        %v719 = vsel %vm687, %v653, %v703
        %v720 = vsel %vm688, %v655, %v704
        %v721 = vsel %vm689, %v659, %v705
        %v722 = vsel %vm690, %v661, %v706
        %v723 = vsel %vm691, %v665, %v707
        %v724 = vsel %vm692, %v667, %v708
        %v725 = vsel %vm693, %v671, %v709
        %v726 = vsel %vm694, %v673, %v710
        %v727 = vsel %vm695, %v677, %v711
        %v728 = vsel %vm696, %v679, %v712
        %729 = vst [vmem:[#allocation2] sm:$0xff] %v713
        %730 = vst [vmem:[#allocation2 + $0x8] sm:$0xff] %v714
        %731 = vst [vmem:[#allocation2 + $0x10] sm:$0xff] %v715
        %732 = vst [vmem:[#allocation2 + $0x18] sm:$0xff] %v716
        %733 = vst [vmem:[#allocation2 + $0x20] sm:$0xff] %v717
        %734 = vst [vmem:[#allocation2 + $0x28] sm:$0xff] %v718
        %735 = vst [vmem:[#allocation2 + $0x30] sm:$0xff] %v719
        %736 = vst [vmem:[#allocation2 + $0x38] sm:$0xff] %v720
        %737 = vst [vmem:[#allocation2 + $0x40] sm:$0xff] %v721
        %738 = vst [vmem:[#allocation2 + $0x48] sm:$0xff] %v722
        %739 = vst [vmem:[#allocation2 + $0x50] sm:$0xff] %v723
        %740 = vst [vmem:[#allocation2 + $0x58] sm:$0xff] %v724
        %741 = vst [vmem:[#allocation2 + $0x60] sm:$0xff] %v725
        %742 = vst [vmem:[#allocation2 + $0x68] sm:$0xff] %v726
        %743 = vst [vmem:[#allocation2 + $0x70] sm:$0xff] %v727
        %744 = vst [vmem:[#allocation2 + $0x78] sm:$0xff] %v728
        %v745 = vld [vmem:[%s4] sm:$0x3]
        %v747 = vlaneseq
        %v748 = vshrl.u32 %v747, 7
        %v749 = vsub.s32 0, %v748
        %v750 = vrot.slane %v745, %v749
        %v751 = vlaneseq
        %v752 = vshrl.u32 %v751, 7
        %v753 = vsub.s32 1, %v752
        %v754 = vrot.slane %v745, %v753
        %s757 = scalar_lea.vmem %s4, 2
        %v758 = vld [vmem:[%s757] sm:$0x3]
        %v760 = vlaneseq
        %v761 = vshrl.u32 %v760, 7
        %v762 = vsub.s32 0, %v761
        %v763 = vrot.slane %v758, %v762
        %v764 = vlaneseq
        %v765 = vshrl.u32 %v764, 7
        %v766 = vsub.s32 1, %v765
        %v767 = vrot.slane %v758, %v766
        %s770 = scalar_lea.vmem %s4, 4
        %v771 = vld [vmem:[%s770] sm:$0x3]
        %v773 = vlaneseq
        %v774 = vshrl.u32 %v773, 7
        %v775 = vsub.s32 0, %v774
        %v776 = vrot.slane %v771, %v775
        %v777 = vlaneseq
        %v778 = vshrl.u32 %v777, 7
        %v779 = vsub.s32 1, %v778
        %v780 = vrot.slane %v771, %v779
        %s783 = scalar_lea.vmem %s4, 6
        %v784 = vld [vmem:[%s783] sm:$0x3]
        %v786 = vlaneseq
        %v787 = vshrl.u32 %v786, 7
        %v788 = vsub.s32 0, %v787
        %v789 = vrot.slane %v784, %v788
        %v790 = vlaneseq
        %v791 = vshrl.u32 %v790, 7
        %v792 = vsub.s32 1, %v791
        %v793 = vrot.slane %v784, %v792
        %s796 = scalar_lea.vmem %s4, 10
        %v797 = vld [vmem:[%s796] sm:$0x3]
        %v799 = vlaneseq
        %v800 = vshrl.u32 %v799, 7
        %v801 = vsub.s32 0, %v800
        %v802 = vrot.slane %v797, %v801
        %v803 = vlaneseq
        %v804 = vshrl.u32 %v803, 7
        %v805 = vsub.s32 1, %v804
        %v806 = vrot.slane %v797, %v805
        %s809 = scalar_lea.vmem %s4, 12
        %v810 = vld [vmem:[%s809] sm:$0x3]
        %v812 = vlaneseq
        %v813 = vshrl.u32 %v812, 7
        %v814 = vsub.s32 0, %v813
        %v815 = vrot.slane %v810, %v814
        %v816 = vlaneseq
        %v817 = vshrl.u32 %v816, 7
        %v818 = vsub.s32 1, %v817
        %v819 = vrot.slane %v810, %v818
        %s822 = scalar_lea.vmem %s4, 14
        %v823 = vld [vmem:[%s822] sm:$0x3]
        %v825 = vlaneseq
        %v826 = vshrl.u32 %v825, 7
        %v827 = vsub.s32 0, %v826
        %v828 = vrot.slane %v823, %v827
        %v829 = vlaneseq
        %v830 = vshrl.u32 %v829, 7
        %v831 = vsub.s32 1, %v830
        %v832 = vrot.slane %v823, %v831
        %s835 = scalar_lea.vmem %s4, 16
        %v836 = vld [vmem:[%s835] sm:$0x3]
        %v838 = vlaneseq
        %v839 = vshrl.u32 %v838, 7
        %v840 = vsub.s32 0, %v839
        %v841 = vrot.slane %v836, %v840
        %v842 = vlaneseq
        %v843 = vshrl.u32 %v842, 7
        %v844 = vsub.s32 1, %v843
        %v845 = vrot.slane %v836, %v844
        %v848 = vld [vmem:[#allocation2] sm:$0xff]
        %v849 = vld [vmem:[#allocation2 + $0x8] sm:$0xff]
        %v850 = vld [vmem:[#allocation2 + $0x10] sm:$0xff]
        %v851 = vld [vmem:[#allocation2 + $0x18] sm:$0xff]
        %852 = vrot.lane.b32.xlu0 %v848, 17
        %v853 = vpop.permute.xlu0 %852
        %854 = vrot.lane.b32.xlu0 %v850, 17
        %v855 = vpop.permute.xlu0 %854
        %856 = vrot.lane.b32.xlu0 %v849, 17
        %v857 = vpop.permute.xlu0 %856
        %858 = vrot.lane.b32.xlu0 %v851, 17
        %v859 = vpop.permute.xlu0 %858
        %v860 = vlaneseq
        %v861 = vand.u32 %v860, 127
        %vm862 = vcmp.lt.s32.totalorder %v861, 17
        %v863 = vsel %vm862, %v853, %v857
        %v864 = vsel %vm862, %v855, %v859
        %v865 = vsel %vm862, %v857, %v853
        %v866 = vsel %vm862, %v859, %v855
        %v867 = vmul.f32 %v865, %v750
        %v868 = vmul.f32 %v863, %v754
        %v869 = vmul.f32 %v866, %v750
        %v870 = vmul.f32 %v864, %v754
        %871 = vrot.lane.b32.xlu0 %v848, 16
        %v872 = vpop.permute.xlu0 %871
        %873 = vrot.lane.b32.xlu0 %v850, 16
        %v874 = vpop.permute.xlu0 %873
        %875 = vrot.lane.b32.xlu0 %v849, 16
        %v876 = vpop.permute.xlu0 %875
        %877 = vrot.lane.b32.xlu0 %v851, 16
        %v878 = vpop.permute.xlu0 %877
        %vm879 = vcmp.lt.s32.totalorder %v861, 16
        %v880 = vsel %vm879, %v872, %v876
        %v881 = vsel %vm879, %v874, %v878
        %v882 = vsel %vm879, %v876, %v872
        %v883 = vsel %vm879, %v878, %v874
        %v884 = vmul.f32 %v882, %v763
        %v885 = vmul.f32 %v880, %v767
        %v886 = vmul.f32 %v883, %v763
        %v887 = vmul.f32 %v881, %v767
        %888 = vrot.lane.b32.xlu0 %v848, 15
        %v889 = vpop.permute.xlu0 %888
        %890 = vrot.lane.b32.xlu0 %v850, 15
        %v891 = vpop.permute.xlu0 %890
        %892 = vrot.lane.b32.xlu0 %v849, 15
        %v893 = vpop.permute.xlu0 %892
        %894 = vrot.lane.b32.xlu0 %v851, 15
        %v895 = vpop.permute.xlu0 %894
        %vm896 = vcmp.lt.s32.totalorder %v861, 15
        %v897 = vsel %vm896, %v889, %v893
        %v898 = vsel %vm896, %v891, %v895
        %v899 = vsel %vm896, %v893, %v889
        %v900 = vsel %vm896, %v895, %v891
        %v901 = vmul.f32 %v899, %v776
        %v902 = vmul.f32 %v897, %v780
        %v903 = vmul.f32 %v900, %v776
        %v904 = vmul.f32 %v898, %v780
        %905 = vrot.lane.b32.xlu0 %v848, 1
        %v906 = vpop.permute.xlu0 %905
        %907 = vrot.lane.b32.xlu0 %v850, 1
        %v908 = vpop.permute.xlu0 %907
        %909 = vrot.lane.b32.xlu0 %v849, 1
        %v910 = vpop.permute.xlu0 %909
        %911 = vrot.lane.b32.xlu0 %v851, 1
        %v912 = vpop.permute.xlu0 %911
        %vm913 = vcmp.lt.s32.totalorder %v861, 1
        %v914 = vsel %vm913, %v906, %v910
        %v915 = vsel %vm913, %v908, %v912
        %v916 = vsel %vm913, %v910, %v906
        %v917 = vsel %vm913, %v912, %v908
        %v918 = vmul.f32 %v916, %v789
        %v919 = vmul.f32 %v914, %v793
        %v920 = vmul.f32 %v917, %v789
        %v921 = vmul.f32 %v915, %v793
        %922 = vrot.lane.b32.xlu0 %v848, 127
        %v923 = vpop.permute.xlu0 %922
        %924 = vrot.lane.b32.xlu0 %v850, 127
        %v925 = vpop.permute.xlu0 %924
        %926 = vrot.lane.b32.xlu0 %v849, 127
        %v927 = vpop.permute.xlu0 %926
        %928 = vrot.lane.b32.xlu0 %v851, 127
        %v929 = vpop.permute.xlu0 %928
        %vm930 = vcmp.lt.s32.totalorder %v861, 127
        %v931 = vsel %vm930, %v923, %v927
        %v932 = vsel %vm930, %v925, %v929
        %v933 = vsel %vm930, %v927, %v923
        %v934 = vsel %vm930, %v929, %v925
        %v935 = vmul.f32 %v931, %v802
        %v936 = vmul.f32 %v933, %v806
        %v937 = vmul.f32 %v932, %v802
        %v938 = vmul.f32 %v934, %v806
        %939 = vrot.lane.b32.xlu0 %v848, 113
        %v940 = vpop.permute.xlu0 %939
        %941 = vrot.lane.b32.xlu0 %v850, 113
        %v942 = vpop.permute.xlu0 %941
        %943 = vrot.lane.b32.xlu0 %v849, 113
        %v944 = vpop.permute.xlu0 %943
        %945 = vrot.lane.b32.xlu0 %v851, 113
        %v946 = vpop.permute.xlu0 %945
        %vm947 = vcmp.lt.s32.totalorder %v861, 113
        %v948 = vsel %vm947, %v940, %v944
        %v949 = vsel %vm947, %v942, %v946
        %v950 = vsel %vm947, %v944, %v940
        %v951 = vsel %vm947, %v946, %v942
        %v952 = vmul.f32 %v948, %v815
        %v953 = vmul.f32 %v950, %v819
        %v954 = vmul.f32 %v949, %v815
        %v955 = vmul.f32 %v951, %v819
        %956 = vrot.lane.b32.xlu0 %v848, 112
        %v957 = vpop.permute.xlu0 %956
        %958 = vrot.lane.b32.xlu0 %v850, 112
        %v959 = vpop.permute.xlu0 %958
        %960 = vrot.lane.b32.xlu0 %v849, 112
        %v961 = vpop.permute.xlu0 %960
        %962 = vrot.lane.b32.xlu0 %v851, 112
        %v963 = vpop.permute.xlu0 %962
        %vm964 = vcmp.lt.s32.totalorder %v861, 112
        %v965 = vsel %vm964, %v957, %v961
        %v966 = vsel %vm964, %v959, %v963
        %v967 = vsel %vm964, %v961, %v957
        %v968 = vsel %vm964, %v963, %v959
        %v969 = vmul.f32 %v965, %v828
        %v970 = vmul.f32 %v967, %v832
        %v971 = vmul.f32 %v966, %v828
        %v972 = vmul.f32 %v968, %v832
        %973 = vrot.lane.b32.xlu0 %v848, 111
        %v974 = vpop.permute.xlu0 %973
        %975 = vrot.lane.b32.xlu0 %v850, 111
        %v976 = vpop.permute.xlu0 %975
        %977 = vrot.lane.b32.xlu0 %v849, 111
        %v978 = vpop.permute.xlu0 %977
        %979 = vrot.lane.b32.xlu0 %v851, 111
        %v980 = vpop.permute.xlu0 %979
        %vm981 = vcmp.lt.s32.totalorder %v861, 111
        %v982 = vsel %vm981, %v974, %v978
        %v983 = vsel %vm981, %v976, %v980
        %v984 = vsel %vm981, %v978, %v974
        %v985 = vsel %vm981, %v980, %v976
        %v986 = vmul.f32 %v982, %v841
        %v987 = vmul.f32 %v984, %v845
        %v988 = vmul.f32 %v983, %v841
        %v989 = vmul.f32 %v985, %v845
        %v990 = vld [vmem:[%s2] sm:$0xff]
        %v991 = vld [vmem:[%s2 + $0x8] sm:$0xff]
        %v992 = vld [vmem:[%s2 + $0x10] sm:$0xff]
        %v993 = vld [vmem:[%s2 + $0x18] sm:$0xff]
        %vm994 = vcmask 130048
        %v996 = vsel %vm994, %v991, 0
        %v999 = vsel %vm994, %v993, 0
        %1001 = vmatprep.subr.mxu0 %v868
        %1002 = vmatpush1.msra.mxu0 %v867
        %1003 = vmatprep.subr.mxu0 %v870
        %1004 = vmatpush1.msra.mxu0 %v869
        %1005 = vmatprep.subr.mxu0 %v885
        %1006 = vmatpush1.msra.mxu0 %v884
        %1007 = vmatprep.subr.mxu0 %v887
        %1008 = vmatpush1.msra.mxu0 %v886
        %1009 = vmatprep.subr.mxu0 %v902
        %1010 = vmatpush1.msra.mxu0 %v901
        %1011 = vmatprep.subr.mxu0 %v904
        %1012 = vmatpush1.msra.mxu0 %v903
        %1013 = vmatprep.subr.mxu0 %v919
        %1014 = vmatpush1.msra.mxu0 %v918
        %1015 = vmatprep.subr.mxu0 %v921
        %1016 = vmatpush1.msra.mxu0 %v920
        %1017 = vmatprep.subr.mxu0 %v849
        %1018 = vmatpush1.msra.mxu0 %v848
        %1019 = vmatprep.subr.mxu0 %v851
        %1020 = vmatpush1.msra.mxu0 %v850
        %1021 = vmatprep.subr.mxu0 %v936
        %1022 = vmatpush1.msra.mxu0 %v935
        %1023 = vmatprep.subr.mxu0 %v938
        %1024 = vmatpush1.msra.mxu0 %v937
        %1025 = vmatprep.subr.mxu0 %v953
        %1026 = vmatpush1.msra.mxu0 %v952
        %1027 = vmatprep.subr.mxu0 %v955
        %1028 = vmatpush1.msra.mxu0 %v954
        %1029 = vmatprep.subr.mxu0 %v970
        %1030 = vmatpush1.msra.mxu0 %v969
        %1031 = vmatprep.subr.mxu0 %v972
        %1032 = vmatpush1.msra.mxu0 %v971
        %1033 = vmatprep.subr.mxu0 %v987
        %1034 = vmatpush1.msra.mxu0 %v986
        %1035 = vmatprep.subr.mxu0 %v989
        %1036 = vmatpush1.msra.mxu0 %v988
        %1037 = vmatprep.subr.mxu0 0.0
        %1038 = vmatpush1.msra.mxu0 0.0
        %1039 = vmatprep.subr.mxu0 0.0
        %1040 = vmatpush1.msra.mxu0 0.0
        %1041 = vmatprep.subr.mxu0 0.0
        %1042 = vmatpush1.msra.mxu0 0.0
        %1043 = vmatprep.subr.mxu0 0.0
        %1044 = vmatpush1.msra.mxu0 0.0
        %1045 = vmatprep.subr.mxu0 0.0
        %1046 = vmatpush1.msra.mxu0 0.0
        %1047 = vmatprep.subr.mxu0 0.0
        %1048 = vmatpush1.msra.mxu0 0.0
        %1049 = vmatprep.subr.mxu0 0.0
        %1050 = vmatpush1.msra.mxu0 0.0
        %1051 = vmatprep.subr.mxu0 0.0
        %1052 = vmatpush1.msra.mxu0 0.0
        %1053 = vmatprep.subr.mxu0 0.0
        %1054 = vmatpush1.msra.mxu0 0.0
        %1055 = vmatprep.subr.mxu0 0.0
        %1056 = vmatpush1.msra.mxu0 0.0
        %1057 = vmatprep.subr.mxu0 0.0
        %1058 = vmatpush1.msra.mxu0 0.0
        %1059 = vmatprep.subr.mxu0 0.0
        %1060 = vmatpush1.msra.mxu0 0.0
        %1061 = vmatprep.subr.mxu0 0.0
        %1062 = vmatpush1.msra.mxu0 0.0
        %1063 = vmatprep.subr.mxu0 0.0
        %1064 = vmatpush1.msra.mxu0 0.0
        %1065 = vmatprep.mubr.f32.mxu0 %v996
        %1066 = vmatmul.mubr.f32.gmra.mrb[0].mxu0 %v990
        %v1067 = vpop.f32.mrb[0].mxu0
        %v1068 = vadd.f32 0.0, %v1067
        %v1069 = vpop.f32.mrb[0].mxu0
        %v1070 = vadd.f32 0.0, %v1069
        %1071 = vmatprep.mubr.f32.mxu0 %v999
        %1072 = vmatmul.mubr.f32.gmra.mrb[0].mxu0 %v992
        %v1073 = vpop.f32.mrb[0].mxu0
        %v1074 = vadd.f32 0.0, %v1073
        %v1075 = vpop.f32.mrb[0].mxu0
        %v1076 = vadd.f32 0.0, %v1075
        %1077 = vdwg.mxu0
        %vm1078 = vcmp.ge.f32.partialorder %v1068, 0.0
        %vm1079 = vcmp.ge.f32.partialorder %v1070, 0.0
        %vm1080 = vcmp.ge.f32.partialorder %v1074, 0.0
        %vm1081 = vcmp.ge.f32.partialorder %v1076, 0.0
        %v1082 = vmul.f32 %v1068, 0.01
        %v1083 = vmul.f32 %v1070, 0.01
        %v1084 = vmul.f32 %v1074, 0.01
        %v1085 = vmul.f32 %v1076, 0.01
        %v1086 = vsel %vm1078, %v1068, %v1082
        %v1087 = vsel %vm1079, %v1070, %v1083
        %v1088 = vsel %vm1080, %v1074, %v1084
        %v1089 = vsel %vm1081, %v1076, %v1085
        %v1090 = vld [vmem:[%s3] sm:$0xff]
        %v1091 = vld [vmem:[%s3 + $0x8] sm:$0xff]
        %v1092 = vld [vmem:[%s3 + $0x10] sm:$0xff]
        %v1093 = vld [vmem:[%s3 + $0x18] sm:$0xff]
        %v1094 = vld [vmem:[#allocation2 + $0x20] sm:$0xff]
        %v1095 = vld [vmem:[#allocation2 + $0x28] sm:$0xff]
        %v1096 = vld [vmem:[#allocation2 + $0x30] sm:$0xff]
        %v1097 = vld [vmem:[#allocation2 + $0x38] sm:$0xff]
        %v1098 = vadd.f32 %v1086, %v1094
        %v1099 = vadd.f32 %v1087, %v1095
        %v1100 = vadd.f32 %v1088, %v1096
        %v1101 = vadd.f32 %v1089, %v1097
        %1102 = vrot.lane.b32.xlu0 %v1098, 17
        %v1103 = vpop.permute.xlu0 %1102
        %1104 = vrot.lane.b32.xlu0 %v1100, 17
        %v1105 = vpop.permute.xlu0 %1104
        %1106 = vrot.lane.b32.xlu0 %v1099, 17
        %v1107 = vpop.permute.xlu0 %1106
        %1108 = vrot.lane.b32.xlu0 %v1101, 17
        %v1109 = vpop.permute.xlu0 %1108
        %v1110 = vsel %vm862, %v1103, %v1107
        %v1111 = vsel %vm862, %v1105, %v1109
        %v1112 = vsel %vm862, %v1107, %v1103
        %v1113 = vsel %vm862, %v1109, %v1105
        %v1114 = vmul.f32 %v1112, %v750
        %v1115 = vmul.f32 %v1110, %v754
        %v1116 = vmul.f32 %v1113, %v750
        %v1117 = vmul.f32 %v1111, %v754
        %1118 = vrot.lane.b32.xlu0 %v1098, 16
        %v1119 = vpop.permute.xlu0 %1118
        %1120 = vrot.lane.b32.xlu0 %v1100, 16
        %v1121 = vpop.permute.xlu0 %1120
        %1122 = vrot.lane.b32.xlu0 %v1099, 16
        %v1123 = vpop.permute.xlu0 %1122
        %1124 = vrot.lane.b32.xlu0 %v1101, 16
        %v1125 = vpop.permute.xlu0 %1124
        %v1126 = vsel %vm879, %v1119, %v1123
        %v1127 = vsel %vm879, %v1121, %v1125
        %v1128 = vsel %vm879, %v1123, %v1119
        %v1129 = vsel %vm879, %v1125, %v1121
        %v1130 = vmul.f32 %v1128, %v763
        %v1131 = vmul.f32 %v1126, %v767
        %v1132 = vmul.f32 %v1129, %v763
        %v1133 = vmul.f32 %v1127, %v767
        %1134 = vrot.lane.b32.xlu0 %v1098, 15
        %v1135 = vpop.permute.xlu0 %1134
        %1136 = vrot.lane.b32.xlu0 %v1100, 15
        %v1137 = vpop.permute.xlu0 %1136
        %1138 = vrot.lane.b32.xlu0 %v1099, 15
        %v1139 = vpop.permute.xlu0 %1138
        %1140 = vrot.lane.b32.xlu0 %v1101, 15
        %v1141 = vpop.permute.xlu0 %1140
        %v1142 = vsel %vm896, %v1135, %v1139
        %v1143 = vsel %vm896, %v1137, %v1141
        %v1144 = vsel %vm896, %v1139, %v1135
        %v1145 = vsel %vm896, %v1141, %v1137
        %v1146 = vmul.f32 %v1144, %v776
        %v1147 = vmul.f32 %v1142, %v780
        %v1148 = vmul.f32 %v1145, %v776
        %v1149 = vmul.f32 %v1143, %v780
        %1150 = vrot.lane.b32.xlu0 %v1098, 1
        %v1151 = vpop.permute.xlu0 %1150
        %1152 = vrot.lane.b32.xlu0 %v1100, 1
        %v1153 = vpop.permute.xlu0 %1152
        %1154 = vrot.lane.b32.xlu0 %v1099, 1
        %v1155 = vpop.permute.xlu0 %1154
        %1156 = vrot.lane.b32.xlu0 %v1101, 1
        %v1157 = vpop.permute.xlu0 %1156
        %v1158 = vsel %vm913, %v1151, %v1155
        %v1159 = vsel %vm913, %v1153, %v1157
        %v1160 = vsel %vm913, %v1155, %v1151
        %v1161 = vsel %vm913, %v1157, %v1153
        %v1162 = vmul.f32 %v1160, %v789
        %v1163 = vmul.f32 %v1158, %v793
        %v1164 = vmul.f32 %v1161, %v789
        %v1165 = vmul.f32 %v1159, %v793
        %1166 = vrot.lane.b32.xlu0 %v1098, 127
        %v1167 = vpop.permute.xlu0 %1166
        %1168 = vrot.lane.b32.xlu0 %v1100, 127
        %v1169 = vpop.permute.xlu0 %1168
        %1170 = vrot.lane.b32.xlu0 %v1099, 127
        %v1171 = vpop.permute.xlu0 %1170
        %1172 = vrot.lane.b32.xlu0 %v1101, 127
        %v1173 = vpop.permute.xlu0 %1172
        %v1174 = vsel %vm930, %v1167, %v1171
        %v1175 = vsel %vm930, %v1169, %v1173
        %v1176 = vsel %vm930, %v1171, %v1167
        %v1177 = vsel %vm930, %v1173, %v1169
        %v1178 = vmul.f32 %v1174, %v802
        %v1179 = vmul.f32 %v1176, %v806
        %v1180 = vmul.f32 %v1175, %v802
        %v1181 = vmul.f32 %v1177, %v806
        %1182 = vrot.lane.b32.xlu0 %v1098, 113
        %v1183 = vpop.permute.xlu0 %1182
        %1184 = vrot.lane.b32.xlu0 %v1100, 113
        %v1185 = vpop.permute.xlu0 %1184
        %1186 = vrot.lane.b32.xlu0 %v1099, 113
        %v1187 = vpop.permute.xlu0 %1186
        %1188 = vrot.lane.b32.xlu0 %v1101, 113
        %v1189 = vpop.permute.xlu0 %1188
        %v1190 = vsel %vm947, %v1183, %v1187
        %v1191 = vsel %vm947, %v1185, %v1189
        %v1192 = vsel %vm947, %v1187, %v1183
        %v1193 = vsel %vm947, %v1189, %v1185
        %v1194 = vmul.f32 %v1190, %v815
        %v1195 = vmul.f32 %v1192, %v819
        %v1196 = vmul.f32 %v1191, %v815
        %v1197 = vmul.f32 %v1193, %v819
        %1198 = vrot.lane.b32.xlu0 %v1098, 112
        %v1199 = vpop.permute.xlu0 %1198
        %1200 = vrot.lane.b32.xlu0 %v1100, 112
        %v1201 = vpop.permute.xlu0 %1200
        %1202 = vrot.lane.b32.xlu0 %v1099, 112
        %v1203 = vpop.permute.xlu0 %1202
        %1204 = vrot.lane.b32.xlu0 %v1101, 112
        %v1205 = vpop.permute.xlu0 %1204
        %v1206 = vsel %vm964, %v1199, %v1203
        %v1207 = vsel %vm964, %v1201, %v1205
        %v1208 = vsel %vm964, %v1203, %v1199
        %v1209 = vsel %vm964, %v1205, %v1201
        %v1210 = vmul.f32 %v1206, %v828
        %v1211 = vmul.f32 %v1208, %v832
        %v1212 = vmul.f32 %v1207, %v828
        %v1213 = vmul.f32 %v1209, %v832
        %1214 = vrot.lane.b32.xlu0 %v1098, 111
        %v1215 = vpop.permute.xlu0 %1214
        %1216 = vrot.lane.b32.xlu0 %v1100, 111
        %v1217 = vpop.permute.xlu0 %1216
        %1218 = vrot.lane.b32.xlu0 %v1099, 111
        %v1219 = vpop.permute.xlu0 %1218
        %1220 = vrot.lane.b32.xlu0 %v1101, 111
        %v1221 = vpop.permute.xlu0 %1220
        %v1222 = vsel %vm981, %v1215, %v1219
        %v1223 = vsel %vm981, %v1217, %v1221
        %v1224 = vsel %vm981, %v1219, %v1215
        %v1225 = vsel %vm981, %v1221, %v1217
        %v1226 = vmul.f32 %v1222, %v841
        %v1227 = vmul.f32 %v1224, %v845
        %v1228 = vmul.f32 %v1223, %v841
        %v1229 = vmul.f32 %v1225, %v845
        %s1230 = scalar_lea.vmem %s2, 32
        %v1231 = vld [vmem:[%s1230] sm:$0xff]
        %v1232 = vld [vmem:[%s1230 + $0x8] sm:$0xff]
        %v1233 = vld [vmem:[%s1230 + $0x10] sm:$0xff]
        %v1234 = vld [vmem:[%s1230 + $0x18] sm:$0xff]
        %v1236 = vsel %vm994, %v1232, 0
        %v1239 = vsel %vm994, %v1234, 0
        %1241 = vmatprep.subr.mxu0 %v1115
        %1242 = vmatpush1.msra.mxu0 %v1114
        %1243 = vmatprep.subr.mxu0 %v1117
        %1244 = vmatpush1.msra.mxu0 %v1116
        %1245 = vmatprep.subr.mxu0 %v1131
        %1246 = vmatpush1.msra.mxu0 %v1130
        %1247 = vmatprep.subr.mxu0 %v1133
        %1248 = vmatpush1.msra.mxu0 %v1132
        %1249 = vmatprep.subr.mxu0 %v1147
        %1250 = vmatpush1.msra.mxu0 %v1146
        %1251 = vmatprep.subr.mxu0 %v1149
        %1252 = vmatpush1.msra.mxu0 %v1148
        %1253 = vmatprep.subr.mxu0 %v1163
        %1254 = vmatpush1.msra.mxu0 %v1162
        %1255 = vmatprep.subr.mxu0 %v1165
        %1256 = vmatpush1.msra.mxu0 %v1164
        %1257 = vmatprep.subr.mxu0 %v1099
        %1258 = vmatpush1.msra.mxu0 %v1098
        %1259 = vmatprep.subr.mxu0 %v1101
        %1260 = vmatpush1.msra.mxu0 %v1100
        %1261 = vmatprep.subr.mxu0 %v1179
        %1262 = vmatpush1.msra.mxu0 %v1178
        %1263 = vmatprep.subr.mxu0 %v1181
        %1264 = vmatpush1.msra.mxu0 %v1180
        %1265 = vmatprep.subr.mxu0 %v1195
        %1266 = vmatpush1.msra.mxu0 %v1194
        %1267 = vmatprep.subr.mxu0 %v1197
        %1268 = vmatpush1.msra.mxu0 %v1196
        %1269 = vmatprep.subr.mxu0 %v1211
        %1270 = vmatpush1.msra.mxu0 %v1210
        %1271 = vmatprep.subr.mxu0 %v1213
        %1272 = vmatpush1.msra.mxu0 %v1212
        %1273 = vmatprep.subr.mxu0 %v1227
        %1274 = vmatpush1.msra.mxu0 %v1226
        %1275 = vmatprep.subr.mxu0 %v1229
        %1276 = vmatpush1.msra.mxu0 %v1228
        %1277 = vmatprep.subr.mxu0 0.0
        %1278 = vmatpush1.msra.mxu0 0.0
        %1279 = vmatprep.subr.mxu0 0.0
        %1280 = vmatpush1.msra.mxu0 0.0
        %1281 = vmatprep.subr.mxu0 0.0
        %1282 = vmatpush1.msra.mxu0 0.0
        %1283 = vmatprep.subr.mxu0 0.0
        %1284 = vmatpush1.msra.mxu0 0.0
        %1285 = vmatprep.subr.mxu0 0.0
        %1286 = vmatpush1.msra.mxu0 0.0
        %1287 = vmatprep.subr.mxu0 0.0
        %1288 = vmatpush1.msra.mxu0 0.0
        %1289 = vmatprep.subr.mxu0 0.0
        %1290 = vmatpush1.msra.mxu0 0.0
        %1291 = vmatprep.subr.mxu0 0.0
        %1292 = vmatpush1.msra.mxu0 0.0
        %1293 = vmatprep.subr.mxu0 0.0
        %1294 = vmatpush1.msra.mxu0 0.0
        %1295 = vmatprep.subr.mxu0 0.0
        %1296 = vmatpush1.msra.mxu0 0.0
        %1297 = vmatprep.subr.mxu0 0.0
        %1298 = vmatpush1.msra.mxu0 0.0
        %1299 = vmatprep.subr.mxu0 0.0
        %1300 = vmatpush1.msra.mxu0 0.0
        %1301 = vmatprep.subr.mxu0 0.0
        %1302 = vmatpush1.msra.mxu0 0.0
        %1303 = vmatprep.subr.mxu0 0.0
        %1304 = vmatpush1.msra.mxu0 0.0
        %1305 = vmatprep.mubr.f32.mxu0 %v1236
        %1306 = vmatmul.mubr.f32.gmra.mrb[0].mxu0 %v1231
        %v1307 = vpop.f32.mrb[0].mxu0
        %v1308 = vadd.f32 0.0, %v1307
        %v1309 = vpop.f32.mrb[0].mxu0
        %v1310 = vadd.f32 0.0, %v1309
        %1311 = vmatprep.mubr.f32.mxu0 %v1239
        %1312 = vmatmul.mubr.f32.gmra.mrb[0].mxu0 %v1233
        %v1313 = vpop.f32.mrb[0].mxu0
        %v1314 = vadd.f32 0.0, %v1313
        %v1315 = vpop.f32.mrb[0].mxu0
        %v1316 = vadd.f32 0.0, %v1315
        %1317 = vdwg.mxu0
        %vm1318 = vcmp.ge.f32.partialorder %v1308, 0.0
        %vm1319 = vcmp.ge.f32.partialorder %v1310, 0.0
        %vm1320 = vcmp.ge.f32.partialorder %v1314, 0.0
        %vm1321 = vcmp.ge.f32.partialorder %v1316, 0.0
        %v1322 = vmul.f32 %v1308, 0.01
        %v1323 = vmul.f32 %v1310, 0.01
        %v1324 = vmul.f32 %v1314, 0.01
        %v1325 = vmul.f32 %v1316, 0.01
        %v1326 = vsel %vm1318, %v1308, %v1322
        %v1327 = vsel %vm1319, %v1310, %v1323
        %v1328 = vsel %vm1320, %v1314, %v1324
        %v1329 = vsel %vm1321, %v1316, %v1325
        %s1330 = scalar_lea.vmem %s3, 32
        %v1331 = vld [vmem:[%s1330] sm:$0xff]
        %v1332 = vld [vmem:[%s1330 + $0x8] sm:$0xff]
        %v1333 = vld [vmem:[%s1330 + $0x10] sm:$0xff]
        %v1334 = vld [vmem:[%s1330 + $0x18] sm:$0xff]
        %v1336 = vsel %vm994, %v1331, 0
        %v1339 = vsel %vm994, %v1332, 0
        %v1342 = vsel %vm994, %v1333, 0
        %v1345 = vsel %vm994, %v1334, 0
        %1347 = vmatprep.subr.mxu0 %v1327
        %1348 = vmatpush1.msra.mxu0 %v1326
        %1349 = vmatprep.subr.mxu0 %v1329
        %1350 = vmatpush1.msra.mxu0 %v1328
        %1351 = vmatprep.subr.mxu0 0.0
        %1352 = vmatpush1.msra.mxu0 0.0
        %1353 = vmatprep.subr.mxu0 0.0
        %1354 = vmatpush1.msra.mxu0 0.0
        %1355 = vmatprep.subr.mxu0 0.0
        %1356 = vmatpush1.msra.mxu0 0.0
        %1357 = vmatprep.subr.mxu0 0.0
        %1358 = vmatpush1.msra.mxu0 0.0
        %1359 = vmatprep.subr.mxu0 0.0
        %1360 = vmatpush1.msra.mxu0 0.0
        %1361 = vmatprep.subr.mxu0 0.0
        %1362 = vmatpush1.msra.mxu0 0.0
        %1363 = vmatprep.subr.mxu0 0.0
        %1364 = vmatpush1.msra.mxu0 0.0
        %1365 = vmatprep.subr.mxu0 0.0
        %1366 = vmatpush1.msra.mxu0 0.0
        %1367 = vmatprep.subr.mxu0 0.0
        %1368 = vmatpush1.msra.mxu0 0.0
        %1369 = vmatprep.subr.mxu0 0.0
        %1370 = vmatpush1.msra.mxu0 0.0
        %1371 = vmatprep.subr.mxu0 0.0
        %1372 = vmatpush1.msra.mxu0 0.0
        %1373 = vmatprep.subr.mxu0 0.0
        %1374 = vmatpush1.msra.mxu0 0.0
        %1375 = vmatprep.subr.mxu0 0.0
        %1376 = vmatpush1.msra.mxu0 0.0
        %1377 = vmatprep.subr.mxu0 0.0
        %1378 = vmatpush1.msra.mxu0 0.0
        %1379 = vmatprep.subr.mxu0 0.0
        %1380 = vmatpush1.msra.mxu0 0.0
        %1381 = vmatprep.subr.mxu0 0.0
        %1382 = vmatpush1.msra.mxu0 0.0
        %1383 = vmatprep.subr.mxu0 0.0
        %1384 = vmatpush1.msra.mxu0 0.0
        %1385 = vmatprep.subr.mxu0 0.0
        %1386 = vmatpush1.msra.mxu0 0.0
        %1387 = vmatprep.subr.mxu0 0.0
        %1388 = vmatpush1.msra.mxu0 0.0
        %1389 = vmatprep.subr.mxu0 0.0
        %1390 = vmatpush1.msra.mxu0 0.0
        %1391 = vmatprep.subr.mxu0 0.0
        %1392 = vmatpush1.msra.mxu0 0.0
        %1393 = vmatprep.subr.mxu0 0.0
        %1394 = vmatpush1.msra.mxu0 0.0
        %1395 = vmatprep.subr.mxu0 0.0
        %1396 = vmatpush1.msra.mxu0 0.0
        %1397 = vmatprep.subr.mxu0 0.0
        %1398 = vmatpush1.msra.mxu0 0.0
        %1399 = vmatprep.subr.mxu0 0.0
        %1400 = vmatpush1.msra.mxu0 0.0
        %1401 = vmatprep.subr.mxu0 0.0
        %1402 = vmatpush1.msra.mxu0 0.0
        %1403 = vmatprep.subr.mxu0 0.0
        %1404 = vmatpush1.msra.mxu0 0.0
        %1405 = vmatprep.subr.mxu0 0.0
        %1406 = vmatpush1.msra.mxu0 0.0
        %1407 = vmatprep.subr.mxu0 0.0
        %1408 = vmatpush1.msra.mxu0 0.0
        %1409 = vmatprep.subr.mxu0 0.0
        %1410 = vmatpush1.msra.mxu0 0.0
        %1411 = vmatprep.mubr.f32.mxu0 0.0
        %1412 = vmatmul.mubr.f32.gmra.mrb[0].mxu0 %v1336
        %v1413 = vpop.f32.mrb[0].mxu0
        %v1414 = vadd.f32 0.0, %v1413
        %v1415 = vpop.f32.mrb[0].mxu0
        %v1416 = vadd.f32 0.0, %v1415
        %1417 = vmatprep.mubr.f32.mxu0 0.0
        %1418 = vmatmul.mubr.f32.gmra.mrb[0].mxu0 %v1339
        %v1419 = vpop.f32.mrb[0].mxu0
        %v1420 = vadd.f32 0.0, %v1419
        %v1421 = vpop.f32.mrb[0].mxu0
        %v1422 = vadd.f32 0.0, %v1421
        %1423 = vmatprep.mubr.f32.mxu0 0.0
        %1424 = vmatmul.mubr.f32.gmra.mrb[0].mxu0 %v1342
        %v1425 = vpop.f32.mrb[0].mxu0
        %v1426 = vadd.f32 0.0, %v1425
        %v1427 = vpop.f32.mrb[0].mxu0
        %v1428 = vadd.f32 0.0, %v1427
        %1429 = vmatprep.mubr.f32.mxu0 0.0
        %1430 = vmatmul.mubr.f32.gmra.mrb[0].mxu0 %v1345
        %v1431 = vpop.f32.mrb[0].mxu0
        %v1432 = vadd.f32 0.0, %v1431
        %v1433 = vpop.f32.mrb[0].mxu0
        %v1434 = vadd.f32 0.0, %v1433
        %1435 = vdwg.mxu0
        %v1437 = vsel %vm994, %v1090, 0
        %v1440 = vsel %vm994, %v1091, 0
        %v1443 = vsel %vm994, %v1092, 0
        %v1446 = vsel %vm994, %v1093, 0
        %1448 = vmatprep.subr.mxu0 %v1087
        %1449 = vmatpush1.msra.mxu0 %v1086
        %1450 = vmatprep.subr.mxu0 %v1089
        %1451 = vmatpush1.msra.mxu0 %v1088
        %1452 = vmatprep.subr.mxu0 0.0
        %1453 = vmatpush1.msra.mxu0 0.0
        %1454 = vmatprep.subr.mxu0 0.0
        %1455 = vmatpush1.msra.mxu0 0.0
        %1456 = vmatprep.subr.mxu0 0.0
        %1457 = vmatpush1.msra.mxu0 0.0
        %1458 = vmatprep.subr.mxu0 0.0
        %1459 = vmatpush1.msra.mxu0 0.0
        %1460 = vmatprep.subr.mxu0 0.0
        %1461 = vmatpush1.msra.mxu0 0.0
        %1462 = vmatprep.subr.mxu0 0.0
        %1463 = vmatpush1.msra.mxu0 0.0
        %1464 = vmatprep.subr.mxu0 0.0
        %1465 = vmatpush1.msra.mxu0 0.0
        %1466 = vmatprep.subr.mxu0 0.0
        %1467 = vmatpush1.msra.mxu0 0.0
        %1468 = vmatprep.subr.mxu0 0.0
        %1469 = vmatpush1.msra.mxu0 0.0
        %1470 = vmatprep.subr.mxu0 0.0
        %1471 = vmatpush1.msra.mxu0 0.0
        %1472 = vmatprep.subr.mxu0 0.0
        %1473 = vmatpush1.msra.mxu0 0.0
        %1474 = vmatprep.subr.mxu0 0.0
        %1475 = vmatpush1.msra.mxu0 0.0
        %1476 = vmatprep.subr.mxu0 0.0
        %1477 = vmatpush1.msra.mxu0 0.0
        %1478 = vmatprep.subr.mxu0 0.0
        %1479 = vmatpush1.msra.mxu0 0.0
        %1480 = vmatprep.subr.mxu0 0.0
        %1481 = vmatpush1.msra.mxu0 0.0
        %1482 = vmatprep.subr.mxu0 0.0
        %1483 = vmatpush1.msra.mxu0 0.0
        %1484 = vmatprep.subr.mxu0 0.0
        %1485 = vmatpush1.msra.mxu0 0.0
        %1486 = vmatprep.subr.mxu0 0.0
        %1487 = vmatpush1.msra.mxu0 0.0
        %1488 = vmatprep.subr.mxu0 0.0
        %1489 = vmatpush1.msra.mxu0 0.0
        %1490 = vmatprep.subr.mxu0 0.0
        %1491 = vmatpush1.msra.mxu0 0.0
        %1492 = vmatprep.subr.mxu0 0.0
        %1493 = vmatpush1.msra.mxu0 0.0
        %1494 = vmatprep.subr.mxu0 0.0
        %1495 = vmatpush1.msra.mxu0 0.0
        %1496 = vmatprep.subr.mxu0 0.0
        %1497 = vmatpush1.msra.mxu0 0.0
        %1498 = vmatprep.subr.mxu0 0.0
        %1499 = vmatpush1.msra.mxu0 0.0
        %1500 = vmatprep.subr.mxu0 0.0
        %1501 = vmatpush1.msra.mxu0 0.0
        %1502 = vmatprep.subr.mxu0 0.0
        %1503 = vmatpush1.msra.mxu0 0.0
        %1504 = vmatprep.subr.mxu0 0.0
        %1505 = vmatpush1.msra.mxu0 0.0
        %1506 = vmatprep.subr.mxu0 0.0
        %1507 = vmatpush1.msra.mxu0 0.0
        %1508 = vmatprep.subr.mxu0 0.0
        %1509 = vmatpush1.msra.mxu0 0.0
        %1510 = vmatprep.subr.mxu0 0.0
        %1511 = vmatpush1.msra.mxu0 0.0
        %1512 = vmatprep.mubr.f32.mxu0 0.0
        %1513 = vmatmul.mubr.f32.gmra.mrb[0].mxu0 %v1437
        %v1514 = vpop.f32.mrb[0].mxu0
        %v1515 = vadd.f32 %v1414, %v1514
        %v1516 = vpop.f32.mrb[0].mxu0
        %v1517 = vadd.f32 %v1416, %v1516
        %1518 = vmatprep.mubr.f32.mxu0 0.0
        %1519 = vmatmul.mubr.f32.gmra.mrb[0].mxu0 %v1440
        %v1520 = vpop.f32.mrb[0].mxu0
        %v1521 = vadd.f32 %v1420, %v1520
        %v1522 = vpop.f32.mrb[0].mxu0
        %v1523 = vadd.f32 %v1422, %v1522
        %1524 = vmatprep.mubr.f32.mxu0 0.0
        %1525 = vmatmul.mubr.f32.gmra.mrb[0].mxu0 %v1443
        %v1526 = vpop.f32.mrb[0].mxu0
        %v1527 = vadd.f32 %v1426, %v1526
        %v1528 = vpop.f32.mrb[0].mxu0
        %v1529 = vadd.f32 %v1428, %v1528
        %1530 = vmatprep.mubr.f32.mxu0 0.0
        %1531 = vmatmul.mubr.f32.gmra.mrb[0].mxu0 %v1446
        %v1532 = vpop.f32.mrb[0].mxu0
        %v1533 = vadd.f32 %v1432, %v1532
        %v1534 = vpop.f32.mrb[0].mxu0
        %v1535 = vadd.f32 %v1434, %v1534
        %1536 = vdwg.mxu0
        %v1537 = vld [vmem:[#allocation2 + $0x40] sm:$0xff]
        %v1538 = vld [vmem:[#allocation2 + $0x48] sm:$0xff]
        %v1539 = vld [vmem:[#allocation2 + $0x50] sm:$0xff]
        %v1540 = vld [vmem:[#allocation2 + $0x58] sm:$0xff]
        %v1541 = vadd.f32 %v1326, %v1537
        %v1542 = vadd.f32 %v1327, %v1538
        %v1543 = vadd.f32 %v1328, %v1539
        %v1544 = vadd.f32 %v1329, %v1540
        %1545 = vrot.lane.b32.xlu0 %v1541, 17
        %v1546 = vpop.permute.xlu0 %1545
        %1547 = vrot.lane.b32.xlu0 %v1543, 17
        %v1548 = vpop.permute.xlu0 %1547
        %1549 = vrot.lane.b32.xlu0 %v1542, 17
        %v1550 = vpop.permute.xlu0 %1549
        %1551 = vrot.lane.b32.xlu0 %v1544, 17
        %v1552 = vpop.permute.xlu0 %1551
        %v1553 = vsel %vm862, %v1546, %v1550
        %v1554 = vsel %vm862, %v1548, %v1552
        %v1555 = vsel %vm862, %v1550, %v1546
        %v1556 = vsel %vm862, %v1552, %v1548
        %v1557 = vmul.f32 %v1555, %v750
        %v1558 = vmul.f32 %v1553, %v754
        %v1559 = vmul.f32 %v1556, %v750
        %v1560 = vmul.f32 %v1554, %v754
        %1561 = vrot.lane.b32.xlu0 %v1541, 16
        %v1562 = vpop.permute.xlu0 %1561
        %1563 = vrot.lane.b32.xlu0 %v1543, 16
        %v1564 = vpop.permute.xlu0 %1563
        %1565 = vrot.lane.b32.xlu0 %v1542, 16
        %v1566 = vpop.permute.xlu0 %1565
        %1567 = vrot.lane.b32.xlu0 %v1544, 16
        %v1568 = vpop.permute.xlu0 %1567
        %v1569 = vsel %vm879, %v1562, %v1566
        %v1570 = vsel %vm879, %v1564, %v1568
        %v1571 = vsel %vm879, %v1566, %v1562
        %v1572 = vsel %vm879, %v1568, %v1564
        %v1573 = vmul.f32 %v1571, %v763
        %v1574 = vmul.f32 %v1569, %v767
        %v1575 = vmul.f32 %v1572, %v763
        %v1576 = vmul.f32 %v1570, %v767
        %1577 = vrot.lane.b32.xlu0 %v1541, 15
        %v1578 = vpop.permute.xlu0 %1577
        %1579 = vrot.lane.b32.xlu0 %v1543, 15
        %v1580 = vpop.permute.xlu0 %1579
        %1581 = vrot.lane.b32.xlu0 %v1542, 15
        %v1582 = vpop.permute.xlu0 %1581
        %1583 = vrot.lane.b32.xlu0 %v1544, 15
        %v1584 = vpop.permute.xlu0 %1583
        %v1585 = vsel %vm896, %v1578, %v1582
        %v1586 = vsel %vm896, %v1580, %v1584
        %v1587 = vsel %vm896, %v1582, %v1578
        %v1588 = vsel %vm896, %v1584, %v1580
        %v1589 = vmul.f32 %v1587, %v776
        %v1590 = vmul.f32 %v1585, %v780
        %v1591 = vmul.f32 %v1588, %v776
        %v1592 = vmul.f32 %v1586, %v780
        %1593 = vrot.lane.b32.xlu0 %v1541, 1
        %v1594 = vpop.permute.xlu0 %1593
        %1595 = vrot.lane.b32.xlu0 %v1543, 1
        %v1596 = vpop.permute.xlu0 %1595
        %1597 = vrot.lane.b32.xlu0 %v1542, 1
        %v1598 = vpop.permute.xlu0 %1597
        %1599 = vrot.lane.b32.xlu0 %v1544, 1
        %v1600 = vpop.permute.xlu0 %1599
        %v1601 = vsel %vm913, %v1594, %v1598
        %v1602 = vsel %vm913, %v1596, %v1600
        %v1603 = vsel %vm913, %v1598, %v1594
        %v1604 = vsel %vm913, %v1600, %v1596
        %v1605 = vmul.f32 %v1603, %v789
        %v1606 = vmul.f32 %v1601, %v793
        %v1607 = vmul.f32 %v1604, %v789
        %v1608 = vmul.f32 %v1602, %v793
        %1609 = vrot.lane.b32.xlu0 %v1541, 127
        %v1610 = vpop.permute.xlu0 %1609
        %1611 = vrot.lane.b32.xlu0 %v1543, 127
        %v1612 = vpop.permute.xlu0 %1611
        %1613 = vrot.lane.b32.xlu0 %v1542, 127
        %v1614 = vpop.permute.xlu0 %1613
        %1615 = vrot.lane.b32.xlu0 %v1544, 127
        %v1616 = vpop.permute.xlu0 %1615
        %v1617 = vsel %vm930, %v1610, %v1614
        %v1618 = vsel %vm930, %v1612, %v1616
        %v1619 = vsel %vm930, %v1614, %v1610
        %v1620 = vsel %vm930, %v1616, %v1612
        %v1621 = vmul.f32 %v1617, %v802
        %v1622 = vmul.f32 %v1619, %v806
        %v1623 = vmul.f32 %v1618, %v802
        %v1624 = vmul.f32 %v1620, %v806
        %1625 = vrot.lane.b32.xlu0 %v1541, 113
        %v1626 = vpop.permute.xlu0 %1625
        %1627 = vrot.lane.b32.xlu0 %v1543, 113
        %v1628 = vpop.permute.xlu0 %1627
        %1629 = vrot.lane.b32.xlu0 %v1542, 113
        %v1630 = vpop.permute.xlu0 %1629
        %1631 = vrot.lane.b32.xlu0 %v1544, 113
        %v1632 = vpop.permute.xlu0 %1631
        %v1633 = vsel %vm947, %v1626, %v1630
        %v1634 = vsel %vm947, %v1628, %v1632
        %v1635 = vsel %vm947, %v1630, %v1626
        %v1636 = vsel %vm947, %v1632, %v1628
        %v1637 = vmul.f32 %v1633, %v815
        %v1638 = vmul.f32 %v1635, %v819
        %v1639 = vmul.f32 %v1634, %v815
        %v1640 = vmul.f32 %v1636, %v819
        %1641 = vrot.lane.b32.xlu0 %v1541, 112
        %v1642 = vpop.permute.xlu0 %1641
        %1643 = vrot.lane.b32.xlu0 %v1543, 112
        %v1644 = vpop.permute.xlu0 %1643
        %1645 = vrot.lane.b32.xlu0 %v1542, 112
        %v1646 = vpop.permute.xlu0 %1645
        %1647 = vrot.lane.b32.xlu0 %v1544, 112
        %v1648 = vpop.permute.xlu0 %1647
        %v1649 = vsel %vm964, %v1642, %v1646
        %v1650 = vsel %vm964, %v1644, %v1648
        %v1651 = vsel %vm964, %v1646, %v1642
        %v1652 = vsel %vm964, %v1648, %v1644
        %v1653 = vmul.f32 %v1649, %v828
        %v1654 = vmul.f32 %v1651, %v832
        %v1655 = vmul.f32 %v1650, %v828
        %v1656 = vmul.f32 %v1652, %v832
        %1657 = vrot.lane.b32.xlu0 %v1541, 111
        %v1658 = vpop.permute.xlu0 %1657
        %1659 = vrot.lane.b32.xlu0 %v1543, 111
        %v1660 = vpop.permute.xlu0 %1659
        %1661 = vrot.lane.b32.xlu0 %v1542, 111
        %v1662 = vpop.permute.xlu0 %1661
        %1663 = vrot.lane.b32.xlu0 %v1544, 111
        %v1664 = vpop.permute.xlu0 %1663
        %v1665 = vsel %vm981, %v1658, %v1662
        %v1666 = vsel %vm981, %v1660, %v1664
        %v1667 = vsel %vm981, %v1662, %v1658
        %v1668 = vsel %vm981, %v1664, %v1660
        %v1669 = vmul.f32 %v1665, %v841
        %v1670 = vmul.f32 %v1667, %v845
        %v1671 = vmul.f32 %v1666, %v841
        %v1672 = vmul.f32 %v1668, %v845
        %s1673 = scalar_lea.vmem %s2, 64
        %v1674 = vld [vmem:[%s1673] sm:$0xff]
        %v1675 = vld [vmem:[%s1673 + $0x8] sm:$0xff]
        %v1676 = vld [vmem:[%s1673 + $0x10] sm:$0xff]
        %v1677 = vld [vmem:[%s1673 + $0x18] sm:$0xff]
        %v1679 = vsel %vm994, %v1675, 0
        %v1682 = vsel %vm994, %v1677, 0
        %1684 = vmatprep.subr.mxu0 %v1558
        %1685 = vmatpush1.msra.mxu0 %v1557
        %1686 = vmatprep.subr.mxu0 %v1560
        %1687 = vmatpush1.msra.mxu0 %v1559
        %1688 = vmatprep.subr.mxu0 %v1574
        %1689 = vmatpush1.msra.mxu0 %v1573
        %1690 = vmatprep.subr.mxu0 %v1576
        %1691 = vmatpush1.msra.mxu0 %v1575
        %1692 = vmatprep.subr.mxu0 %v1590
        %1693 = vmatpush1.msra.mxu0 %v1589
        %1694 = vmatprep.subr.mxu0 %v1592
        %1695 = vmatpush1.msra.mxu0 %v1591
        %1696 = vmatprep.subr.mxu0 %v1606
        %1697 = vmatpush1.msra.mxu0 %v1605
        %1698 = vmatprep.subr.mxu0 %v1608
        %1699 = vmatpush1.msra.mxu0 %v1607
        %1700 = vmatprep.subr.mxu0 %v1542
        %1701 = vmatpush1.msra.mxu0 %v1541
        %1702 = vmatprep.subr.mxu0 %v1544
        %1703 = vmatpush1.msra.mxu0 %v1543
        %1704 = vmatprep.subr.mxu0 %v1622
        %1705 = vmatpush1.msra.mxu0 %v1621
        %1706 = vmatprep.subr.mxu0 %v1624
        %1707 = vmatpush1.msra.mxu0 %v1623
        %1708 = vmatprep.subr.mxu0 %v1638
        %1709 = vmatpush1.msra.mxu0 %v1637
        %1710 = vmatprep.subr.mxu0 %v1640
        %1711 = vmatpush1.msra.mxu0 %v1639
        %1712 = vmatprep.subr.mxu0 %v1654
        %1713 = vmatpush1.msra.mxu0 %v1653
        %1714 = vmatprep.subr.mxu0 %v1656
        %1715 = vmatpush1.msra.mxu0 %v1655
        %1716 = vmatprep.subr.mxu0 %v1670
        %1717 = vmatpush1.msra.mxu0 %v1669
        %1718 = vmatprep.subr.mxu0 %v1672
        %1719 = vmatpush1.msra.mxu0 %v1671
        %1720 = vmatprep.subr.mxu0 0.0
        %1721 = vmatpush1.msra.mxu0 0.0
        %1722 = vmatprep.subr.mxu0 0.0
        %1723 = vmatpush1.msra.mxu0 0.0
        %1724 = vmatprep.subr.mxu0 0.0
        %1725 = vmatpush1.msra.mxu0 0.0
        %1726 = vmatprep.subr.mxu0 0.0
        %1727 = vmatpush1.msra.mxu0 0.0
        %1728 = vmatprep.subr.mxu0 0.0
        %1729 = vmatpush1.msra.mxu0 0.0
        %1730 = vmatprep.subr.mxu0 0.0
        %1731 = vmatpush1.msra.mxu0 0.0
        %1732 = vmatprep.subr.mxu0 0.0
        %1733 = vmatpush1.msra.mxu0 0.0
        %1734 = vmatprep.subr.mxu0 0.0
        %1735 = vmatpush1.msra.mxu0 0.0
        %1736 = vmatprep.subr.mxu0 0.0
        %1737 = vmatpush1.msra.mxu0 0.0
        %1738 = vmatprep.subr.mxu0 0.0
        %1739 = vmatpush1.msra.mxu0 0.0
        %1740 = vmatprep.subr.mxu0 0.0
        %1741 = vmatpush1.msra.mxu0 0.0
        %1742 = vmatprep.subr.mxu0 0.0
        %1743 = vmatpush1.msra.mxu0 0.0
        %1744 = vmatprep.subr.mxu0 0.0
        %1745 = vmatpush1.msra.mxu0 0.0
        %1746 = vmatprep.subr.mxu0 0.0
        %1747 = vmatpush1.msra.mxu0 0.0
        %1748 = vmatprep.mubr.f32.mxu0 %v1679
        %1749 = vmatmul.mubr.f32.gmra.mrb[0].mxu0 %v1674
        %v1750 = vpop.f32.mrb[0].mxu0
        %v1751 = vadd.f32 0.0, %v1750
        %v1752 = vpop.f32.mrb[0].mxu0
        %v1753 = vadd.f32 0.0, %v1752
        %1754 = vmatprep.mubr.f32.mxu0 %v1682
        %1755 = vmatmul.mubr.f32.gmra.mrb[0].mxu0 %v1676
        %v1756 = vpop.f32.mrb[0].mxu0
        %v1757 = vadd.f32 0.0, %v1756
        %v1758 = vpop.f32.mrb[0].mxu0
        %v1759 = vadd.f32 0.0, %v1758
        %1760 = vdwg.mxu0
        %vm1761 = vcmp.ge.f32.partialorder %v1751, 0.0
        %vm1762 = vcmp.ge.f32.partialorder %v1753, 0.0
        %vm1763 = vcmp.ge.f32.partialorder %v1757, 0.0
        %vm1764 = vcmp.ge.f32.partialorder %v1759, 0.0
        %v1765 = vmul.f32 %v1751, 0.01
        %v1766 = vmul.f32 %v1753, 0.01
        %v1767 = vmul.f32 %v1757, 0.01
        %v1768 = vmul.f32 %v1759, 0.01
        %v1769 = vsel %vm1761, %v1751, %v1765
        %v1770 = vsel %vm1762, %v1753, %v1766
        %v1771 = vsel %vm1763, %v1757, %v1767
        %v1772 = vsel %vm1764, %v1759, %v1768
        %s1773 = scalar_lea.vmem %s3, 64
        %v1774 = vld [vmem:[%s1773] sm:$0xff]
        %v1775 = vld [vmem:[%s1773 + $0x8] sm:$0xff]
        %v1776 = vld [vmem:[%s1773 + $0x10] sm:$0xff]
        %v1777 = vld [vmem:[%s1773 + $0x18] sm:$0xff]
        %v1779 = vsel %vm994, %v1774, 0
        %v1782 = vsel %vm994, %v1775, 0
        %v1785 = vsel %vm994, %v1776, 0
        %v1788 = vsel %vm994, %v1777, 0
        %1790 = vmatprep.subr.mxu0 %v1770
        %1791 = vmatpush1.msra.mxu0 %v1769
        %1792 = vmatprep.subr.mxu0 %v1772
        %1793 = vmatpush1.msra.mxu0 %v1771
        %1794 = vmatprep.subr.mxu0 0.0
        %1795 = vmatpush1.msra.mxu0 0.0
        %1796 = vmatprep.subr.mxu0 0.0
        %1797 = vmatpush1.msra.mxu0 0.0
        %1798 = vmatprep.subr.mxu0 0.0
        %1799 = vmatpush1.msra.mxu0 0.0
        %1800 = vmatprep.subr.mxu0 0.0
        %1801 = vmatpush1.msra.mxu0 0.0
        %1802 = vmatprep.subr.mxu0 0.0
        %1803 = vmatpush1.msra.mxu0 0.0
        %1804 = vmatprep.subr.mxu0 0.0
        %1805 = vmatpush1.msra.mxu0 0.0
        %1806 = vmatprep.subr.mxu0 0.0
        %1807 = vmatpush1.msra.mxu0 0.0
        %1808 = vmatprep.subr.mxu0 0.0
        %1809 = vmatpush1.msra.mxu0 0.0
        %1810 = vmatprep.subr.mxu0 0.0
        %1811 = vmatpush1.msra.mxu0 0.0
        %1812 = vmatprep.subr.mxu0 0.0
        %1813 = vmatpush1.msra.mxu0 0.0
        %1814 = vmatprep.subr.mxu0 0.0
        %1815 = vmatpush1.msra.mxu0 0.0
        %1816 = vmatprep.subr.mxu0 0.0
        %1817 = vmatpush1.msra.mxu0 0.0
        %1818 = vmatprep.subr.mxu0 0.0
        %1819 = vmatpush1.msra.mxu0 0.0
        %1820 = vmatprep.subr.mxu0 0.0
        %1821 = vmatpush1.msra.mxu0 0.0
        %1822 = vmatprep.subr.mxu0 0.0
        %1823 = vmatpush1.msra.mxu0 0.0
        %1824 = vmatprep.subr.mxu0 0.0
        %1825 = vmatpush1.msra.mxu0 0.0
        %1826 = vmatprep.subr.mxu0 0.0
        %1827 = vmatpush1.msra.mxu0 0.0
        %1828 = vmatprep.subr.mxu0 0.0
        %1829 = vmatpush1.msra.mxu0 0.0
        %1830 = vmatprep.subr.mxu0 0.0
        %1831 = vmatpush1.msra.mxu0 0.0
        %1832 = vmatprep.subr.mxu0 0.0
        %1833 = vmatpush1.msra.mxu0 0.0
        %1834 = vmatprep.subr.mxu0 0.0
        %1835 = vmatpush1.msra.mxu0 0.0
        %1836 = vmatprep.subr.mxu0 0.0
        %1837 = vmatpush1.msra.mxu0 0.0
        %1838 = vmatprep.subr.mxu0 0.0
        %1839 = vmatpush1.msra.mxu0 0.0
        %1840 = vmatprep.subr.mxu0 0.0
        %1841 = vmatpush1.msra.mxu0 0.0
        %1842 = vmatprep.subr.mxu0 0.0
        %1843 = vmatpush1.msra.mxu0 0.0
        %1844 = vmatprep.subr.mxu0 0.0
        %1845 = vmatpush1.msra.mxu0 0.0
        %1846 = vmatprep.subr.mxu0 0.0
        %1847 = vmatpush1.msra.mxu0 0.0
        %1848 = vmatprep.subr.mxu0 0.0
        %1849 = vmatpush1.msra.mxu0 0.0
        %1850 = vmatprep.subr.mxu0 0.0
        %1851 = vmatpush1.msra.mxu0 0.0
        %1852 = vmatprep.subr.mxu0 0.0
        %1853 = vmatpush1.msra.mxu0 0.0
        %1854 = vmatprep.mubr.f32.mxu0 0.0
        %1855 = vmatmul.mubr.f32.gmra.mrb[0].mxu0 %v1779
        %v1856 = vpop.f32.mrb[0].mxu0
        %v1857 = vadd.f32 0.0, %v1856
        %v1858 = vpop.f32.mrb[0].mxu0
        %v1859 = vadd.f32 0.0, %v1858
        %1860 = vmatprep.mubr.f32.mxu0 0.0
        %1861 = vmatmul.mubr.f32.gmra.mrb[0].mxu0 %v1782
        %v1862 = vpop.f32.mrb[0].mxu0
        %v1863 = vadd.f32 0.0, %v1862
        %v1864 = vpop.f32.mrb[0].mxu0
        %v1865 = vadd.f32 0.0, %v1864
        %1866 = vmatprep.mubr.f32.mxu0 0.0
        %1867 = vmatmul.mubr.f32.gmra.mrb[0].mxu0 %v1785
        %v1868 = vpop.f32.mrb[0].mxu0
        %v1869 = vadd.f32 0.0, %v1868
        %v1870 = vpop.f32.mrb[0].mxu0
        %v1871 = vadd.f32 0.0, %v1870
        %1872 = vmatprep.mubr.f32.mxu0 0.0
        %1873 = vmatmul.mubr.f32.gmra.mrb[0].mxu0 %v1788
        %v1874 = vpop.f32.mrb[0].mxu0
        %v1875 = vadd.f32 0.0, %v1874
        %v1876 = vpop.f32.mrb[0].mxu0
        %v1877 = vadd.f32 0.0, %v1876
        %1878 = vdwg.mxu0
        %v1879 = vadd.f32 %v1515, %v1857
        %v1880 = vadd.f32 %v1517, %v1859
        %v1881 = vadd.f32 %v1521, %v1863
        %v1882 = vadd.f32 %v1523, %v1865
        %v1883 = vadd.f32 %v1527, %v1869
        %v1884 = vadd.f32 %v1529, %v1871
        %v1885 = vadd.f32 %v1533, %v1875
        %v1886 = vadd.f32 %v1535, %v1877
        %s1887 = scalar_lea.vmem %s3, 96
        %v1888 = vld [vmem:[%s1887] sm:$0xff]
        %v1889 = vld [vmem:[%s1887 + $0x8] sm:$0xff]
        %v1890 = vld [vmem:[%s1887 + $0x10] sm:$0xff]
        %v1891 = vld [vmem:[%s1887 + $0x18] sm:$0xff]
        %v1892 = vld [vmem:[#allocation2 + $0x60] sm:$0xff]
        %v1893 = vld [vmem:[#allocation2 + $0x68] sm:$0xff]
        %v1894 = vld [vmem:[#allocation2 + $0x70] sm:$0xff]
        %v1895 = vld [vmem:[#allocation2 + $0x78] sm:$0xff]
        %v1897 = vsel %vm994, %v1888, 0
        %v1900 = vsel %vm994, %v1889, 0
        %v1903 = vsel %vm994, %v1890, 0
        %v1906 = vsel %vm994, %v1891, 0
        %1908 = vmatprep.subr.mxu0 %v1893
        %1909 = vmatpush1.msra.mxu0 %v1892
        %1910 = vmatprep.subr.mxu0 %v1895
        %1911 = vmatpush1.msra.mxu0 %v1894
        %1912 = vmatprep.subr.mxu0 0.0
        %1913 = vmatpush1.msra.mxu0 0.0
        %1914 = vmatprep.subr.mxu0 0.0
        %1915 = vmatpush1.msra.mxu0 0.0
        %1916 = vmatprep.subr.mxu0 0.0
        %1917 = vmatpush1.msra.mxu0 0.0
        %1918 = vmatprep.subr.mxu0 0.0
        %1919 = vmatpush1.msra.mxu0 0.0
        %1920 = vmatprep.subr.mxu0 0.0
        %1921 = vmatpush1.msra.mxu0 0.0
        %1922 = vmatprep.subr.mxu0 0.0
        %1923 = vmatpush1.msra.mxu0 0.0
        %1924 = vmatprep.subr.mxu0 0.0
        %1925 = vmatpush1.msra.mxu0 0.0
        %1926 = vmatprep.subr.mxu0 0.0
        %1927 = vmatpush1.msra.mxu0 0.0
        %1928 = vmatprep.subr.mxu0 0.0
        %1929 = vmatpush1.msra.mxu0 0.0
        %1930 = vmatprep.subr.mxu0 0.0
        %1931 = vmatpush1.msra.mxu0 0.0
        %1932 = vmatprep.subr.mxu0 0.0
        %1933 = vmatpush1.msra.mxu0 0.0
        %1934 = vmatprep.subr.mxu0 0.0
        %1935 = vmatpush1.msra.mxu0 0.0
        %1936 = vmatprep.subr.mxu0 0.0
        %1937 = vmatpush1.msra.mxu0 0.0
        %1938 = vmatprep.subr.mxu0 0.0
        %1939 = vmatpush1.msra.mxu0 0.0
        %1940 = vmatprep.subr.mxu0 0.0
        %1941 = vmatpush1.msra.mxu0 0.0
        %1942 = vmatprep.subr.mxu0 0.0
        %1943 = vmatpush1.msra.mxu0 0.0
        %1944 = vmatprep.subr.mxu0 0.0
        %1945 = vmatpush1.msra.mxu0 0.0
        %1946 = vmatprep.subr.mxu0 0.0
        %1947 = vmatpush1.msra.mxu0 0.0
        %1948 = vmatprep.subr.mxu0 0.0
        %1949 = vmatpush1.msra.mxu0 0.0
        %1950 = vmatprep.subr.mxu0 0.0
        %1951 = vmatpush1.msra.mxu0 0.0
        %1952 = vmatprep.subr.mxu0 0.0
        %1953 = vmatpush1.msra.mxu0 0.0
        %1954 = vmatprep.subr.mxu0 0.0
        %1955 = vmatpush1.msra.mxu0 0.0
        %1956 = vmatprep.subr.mxu0 0.0
        %1957 = vmatpush1.msra.mxu0 0.0
        %1958 = vmatprep.subr.mxu0 0.0
        %1959 = vmatpush1.msra.mxu0 0.0
        %1960 = vmatprep.subr.mxu0 0.0
        %1961 = vmatpush1.msra.mxu0 0.0
        %1962 = vmatprep.subr.mxu0 0.0
        %1963 = vmatpush1.msra.mxu0 0.0
        %1964 = vmatprep.subr.mxu0 0.0
        %1965 = vmatpush1.msra.mxu0 0.0
        %1966 = vmatprep.subr.mxu0 0.0
        %1967 = vmatpush1.msra.mxu0 0.0
        %1968 = vmatprep.subr.mxu0 0.0
        %1969 = vmatpush1.msra.mxu0 0.0
        %1970 = vmatprep.subr.mxu0 0.0
        %1971 = vmatpush1.msra.mxu0 0.0
        %1972 = vmatprep.mubr.f32.mxu0 0.0
        %1973 = vmatmul.mubr.f32.gmra.mrb[0].mxu0 %v1897
        %v1974 = vpop.f32.mrb[0].mxu0
        %v1975 = vadd.f32 0.0, %v1974
        %v1976 = vpop.f32.mrb[0].mxu0
        %v1977 = vadd.f32 0.0, %v1976
        %1978 = vmatprep.mubr.f32.mxu0 0.0
        %1979 = vmatmul.mubr.f32.gmra.mrb[0].mxu0 %v1900
        %v1980 = vpop.f32.mrb[0].mxu0
        %v1981 = vadd.f32 0.0, %v1980
        %v1982 = vpop.f32.mrb[0].mxu0
        %v1983 = vadd.f32 0.0, %v1982
        %1984 = vmatprep.mubr.f32.mxu0 0.0
        %1985 = vmatmul.mubr.f32.gmra.mrb[0].mxu0 %v1903
        %v1986 = vpop.f32.mrb[0].mxu0
        %v1987 = vadd.f32 0.0, %v1986
        %v1988 = vpop.f32.mrb[0].mxu0
        %v1989 = vadd.f32 0.0, %v1988
        %1990 = vmatprep.mubr.f32.mxu0 0.0
        %1991 = vmatmul.mubr.f32.gmra.mrb[0].mxu0 %v1906
        %v1992 = vpop.f32.mrb[0].mxu0
        %v1993 = vadd.f32 0.0, %v1992
        %v1994 = vpop.f32.mrb[0].mxu0
        %v1995 = vadd.f32 0.0, %v1994
        %1996 = vdwg.mxu0
        %v1997 = vadd.f32 %v1879, %v1975
        %v1998 = vadd.f32 %v1880, %v1977
        %v1999 = vadd.f32 %v1881, %v1981
        %v2000 = vadd.f32 %v1882, %v1983
        %v2001 = vadd.f32 %v1883, %v1987
        %v2002 = vadd.f32 %v1884, %v1989
        %v2003 = vadd.f32 %v1885, %v1993
        %v2004 = vadd.f32 %v1886, %v1995
        %v2005 = vadd.f32 %v1997, %v527
        %v2006 = vadd.f32 %v1998, %v528
        %v2007 = vadd.f32 %v1999, %v529
        %v2008 = vadd.f32 %v2000, %v530
        %v2009 = vadd.f32 %v2001, %v531
        %v2010 = vadd.f32 %v2002, %v532
        %v2011 = vadd.f32 %v2003, %v533
        %v2012 = vadd.f32 %v2004, %v534
        %vm2013 = vcmp.ge.f32.partialorder %v2005, 0.0
        %vm2014 = vcmp.ge.f32.partialorder %v2006, 0.0
        %vm2015 = vcmp.ge.f32.partialorder %v2007, 0.0
        %vm2016 = vcmp.ge.f32.partialorder %v2008, 0.0
        %vm2017 = vcmp.ge.f32.partialorder %v2009, 0.0
        %vm2018 = vcmp.ge.f32.partialorder %v2010, 0.0
        %vm2019 = vcmp.ge.f32.partialorder %v2011, 0.0
        %vm2020 = vcmp.ge.f32.partialorder %v2012, 0.0
        %v2021 = vmul.f32 %v2005, 0.01
        %v2022 = vmul.f32 %v2006, 0.01
        %v2023 = vmul.f32 %v2007, 0.01
        %v2024 = vmul.f32 %v2008, 0.01
        %v2025 = vmul.f32 %v2009, 0.01
        %v2026 = vmul.f32 %v2010, 0.01
        %v2027 = vmul.f32 %v2011, 0.01
        %v2028 = vmul.f32 %v2012, 0.01
        %v2029 = vsel %vm2013, %v2005, %v2021
        %v2030 = vsel %vm2014, %v2006, %v2022
        %v2031 = vsel %vm2015, %v2007, %v2023
        %v2032 = vsel %vm2016, %v2008, %v2024
        %v2033 = vsel %vm2017, %v2009, %v2025
        %v2034 = vsel %vm2018, %v2010, %v2026
        %v2035 = vsel %vm2019, %v2011, %v2027
        %v2036 = vsel %vm2020, %v2012, %v2028
        %v2037 = vadd.f32 %v2029, %v527
        %v2038 = vadd.f32 %v2030, %v528
        %v2039 = vadd.f32 %v2031, %v529
        %v2040 = vadd.f32 %v2032, %v530
        %v2041 = vadd.f32 %v2033, %v531
        %v2042 = vadd.f32 %v2034, %v532
        %v2043 = vadd.f32 %v2035, %v533
        %v2044 = vadd.f32 %v2036, %v534
        %v2045 = vadd.f32 %v2037, %v2038
        %2046 = vadd.xlane.f32.xlu0 %v2045
        %v2047 = vpop.xlane.xlu0 %2046
        %v2048 = vadd.f32 %v2039, %v2040
        %2049 = vadd.xlane.f32.xlu0 %v2048
        %v2050 = vpop.xlane.xlu0 %2049
        %v2051 = vadd.f32 %v2041, %v2042
        %2052 = vadd.xlane.f32.xlu0 %v2051
        %v2053 = vpop.xlane.xlu0 %2052
        %v2054 = vadd.f32 %v2043, %v2044
        %2055 = vadd.xlane.f32.xlu0 %v2054
        %v2056 = vpop.xlane.xlu0 %2055
        %v2057 = vmul.f32 %v2047, 0.00390625
        %v2058 = vmul.f32 %v2050, 0.00390625
        %v2059 = vmul.f32 %v2053, 0.00390625
        %v2060 = vmul.f32 %v2056, 0.00390625
        %v2061 = vld [vmem:[%s7] sm:$0xf]
        %v2062 = vld [vmem:[%s8] sm:$0xf]
        %v2064 = vsel %vm543, %v2061, 0
        %2066 = vmatprep.subr.mxu0 0.0
        %2067 = vmatpush1.msra.mxu0 %v2057
        %2068 = vmatprep.subr.mxu0 0.0
        %2069 = vmatpush1.msra.mxu0 %v2058
        %2070 = vmatprep.subr.mxu0 0.0
        %2071 = vmatpush1.msra.mxu0 %v2059
        %2072 = vmatprep.subr.mxu0 0.0
        %2073 = vmatpush1.msra.mxu0 %v2060
        %2074 = vmatprep.subr.mxu0 0.0
        %2075 = vmatpush1.msra.mxu0 0.0
        %2076 = vmatprep.subr.mxu0 0.0
        %2077 = vmatpush1.msra.mxu0 0.0
        %2078 = vmatprep.subr.mxu0 0.0
        %2079 = vmatpush1.msra.mxu0 0.0
        %2080 = vmatprep.subr.mxu0 0.0
        %2081 = vmatpush1.msra.mxu0 0.0
        %2082 = vmatprep.subr.mxu0 0.0
        %2083 = vmatpush1.msra.mxu0 0.0
        %2084 = vmatprep.subr.mxu0 0.0
        %2085 = vmatpush1.msra.mxu0 0.0
        %2086 = vmatprep.subr.mxu0 0.0
        %2087 = vmatpush1.msra.mxu0 0.0
        %2088 = vmatprep.subr.mxu0 0.0
        %2089 = vmatpush1.msra.mxu0 0.0
        %2090 = vmatprep.subr.mxu0 0.0
        %2091 = vmatpush1.msra.mxu0 0.0
        %2092 = vmatprep.subr.mxu0 0.0
        %2093 = vmatpush1.msra.mxu0 0.0
        %2094 = vmatprep.subr.mxu0 0.0
        %2095 = vmatpush1.msra.mxu0 0.0
        %2096 = vmatprep.subr.mxu0 0.0
        %2097 = vmatpush1.msra.mxu0 0.0
        %2098 = vmatprep.subr.mxu0 0.0
        %2099 = vmatpush1.msra.mxu0 0.0
        %2100 = vmatprep.subr.mxu0 0.0
        %2101 = vmatpush1.msra.mxu0 0.0
        %2102 = vmatprep.subr.mxu0 0.0
        %2103 = vmatpush1.msra.mxu0 0.0
        %2104 = vmatprep.subr.mxu0 0.0
        %2105 = vmatpush1.msra.mxu0 0.0
        %2106 = vmatprep.subr.mxu0 0.0
        %2107 = vmatpush1.msra.mxu0 0.0
        %2108 = vmatprep.subr.mxu0 0.0
        %2109 = vmatpush1.msra.mxu0 0.0
        %2110 = vmatprep.subr.mxu0 0.0
        %2111 = vmatpush1.msra.mxu0 0.0
        %2112 = vmatprep.subr.mxu0 0.0
        %2113 = vmatpush1.msra.mxu0 0.0
        %2114 = vmatprep.subr.mxu0 0.0
        %2115 = vmatpush1.msra.mxu0 0.0
        %2116 = vmatprep.subr.mxu0 0.0
        %2117 = vmatpush1.msra.mxu0 0.0
        %2118 = vmatprep.subr.mxu0 0.0
        %2119 = vmatpush1.msra.mxu0 0.0
        %2120 = vmatprep.subr.mxu0 0.0
        %2121 = vmatpush1.msra.mxu0 0.0
        %2122 = vmatprep.subr.mxu0 0.0
        %2123 = vmatpush1.msra.mxu0 0.0
        %2124 = vmatprep.subr.mxu0 0.0
        %2125 = vmatpush1.msra.mxu0 0.0
        %2126 = vmatprep.subr.mxu0 0.0
        %2127 = vmatpush1.msra.mxu0 0.0
        %2128 = vmatprep.subr.mxu0 0.0
        %2129 = vmatpush1.msra.mxu0 0.0
        %2130 = vmatprep.mubr.f32.mxu0 0.0
        %2131 = vmatmul.mubr.f32.gmra.mrb[0].mxu0 %v2064
        %v2132 = vpop.f32.mrb[0].mxu0
        %v2133 = vadd.f32 %v2062, %v2132
        %v2134 = vpop.f32.mrb[0].mxu0
        %2135 = vdwg.mxu0
        %v2136 = vmax.f32 %v2133, 0.0
        %v2137 = vld [vmem:[%s9] sm:$0xff]
        %v2138 = vld [vmem:[%s9 + $0x8] sm:$0xff]
        %v2139 = vld [vmem:[%s9 + $0x10] sm:$0xff]
        %v2140 = vld [vmem:[%s9 + $0x18] sm:$0xff]
        %v2141 = vld [vmem:[%s10] sm:$0xff]
        %v2142 = vld [vmem:[%s10 + $0x8] sm:$0xff]
        %v2143 = vld [vmem:[%s10 + $0x10] sm:$0xff]
        %v2144 = vld [vmem:[%s10 + $0x18] sm:$0xff]
        %vm2145 = vcmask 31744
        %v2147 = vsel %vm2145, %v2137, 0
        %v2150 = vsel %vm2145, %v2138, 0
        %v2153 = vsel %vm2145, %v2139, 0
        %v2156 = vsel %vm2145, %v2140, 0
        %vm2158 = vcmask 1043456
        %v2160 = vsel %vm2158, %v2136, 0
        %2162 = vmatprep.subr.mxu0 0.0
        %2163 = vmatpush1.msra.mxu0 %v2160
        %2164 = vmatprep.subr.mxu0 0.0
        %2165 = vmatpush1.msra.mxu0 0.0
        %2166 = vmatprep.subr.mxu0 0.0
        %2167 = vmatpush1.msra.mxu0 0.0
        %2168 = vmatprep.subr.mxu0 0.0
        %2169 = vmatpush1.msra.mxu0 0.0
        %2170 = vmatprep.subr.mxu0 0.0
        %2171 = vmatpush1.msra.mxu0 0.0
        %2172 = vmatprep.subr.mxu0 0.0
        %2173 = vmatpush1.msra.mxu0 0.0
        %2174 = vmatprep.subr.mxu0 0.0
        %2175 = vmatpush1.msra.mxu0 0.0
        %2176 = vmatprep.subr.mxu0 0.0
        %2177 = vmatpush1.msra.mxu0 0.0
        %2178 = vmatprep.subr.mxu0 0.0
        %2179 = vmatpush1.msra.mxu0 0.0
        %2180 = vmatprep.subr.mxu0 0.0
        %2181 = vmatpush1.msra.mxu0 0.0
        %2182 = vmatprep.subr.mxu0 0.0
        %2183 = vmatpush1.msra.mxu0 0.0
        %2184 = vmatprep.subr.mxu0 0.0
        %2185 = vmatpush1.msra.mxu0 0.0
        %2186 = vmatprep.subr.mxu0 0.0
        %2187 = vmatpush1.msra.mxu0 0.0
        %2188 = vmatprep.subr.mxu0 0.0
        %2189 = vmatpush1.msra.mxu0 0.0
        %2190 = vmatprep.subr.mxu0 0.0
        %2191 = vmatpush1.msra.mxu0 0.0
        %2192 = vmatprep.subr.mxu0 0.0
        %2193 = vmatpush1.msra.mxu0 0.0
        %2194 = vmatprep.subr.mxu0 0.0
        %2195 = vmatpush1.msra.mxu0 0.0
        %2196 = vmatprep.subr.mxu0 0.0
        %2197 = vmatpush1.msra.mxu0 0.0
        %2198 = vmatprep.subr.mxu0 0.0
        %2199 = vmatpush1.msra.mxu0 0.0
        %2200 = vmatprep.subr.mxu0 0.0
        %2201 = vmatpush1.msra.mxu0 0.0
        %2202 = vmatprep.subr.mxu0 0.0
        %2203 = vmatpush1.msra.mxu0 0.0
        %2204 = vmatprep.subr.mxu0 0.0
        %2205 = vmatpush1.msra.mxu0 0.0
        %2206 = vmatprep.subr.mxu0 0.0
        %2207 = vmatpush1.msra.mxu0 0.0
        %2208 = vmatprep.subr.mxu0 0.0
        %2209 = vmatpush1.msra.mxu0 0.0
        %2210 = vmatprep.subr.mxu0 0.0
        %2211 = vmatpush1.msra.mxu0 0.0
        %2212 = vmatprep.subr.mxu0 0.0
        %2213 = vmatpush1.msra.mxu0 0.0
        %2214 = vmatprep.subr.mxu0 0.0
        %2215 = vmatpush1.msra.mxu0 0.0
        %2216 = vmatprep.subr.mxu0 0.0
        %2217 = vmatpush1.msra.mxu0 0.0
        %2218 = vmatprep.subr.mxu0 0.0
        %2219 = vmatpush1.msra.mxu0 0.0
        %2220 = vmatprep.subr.mxu0 0.0
        %2221 = vmatpush1.msra.mxu0 0.0
        %2222 = vmatprep.subr.mxu0 0.0
        %2223 = vmatpush1.msra.mxu0 0.0
        %2224 = vmatprep.subr.mxu0 0.0
        %2225 = vmatpush1.msra.mxu0 0.0
        %2226 = vmatprep.mubr.f32.mxu0 0.0
        %2227 = vmatmul.mubr.f32.gmra.mrb[0].mxu0 %v2147
        %v2228 = vpop.f32.mrb[0].mxu0
        %v2229 = vadd.f32 %v2141, %v2228
        %v2230 = vpop.f32.mrb[0].mxu0
        %2231 = vmatprep.mubr.f32.mxu0 0.0
        %2232 = vmatmul.mubr.f32.gmra.mrb[0].mxu0 %v2150
        %v2233 = vpop.f32.mrb[0].mxu0
        %v2234 = vadd.f32 %v2142, %v2233
        %v2235 = vpop.f32.mrb[0].mxu0
        %2236 = vmatprep.mubr.f32.mxu0 0.0
        %2237 = vmatmul.mubr.f32.gmra.mrb[0].mxu0 %v2153
        %v2238 = vpop.f32.mrb[0].mxu0
        %v2239 = vadd.f32 %v2143, %v2238
        %v2240 = vpop.f32.mrb[0].mxu0
        %2241 = vmatprep.mubr.f32.mxu0 0.0
        %2242 = vmatmul.mubr.f32.gmra.mrb[0].mxu0 %v2156
        %v2243 = vpop.f32.mrb[0].mxu0
        %v2244 = vadd.f32 %v2144, %v2243
        %v2245 = vpop.f32.mrb[0].mxu0
        %2246 = vdwg.mxu0
        %v2247 = vxor.u32 %v2229, 2147483648
        %v2248 = vxor.u32 %v2234, 2147483648
        %v2249 = vxor.u32 %v2239, 2147483648
        %v2250 = vxor.u32 %v2244, 2147483648
        %v2251 = vmul.f32 %v2247, 1.442695
        %v2252 = vpow.pop %v2251
        %v2253 = vmul.f32 %v2248, 1.442695
        %v2254 = vpow.pop %v2253
        %v2255 = vmul.f32 %v2249, 1.442695
        %v2256 = vpow.pop %v2255
        %v2257 = vmul.f32 %v2250, 1.442695
        %v2258 = vpow.pop %v2257
        %v2259 = vadd.f32 %v2252, 1.0
        %v2260 = vadd.f32 %v2254, 1.0
        %v2261 = vadd.f32 %v2256, 1.0
        %v2262 = vadd.f32 %v2258, 1.0
        %v2263 = vrcp.pop %v2259
        %v2264 = vmul.f32 1.0, %v2263
        %v2265 = vrcp.pop %v2260
        %v2266 = vmul.f32 1.0, %v2265
        %v2267 = vrcp.pop %v2261
        %v2268 = vmul.f32 1.0, %v2267
        %v2269 = vrcp.pop %v2262
        %v2270 = vmul.f32 1.0, %v2269
        %2272 = vset.pattern.permute.xlu0 0
        %2273 = vperm.xlu0 %2272, %v2264
        %v2274 = vpop.permute.xlu0 %2273
        %2277 = vset.pattern.permute.xlu0 0
        %2278 = vperm.xlu0 %2277, %v2266
        %v2279 = vpop.permute.xlu0 %2278
        %2282 = vset.pattern.permute.xlu0 0
        %2283 = vperm.xlu0 %2282, %v2268
        %v2284 = vpop.permute.xlu0 %2283
        %2287 = vset.pattern.permute.xlu0 0
        %2288 = vperm.xlu0 %2287, %v2270
        %v2289 = vpop.permute.xlu0 %2288
        %v2291 = vmul.f32 %v2037, %v2274
        %v2292 = vmul.f32 %v2038, %v2274
        %v2293 = vmul.f32 %v2039, %v2279
        %v2294 = vmul.f32 %v2040, %v2279
        %v2295 = vmul.f32 %v2041, %v2284
        %v2296 = vmul.f32 %v2042, %v2284
        %v2297 = vmul.f32 %v2043, %v2289
        %v2298 = vmul.f32 %v2044, %v2289
        %v2299 = vadd.f32 %v2291, %v527
        %v2300 = vadd.f32 %v2292, %v528
        %v2301 = vadd.f32 %v2293, %v529
        %v2302 = vadd.f32 %v2294, %v530
        %v2303 = vadd.f32 %v2295, %v531
        %v2304 = vadd.f32 %v2296, %v532
        %v2305 = vadd.f32 %v2297, %v533
        %v2306 = vadd.f32 %v2298, %v534
        %v2307 = vld [vmem:[%s11] sm:$0xf]
        %v2308 = vld [vmem:[%s12] sm:$0xf]
        %2310 = vset.pattern.permute.xlu0 0
        %2311 = vperm.xlu0 %2310, %v2308
        %v2312 = vpop.permute.xlu0 %2311
        %v2315 = vsel %vm543, %v2307, 0
        %2317 = vmatprep.subr.mxu0 %v2300
        %2318 = vmatpush1.msra.mxu0 %v2299
        %2319 = vmatprep.subr.mxu0 %v2302
        %2320 = vmatpush1.msra.mxu0 %v2301
        %2321 = vmatprep.subr.mxu0 %v2304
        %2322 = vmatpush1.msra.mxu0 %v2303
        %2323 = vmatprep.subr.mxu0 %v2306
        %2324 = vmatpush1.msra.mxu0 %v2305
        %2325 = vmatprep.subr.mxu0 0.0
        %2326 = vmatpush1.msra.mxu0 0.0
        %2327 = vmatprep.subr.mxu0 0.0
        %2328 = vmatpush1.msra.mxu0 0.0
        %2329 = vmatprep.subr.mxu0 0.0
        %2330 = vmatpush1.msra.mxu0 0.0
        %2331 = vmatprep.subr.mxu0 0.0
        %2332 = vmatpush1.msra.mxu0 0.0
        %2333 = vmatprep.subr.mxu0 0.0
        %2334 = vmatpush1.msra.mxu0 0.0
        %2335 = vmatprep.subr.mxu0 0.0
        %2336 = vmatpush1.msra.mxu0 0.0
        %2337 = vmatprep.subr.mxu0 0.0
        %2338 = vmatpush1.msra.mxu0 0.0
        %2339 = vmatprep.subr.mxu0 0.0
        %2340 = vmatpush1.msra.mxu0 0.0
        %2341 = vmatprep.subr.mxu0 0.0
        %2342 = vmatpush1.msra.mxu0 0.0
        %2343 = vmatprep.subr.mxu0 0.0
        %2344 = vmatpush1.msra.mxu0 0.0
        %2345 = vmatprep.subr.mxu0 0.0
        %2346 = vmatpush1.msra.mxu0 0.0
        %2347 = vmatprep.subr.mxu0 0.0
        %2348 = vmatpush1.msra.mxu0 0.0
        %2349 = vmatprep.subr.mxu0 0.0
        %2350 = vmatpush1.msra.mxu0 0.0
        %2351 = vmatprep.subr.mxu0 0.0
        %2352 = vmatpush1.msra.mxu0 0.0
        %2353 = vmatprep.subr.mxu0 0.0
        %2354 = vmatpush1.msra.mxu0 0.0
        %2355 = vmatprep.subr.mxu0 0.0
        %2356 = vmatpush1.msra.mxu0 0.0
        %2357 = vmatprep.subr.mxu0 0.0
        %2358 = vmatpush1.msra.mxu0 0.0
        %2359 = vmatprep.subr.mxu0 0.0
        %2360 = vmatpush1.msra.mxu0 0.0
        %2361 = vmatprep.subr.mxu0 0.0
        %2362 = vmatpush1.msra.mxu0 0.0
        %2363 = vmatprep.subr.mxu0 0.0
        %2364 = vmatpush1.msra.mxu0 0.0
        %2365 = vmatprep.subr.mxu0 0.0
        %2366 = vmatpush1.msra.mxu0 0.0
        %2367 = vmatprep.subr.mxu0 0.0
        %2368 = vmatpush1.msra.mxu0 0.0
        %2369 = vmatprep.subr.mxu0 0.0
        %2370 = vmatpush1.msra.mxu0 0.0
        %2371 = vmatprep.subr.mxu0 0.0
        %2372 = vmatpush1.msra.mxu0 0.0
        %2373 = vmatprep.subr.mxu0 0.0
        %2374 = vmatpush1.msra.mxu0 0.0
        %2375 = vmatprep.subr.mxu0 0.0
        %2376 = vmatpush1.msra.mxu0 0.0
        %2377 = vmatprep.subr.mxu0 0.0
        %2378 = vmatpush1.msra.mxu0 0.0
        %2379 = vmatprep.subr.mxu0 0.0
        %2380 = vmatpush1.msra.mxu0 0.0
        %2381 = vmatprep.mubr.f32.mxu0 0.0
        %2382 = vmatmul.mubr.f32.gmra.mrb[0].mxu0 %v2315
        %v2383 = vpop.f32.mrb[0].mxu0
        %v2384 = vadd.f32 %v2312, %v2383
        %v2385 = vpop.f32.mrb[0].mxu0
        %v2386 = vadd.f32 %v2312, %v2385
        %2387 = vdwg.mxu0
        %v2388 = vmax.f32 %v2384, 0.0
        %v2389 = vmax.f32 %v2386, 0.0
        %v2390 = vld [vmem:[%s13] sm:$0x1]
        %v2391 = vld [vmem:[#allocation3] sm:$0x1]
        %2393 = vset.pattern.permute.xlu0 0
        %2394 = vperm.xlu0 %2393, %v2391
        %v2395 = vpop.permute.xlu0 %2394
        %v2397 = vlaneseq
        %v2398 = vshrl.u32 %v2397, 7
        %v2399 = vsub.s32 0, %v2398
        %v2400 = vrot.slane %v2395, %v2399
        %v2402 = vsel %vm2145, %v2390, 0
        %v2405 = vsel %vm2158, %v2388, 0
        %v2408 = vsel %vm2158, %v2389, 0
        %2410 = vmatprep.subr.mxu0 %v2408
        %2411 = vmatpush1.msra.mxu0 %v2405
        %2412 = vmatprep.subr.mxu0 0.0
        %2413 = vmatpush1.msra.mxu0 0.0
        %2414 = vmatprep.subr.mxu0 0.0
        %2415 = vmatpush1.msra.mxu0 0.0
        %2416 = vmatprep.subr.mxu0 0.0
        %2417 = vmatpush1.msra.mxu0 0.0
        %2418 = vmatprep.subr.mxu0 0.0
        %2419 = vmatpush1.msra.mxu0 0.0
        %2420 = vmatprep.subr.mxu0 0.0
        %2421 = vmatpush1.msra.mxu0 0.0
        %2422 = vmatprep.subr.mxu0 0.0
        %2423 = vmatpush1.msra.mxu0 0.0
        %2424 = vmatprep.subr.mxu0 0.0
        %2425 = vmatpush1.msra.mxu0 0.0
        %2426 = vmatprep.subr.mxu0 0.0
        %2427 = vmatpush1.msra.mxu0 0.0
        %2428 = vmatprep.subr.mxu0 0.0
        %2429 = vmatpush1.msra.mxu0 0.0
        %2430 = vmatprep.subr.mxu0 0.0
        %2431 = vmatpush1.msra.mxu0 0.0
        %2432 = vmatprep.subr.mxu0 0.0
        %2433 = vmatpush1.msra.mxu0 0.0
        %2434 = vmatprep.subr.mxu0 0.0
        %2435 = vmatpush1.msra.mxu0 0.0
        %2436 = vmatprep.subr.mxu0 0.0
        %2437 = vmatpush1.msra.mxu0 0.0
        %2438 = vmatprep.subr.mxu0 0.0
        %2439 = vmatpush1.msra.mxu0 0.0
        %2440 = vmatprep.subr.mxu0 0.0
        %2441 = vmatpush1.msra.mxu0 0.0
        %2442 = vmatprep.subr.mxu0 0.0
        %2443 = vmatpush1.msra.mxu0 0.0
        %2444 = vmatprep.subr.mxu0 0.0
        %2445 = vmatpush1.msra.mxu0 0.0
        %2446 = vmatprep.subr.mxu0 0.0
        %2447 = vmatpush1.msra.mxu0 0.0
        %2448 = vmatprep.subr.mxu0 0.0
        %2449 = vmatpush1.msra.mxu0 0.0
        %2450 = vmatprep.subr.mxu0 0.0
        %2451 = vmatpush1.msra.mxu0 0.0
        %2452 = vmatprep.subr.mxu0 0.0
        %2453 = vmatpush1.msra.mxu0 0.0
        %2454 = vmatprep.subr.mxu0 0.0
        %2455 = vmatpush1.msra.mxu0 0.0
        %2456 = vmatprep.subr.mxu0 0.0
        %2457 = vmatpush1.msra.mxu0 0.0
        %2458 = vmatprep.subr.mxu0 0.0
        %2459 = vmatpush1.msra.mxu0 0.0
        %2460 = vmatprep.subr.mxu0 0.0
        %2461 = vmatpush1.msra.mxu0 0.0
        %2462 = vmatprep.subr.mxu0 0.0
        %2463 = vmatpush1.msra.mxu0 0.0
        %2464 = vmatprep.subr.mxu0 0.0
        %2465 = vmatpush1.msra.mxu0 0.0
        %2466 = vmatprep.subr.mxu0 0.0
        %2467 = vmatpush1.msra.mxu0 0.0
        %2468 = vmatprep.subr.mxu0 0.0
        %2469 = vmatpush1.msra.mxu0 0.0
        %2470 = vmatprep.subr.mxu0 0.0
        %2471 = vmatpush1.msra.mxu0 0.0
        %2472 = vmatprep.subr.mxu0 0.0
        %2473 = vmatpush1.msra.mxu0 0.0
        %2474 = vmatprep.mubr.f32.mxu0 0.0
        %2475 = vmatmul.mubr.f32.gmra.mrb[0].mxu0 %v2402
        %v2476 = vpop.f32.mrb[0].mxu0
        %v2477 = vadd.f32 %v2400, %v2476
        %v2478 = vpop.f32.mrb[0].mxu0
        %v2479 = vadd.f32 %v2400, %v2478
        %2480 = vdwg.mxu0
        %v2481 = vxor.u32 %v2477, 2147483648
        %v2482 = vxor.u32 %v2479, 2147483648
        %v2483 = vmul.f32 %v2481, 1.442695
        %v2484 = vpow.pop %v2483
        %v2485 = vmul.f32 %v2482, 1.442695
        %v2486 = vpow.pop %v2485
        %v2487 = vadd.f32 %v2484, 1.0
        %v2488 = vadd.f32 %v2486, 1.0
        %v2489 = vrcp.pop %v2487
        %v2490 = vmul.f32 1.0, %v2489
        %v2491 = vrcp.pop %v2488
        %v2492 = vmul.f32 1.0, %v2491
        %v2493 = vlaneseq
        %v2494 = vshrl.u32 %v2493, 7
        %v2495 = vsub.s32 0, %v2494
        %v2496 = vrot.slane %v2490, %v2495
        %v2497 = vlaneseq
        %v2498 = vshrl.u32 %v2497, 7
        %v2499 = vsub.s32 0, %v2498
        %v2500 = vrot.slane %v2492, %v2499
        %v2501 = vmul.f32 %v2299, %v2496
        %v2502 = vmul.f32 %v2300, %v2500
        %v2503 = vmul.f32 %v2301, %v2496
        %v2504 = vmul.f32 %v2302, %v2500
        %v2505 = vmul.f32 %v2303, %v2496
        %v2506 = vmul.f32 %v2304, %v2500
        %v2507 = vmul.f32 %v2305, %v2496
        %v2508 = vmul.f32 %v2306, %v2500
        %v2509 = vmul.f32 %v527, 2.0
        %v2510 = vmul.f32 %v528, 2.0
        %v2511 = vmul.f32 %v529, 2.0
        %v2512 = vmul.f32 %v530, 2.0
        %v2513 = vmul.f32 %v531, 2.0
        %v2514 = vmul.f32 %v532, 2.0
        %v2515 = vmul.f32 %v533, 2.0
        %v2516 = vmul.f32 %v534, 2.0
        %v2517 = vadd.f32 %v2501, %v2509
        %v2518 = vadd.f32 %v2502, %v2510
        %v2519 = vadd.f32 %v2503, %v2511
        %v2520 = vadd.f32 %v2504, %v2512
        %v2521 = vadd.f32 %v2505, %v2513
        %v2522 = vadd.f32 %v2506, %v2514
        %v2523 = vadd.f32 %v2507, %v2515
        %v2524 = vadd.f32 %v2508, %v2516
        %2525 = vst [vmem:[%s524] sm:$0xff] %v2517
        %2526 = vst [vmem:[%s524 + $0x8] sm:$0xff] %v2518
        %2527 = vst [vmem:[%s524 + $0x10] sm:$0xff] %v2519
        %2528 = vst [vmem:[%s524 + $0x18] sm:$0xff] %v2520
        %2529 = vst [vmem:[%s524 + $0x20] sm:$0xff] %v2521
        %2530 = vst [vmem:[%s524 + $0x28] sm:$0xff] %v2522
        %2531 = vst [vmem:[%s524 + $0x30] sm:$0xff] %v2523
        %2532 = vst [vmem:[%s524 + $0x38] sm:$0xff] %v2524
        %s2533 = sand.u32 %s356, 1
        %s2534 = sand.u32 %s356, 1
        %s2535 = smul.addr %s2534, 64
        %s2536 = scalar_lea.vmem [#allocation5], %s2535
        // Predicated region
        $region104: #{_lambda_.1} parent=98 // pred_check
          %p2537 = pneg %p366
        $region105: #{_lambda_.1} parent=98 // pred_check_branch
          %2539 = sbr.rel (%p2537) target = $region107
        $region106: #{_lambda_.1} parent=98 // pred_region
          %s2540 = smul.u32 2, %s28
          %s2541 = smul.addr %s2540, 8
          %s2542 = scalar_lea.vmem %s15, %s2541
          // Predicated region
          $region108: #{_lambda_.1} parent=106 // pred_check
            _
          $region109: #{_lambda_.1} parent=106 // pred_check_branch
            %2544 = sbr.rel (0) target = $region111
          $region110: #{_lambda_.1} parent=106 // pred_region
            // Predicated region
            $region112: #{_lambda_.1} parent=110 // pred_check
              _
            $region113: #{_lambda_.1} parent=110 // pred_check_branch
              %2546 = sbr.rel (0) target = $region115
            $region114: #{_lambda_.1} parent=110 // pred_region
              loop: start=0, step=1, limit=1
              $region116: #{_lambda_.1} parent=114 // loop_pre_header
                _
              $region117: #{_lambda_.1} parent=114 // loop_header
                %s2548 = sphi 0, %s2552
                %p2549 = scmp.ge.s32.totalorder %s2548, 1
                %s2553 = sphi %s2536, %s2536
                %s2554 = sphi %s2542, %s2542
              $region118: #{_lambda_.1} parent=114 // loop_header_branch
                %2551 = sbr.rel (%p2549) target = $region122
              $region119: #{_lambda_.1} parent=114 // loop_body
                %v2555 = vld [vmem:[%s2553] sm:$0xff]
                %2556 = vst [vmem:[%s2554] sm:$0xff] %v2555
                %v2557 = vld [vmem:[%s2553 + $0x8] sm:$0xff]
                %2558 = vst [vmem:[%s2554 + $0x8] sm:$0xff] %v2557
                %v2559 = vld [vmem:[%s2553 + $0x10] sm:$0xff]
                %2560 = vst [vmem:[%s2554 + $0x20] sm:$0xff] %v2559
                %v2561 = vld [vmem:[%s2553 + $0x18] sm:$0xff]
                %2562 = vst [vmem:[%s2554 + $0x28] sm:$0xff] %v2561
                %v2563 = vld [vmem:[%s2553 + $0x20] sm:$0xff]
                %2564 = vst [vmem:[%s2554 + $0x40] sm:$0xff] %v2563
                %v2565 = vld [vmem:[%s2553 + $0x28] sm:$0xff]
                %2566 = vst [vmem:[%s2554 + $0x48] sm:$0xff] %v2565
                %v2567 = vld [vmem:[%s2553 + $0x30] sm:$0xff]
                %2568 = vst [vmem:[%s2554 + $0x60] sm:$0xff] %v2567
                %v2569 = vld [vmem:[%s2553 + $0x38] sm:$0xff]
                %2570 = vst [vmem:[%s2554 + $0x68] sm:$0xff] %v2569
              $region120: #{_lambda_.1} parent=114 // loop_footer
                %s2552 = sadd.s32 1, %s2548
              $region121: #{_lambda_.1} parent=114 // loop_footer_branch
                %2547 = sbr.rel target = $region117
              $region122: #{_lambda_.1} parent=114 // loop_exit
                _
            $region115: #{_lambda_.1} parent=110 // pred_fallthru
              _
            // Predicated region
            $region123: #{_lambda_.1} parent=110 // pred_check
              _
            $region124: #{_lambda_.1} parent=110 // pred_check_branch
              %2572 = sbr.rel target = $region126
            $region125: #{_lambda_.1} parent=110 // pred_region
              _
            $region126: #{_lambda_.1} parent=110 // pred_fallthru
              _
          $region111: #{_lambda_.1} parent=106 // pred_fallthru
            _
          %2573 = vnop
        $region107: #{_lambda_.1} parent=98 // pred_fallthru
          _
      $region99: #{_lambda_.1} parent=5 // pred_fallthru
        _
      %p2574 = scmp.le.s32.totalorder 2, %s23
      // Predicated region
      $region127: #{_lambda_.1} parent=5 // pred_check
        %p2575 = pneg %p2574
      $region128: #{_lambda_.1} parent=5 // pred_check_branch
        %2577 = sbr.rel (%p2575) target = $region130
      $region129: #{_lambda_.1} parent=5 // pred_region
        %s2578 = ssub.s32 %s23, 2
        // Predicated region
        $region131: #{_lambda_.1} parent=129 // pred_check
          %p2579 = pneg %p372
        $region132: #{_lambda_.1} parent=129 // pred_check_branch
          %2581 = sbr.rel (%p2579) target = $region134
        $region133: #{_lambda_.1} parent=129 // pred_region
          %s2582 = sand.u32 %s357, 1
          %s2583 = sand.u32 %s357, 1
          %s2584 = smul.addr %s2583, 64
          %s2585 = scalar_lea.vmem [#allocation5], %s2584
        $region134: #{_lambda_.1} parent=129 // pred_fallthru
          _
      $region130: #{_lambda_.1} parent=5 // pred_fallthru
        _
    $region6: #{_lambda_.1} parent=1 // loop_footer
      %s27 = sadd.s32 1, %s23
    $region7: #{_lambda_.1} parent=1 // loop_footer_branch
      %22 = sbr.rel target = $region3
    $region8: #{_lambda_.1} parent=1 // loop_exit
      _

</llo_original>
